<compile_context>
chip_gen: v7x
topology: tpu7x:2x2x1
jax: 0.10.0
libtpu: 0.0.40
codegen_flags: <defaults>
</compile_context>

<pallas_src>
import jax
import jax.numpy as jnp
from jax.experimental import pallas as pl
from jax.experimental.pallas import tpu as pltpu

# ---------------------------------------------------------------------------
# Model configuration (self-consistent: fs=32 -> T0=128 so that the flattened
# feature size 6 * T0/32 = 24 matches Linear(24, n_classes)).
# ---------------------------------------------------------------------------
INPUT_TIME = 4000
FS = 32
NCHA = 8
FPB = 8                                     # filters_per_branch
SCALES_TIME = (500, 250, 125)
N_CLASSES = 2
T0 = int(INPUT_TIME * FS / 1000)            # 128 time samples
SCALES = [int(s * FS / 1000) for s in SCALES_TIME]        # [16, 8, 4]
NB = len(SCALES)
BN_EPS = 1e-5

K1MAX = max(SCALES)                         # 16
L1 = (K1MAX - 1) // 2                       # 7   (PyTorch 'same' left pad)
C_B1 = 2 * FPB * NB                         # 48  (block1 output channels)
C_B2 = FPB * NB                             # 24  (block2 output channels)

PARAM_ORDER = ("w1", "sb1", "wd", "sbd", "w2", "sb2",
               "w31", "sb31", "w32", "sb32", "wfc", "bfc")


# ---------------------------------------------------------------------------
# In-kernel helpers (all static Python -> fully unrolled straight-line code)
# ---------------------------------------------------------------------------
def _elu(x):
    # exp(min(x,0)) avoids overflow for large positive activations.
    return jnp.where(x > 0, x, jnp.exp(jnp.minimum(x, 0.0)) - 1.0)


def _bn(y, sb_ref):
    # sb_ref: (2, C) with row 0 = folded scale, row 1 = folded shift.
    return y * sb_ref[0:1, :] + sb_ref[1:2, :]


def _im2col(pad_ref, base, k_taps, t_out):
    """Plain im2col (no pooling): lanes ordered (tap, channel)."""
    return jnp.concatenate(
        [pad_ref[base + k:base + k + t_out, :] for k in range(k_taps)], axis=1)


def _im2col_pooled(pad_ref, base, k_taps, pool, t_out):
    """im2col with the preceding AvgPool2d((pool,1)) folded in.

    pad_ref holds the UNPOOLED activation with a zero border; every pooled
    sample is the mean of `pool` consecutive rows read with sublane-strided
    loads, so no pooling matrix / extra MXU op is needed.
    """
    cols = []
    for k in range(k_taps):
        acc = pad_ref[pl.ds(base + pool * k, t_out, stride=pool), :]
        for m in range(1, pool):
            acc = acc + pad_ref[pl.ds(base + pool * k + m, t_out, stride=pool), :]
        cols.append(acc)
    return jnp.concatenate(cols, axis=1) * (1.0 / pool)


# ---------------------------------------------------------------------------
# The fused kernel: one batch element per grid step, everything in VMEM.
# ---------------------------------------------------------------------------
def _eeg_inception_kernel(x_ref,
                          w1_ref, sb1_ref, wd_ref, sbd_ref,
                          w2_ref, sb2_ref, w31_ref, sb31_ref,
                          w32_ref, sb32_ref, wfc_ref, bfc_ref,
                          out_ref,
                          s0, s1, s2, s3):
    bf16, f32 = jnp.bfloat16, jnp.float32

    # Zero the padded scratch buffers (their zero border implements 'same'
    # padding; the data regions are fully rewritten below).
    for buf in (s0, s1, s2, s3):
        buf[...] = jnp.zeros_like(buf)

    # ---------------- block1: all 3 branches fused -------------------------
    # data stored at row 8 (aligned store), conceptual left pad = 7 -> base 1
    s0[8:8 + T0, :] = x_ref[...]                               # (128, 8)
    cols = _im2col(s0, base=1, k_taps=K1MAX, t_out=T0)         # (128, 128)
    h = jnp.dot(cols.astype(bf16), w1_ref[...], preferred_element_type=f32)
    h = _elu(_bn(h, sb1_ref))                                  # (128, 192)
    # grouped (1, ncha) depthwise conv == block-diagonal matmul
    h = jnp.dot(h.astype(bf16), wd_ref[...], preferred_element_type=f32)
    h = _elu(_bn(h, sbd_ref))                                  # (128, 48)
    s1[8:8 + T0, :] = h

    # ------------- block2 (3 branches fused, avgpool1 folded in) -----------
    cols = _im2col_pooled(s1, base=4, k_taps=4, pool=4, t_out=T0 // 4)   # (32, 192)
    h = jnp.dot(cols.astype(bf16), w2_ref[...], preferred_element_type=f32)
    h = _elu(_bn(h, sb2_ref))                                  # (32, 24)
    s2[8:8 + T0 // 4, :] = h

    # ------------- conv3_1 + bn + elu (avgpool2 folded in) -----------------
    cols = _im2col_pooled(s2, base=2, k_taps=8, pool=2, t_out=T0 // 8)   # (16, 192)
    h = jnp.dot(cols.astype(bf16), w31_ref[...], preferred_element_type=f32)
    h = _elu(_bn(h, sb31_ref))                                 # (16, 12)
    s3[8:8 + T0 // 8, :] = h

    # ------------- conv3_2 + bn + elu (avgpool3_1 folded in) ---------------
    cols = _im2col_pooled(s3, base=6, k_taps=4, pool=2, t_out=T0 // 16)  # (8, 48)
    h = jnp.dot(cols.astype(bf16), w32_ref[...], preferred_element_type=f32)
    h = _elu(_bn(h, sb32_ref))                                 # (8, 6)

    # ------------- fc (avgpool3_2 + channel-major flatten folded into wfc) -
    # logits[j] = sum_{t,c} h[t, c] * wfc[j, t, c] + b[j]   (pure VPU/XLU)
    parts = []
    for j in range(N_CLASSES):
        parts.append(jnp.sum(h * wfc_ref[j], axis=1, keepdims=True))  # (8, 1)
    p = jnp.concatenate(parts, axis=1)                                # (8, nc)
    out_ref[...] = jnp.sum(p, axis=0, keepdims=True) + bfc_ref[...]   # (1, nc)


# ---------------------------------------------------------------------------
# pallas_call wrapper
# ---------------------------------------------------------------------------
def _const_spec(a):
    zeros = (0,) * a.ndim
    return pl.BlockSpec(a.shape, lambda i: zeros)


def eeg_inception_forward(x, params):
    n = x.shape[0]
    xs = x[:, 0, :, :]                                      # (N, T0, ncha)
    weights = [params[k] for k in PARAM_ORDER]
    out = pl.pallas_call(
        _eeg_inception_kernel,
        out_shape=jax.ShapeDtypeStruct((n, 1, N_CLASSES), jnp.float32),
        grid=(n,),
        in_specs=[pl.BlockSpec((None, T0, NCHA), lambda i: (i, 0, 0))]
                 + [_const_spec(w) for w in weights],
        out_specs=pl.BlockSpec((None, 1, N_CLASSES), lambda i: (i, 0, 0)),
        scratch_shapes=[
            pltpu.VMEM((144, NCHA), jnp.float32),   # zero-padded raw input
            pltpu.VMEM((144, C_B1), jnp.float32),   # padded block1 out (pre-pool)
            pltpu.VMEM((48, C_B2), jnp.float32),    # padded block2 out (pre-pool)
            pltpu.VMEM((28, C_B2 // 2), jnp.float32),  # padded conv3_1 out
        ],
        compiler_params=pltpu.CompilerParams(
            dimension_semantics=("parallel",)),
    )(xs, *weights)
    return out[:, 0, :]


# ---------------------------------------------------------------------------
# Parameters: raw PyTorch-layout tensors + folding into kernel layout
# ---------------------------------------------------------------------------
def build_raw_params(key):
    keys = iter(jax.random.split(key, 96))

    def nrm(shape, scale=0.1):
        return scale * jax.random.normal(next(keys), shape, dtype=jnp.float32)

    def bn_stats(c):                      # gamma, beta, running_mean, running_var
        return (1.0 + nrm((c,)), nrm((c,)), nrm((c,)),
                0.5 + jax.random.uniform(next(keys), (c,), dtype=jnp.float32))

    raw = {"block1": [], "block2": []}
    for k in SCALES:
        raw["block1"].append(dict(
            wt=nrm((FPB, 1, k, 1)),                 # Conv2d(1, F, (k,1))
            bias=nrm((FPB,)),
            bn1=bn_stats(FPB),
            wd=nrm((2 * FPB, 1, 1, NCHA)),          # Conv2d(F, 2F, (1,ncha), groups=F)
            bn2=bn_stats(2 * FPB)))
    for k in [s // 4 for s in SCALES]:
        raw["block2"].append(dict(w=nrm((FPB, C_B1, k, 1)),   # Conv2d(48, F, (k,1))
                                  bn=bn_stats(FPB)))
    raw["w31"] = nrm((C_B2 // 2, C_B2, 8, 1))       # Conv2d(24, 12, (8,1))
    raw["bn31"] = bn_stats(C_B2 // 2)
    raw["w32"] = nrm((C_B2 // 4, C_B2 // 2, 4, 1))  # Conv2d(12, 6, (4,1))
    raw["bn32"] = bn_stats(C_B2 // 4)
    raw["wl"] = nrm((N_CLASSES, C_B2))              # Linear(24, n_classes)
    raw["bl"] = nrm((N_CLASSES,))
    return raw


def fold_params(raw):
    def bn_fold(stats, conv_bias=None):             # general eval-mode BN fold
        g, b, m, v = stats
        scale = g / jnp.sqrt(v + BN_EPS)
        shift = b - scale * m
        if conv_bias is not None:
            shift = shift + scale * conv_bias
        return scale, shift

    eye = jnp.eye(NCHA, dtype=jnp.float32)
    w1_p, s1_p, b1_p, sd_p, bd_p = [], [], [], [], []
    wd_all = jnp.zeros((NB * FPB * NCHA, NB * 2 * FPB), jnp.float32)
    blk = 0
    for br, k in zip(raw["block1"], SCALES):
        sc, sh = bn_fold(br["bn1"], br["bias"])
        off = L1 - (k - 1) // 2
        wt_pad = jnp.zeros((K1MAX, FPB), jnp.float32)
        wt_pad = wt_pad.at[off:off + k].set(br["wt"][:, 0, :, 0].T)
        w1_p.append(jnp.kron(wt_pad, eye))                   # (K1MAX*ncha, F*ncha)
        s1_p.append(jnp.repeat(sc, NCHA))
        b1_p.append(jnp.repeat(sh, NCHA))
        sc2, sh2 = bn_fold(br["bn2"])
        sd_p.append(sc2)
        bd_p.append(sh2)
        wd2 = br["wd"][:, 0, 0, :]                           # (2F, ncha)
        for f in range(FPB):                                 # block-diagonal
            wd_all = wd_all.at[blk * NCHA:(blk + 1) * NCHA,
                               2 * blk:2 * blk + 2].set(wd2[2 * f:2 * f + 2, :].T)
            blk += 1

    params = dict(
        w1=jnp.concatenate(w1_p, axis=1).astype(jnp.bfloat16),      # (128, 192)
        sb1=jnp.stack([jnp.concatenate(s1_p), jnp.concatenate(b1_p)]),
        wd=wd_all.astype(jnp.bfloat16),                             # (192, 48)
        sbd=jnp.stack([jnp.concatenate(sd_p), jnp.concatenate(bd_p)]),
    )

    k2max = max(SCALES) // 4                                        # 4
    l2 = (k2max - 1) // 2                                           # 1
    w2_p, s_p, b_p = [], [], []
    for br, k in zip(raw["block2"], [s // 4 for s in SCALES]):
        sc, sh = bn_fold(br["bn"])
        off = l2 - (k - 1) // 2
        wfull = jnp.zeros((k2max, C_B1, FPB), jnp.float32)
        wfull = wfull.at[off:off + k].set(jnp.transpose(br["w"][:, :, :, 0], (2, 1, 0)))
        w2_p.append(wfull.reshape(k2max * C_B1, FPB))
        s_p.append(sc)
        b_p.append(sh)
    params["w2"] = jnp.concatenate(w2_p, axis=1).astype(jnp.bfloat16)   # (192, 24)
    params["sb2"] = jnp.stack([jnp.concatenate(s_p), jnp.concatenate(b_p)])

    sc, sh = bn_fold(raw["bn31"])
    params["w31"] = jnp.transpose(raw["w31"][:, :, :, 0], (2, 1, 0)) \
        .reshape(8 * C_B2, C_B2 // 2).astype(jnp.bfloat16)              # (192, 12)
    params["sb31"] = jnp.stack([sc, sh])
    sc, sh = bn_fold(raw["bn32"])
    params["w32"] = jnp.transpose(raw["w32"][:, :, :, 0], (2, 1, 0)) \
        .reshape(4 * (C_B2 // 2), C_B2 // 4).astype(jnp.bfloat16)       # (48, 6)
    params["sb32"] = jnp.stack([sc, sh])

    # fc: fold PyTorch channel-major flatten and the final AvgPool2d((2,1)).
    t_final = T0 // 32                                                  # 4
    wfc = raw["wl"].reshape(N_CLASSES, C_B2 // 4, t_final)              # [j, c, t]
    wfc = jnp.transpose(wfc, (0, 2, 1))                                 # [j, t, c]
    params["wfc"] = jnp.repeat(wfc, 2, axis=1) * 0.5                    # (nc, 8, 6)
    params["bfc"] = raw["bl"].reshape(1, N_CLASSES)
    return params


# ---------------------------------------------------------------------------
# Pure-JAX reference (eval-mode semantics of the PyTorch module)
# ---------------------------------------------------------------------------
def reference_forward(x, raw):
    hp = jax.lax.Precision.HIGHEST

    def conv_same(h, w, bias=None):
        out = jax.lax.conv_general_dilated(
            h, w, window_strides=(1, 1), padding="SAME",
            dimension_numbers=("NCHW", "OIHW", "NCHW"), precision=hp)
        if bias is not None:
            out = out + bias[None, :, None, None]
        return out

    def bn(h, stats):
        g, b, m, v = stats
        sc = g / jnp.sqrt(v + BN_EPS)
        return (h - m[None, :, None, None]) * sc[None, :, None, None] \
            + b[None, :, None, None]

    def elu(h):
        return jnp.where(h > 0, h, jnp.exp(jnp.minimum(h, 0.0)) - 1.0)

    def avgpool(h, p):
        n, c, t, w = h.shape
        return h.reshape(n, c, t // p, p, w).mean(axis=3)

    outs = []
    for br in raw["block1"]:
        h = elu(bn(conv_same(x, br["wt"], br["bias"]), br["bn1"]))
        h = jax.lax.conv_general_dilated(
            h, br["wd"], (1, 1), "VALID",
            dimension_numbers=("NCHW", "OIHW", "NCHW"),
            feature_group_count=FPB, precision=hp)
        outs.append(elu(bn(h, br["bn2"])))
    h = avgpool(jnp.concatenate(outs, axis=1), 4)

    outs = [elu(bn(conv_same(h, br["w"]), br["bn"])) for br in raw["block2"]]
    h = avgpool(jnp.concatenate(outs, axis=1), 2)

    h = avgpool(elu(bn(conv_same(h, raw["w31"]), raw["bn31"])), 2)
    h = avgpool(elu(bn(conv_same(h, raw["w32"]), raw["bn32"])), 2)
    flat = h.reshape(h.shape[0], -1)                    # channel-major flatten
    return flat @ raw["wl"].T + raw["bl"][None, :]


# ---------------------------------------------------------------------------
if __name__ == "__main__":
    root = jax.random.PRNGKey(0)
    k_params, k_x = jax.random.split(root)
    raw = build_raw_params(k_params)
    params = fold_params(raw)
    x = jax.random.normal(k_x, (2, 1, T0, NCHA), dtype=jnp.float32)

    fwd = jax.jit(eeg_inception_forward)
    out = jax.block_until_ready(fwd(x, params))

    assert out.shape == (2, N_CLASSES), out.shape
    assert bool(jnp.all(jnp.isfinite(out)))

    # Numerical check against a pure-JAX (f32) reference of the PyTorch model.
    ref = reference_forward(x, raw)
    max_err = float(jnp.max(jnp.abs(out - ref)))
    assert max_err < 5e-2, f"max abs error vs reference: {max_err}"

    print("KERNEL_OK")
</pallas_src>

<mosaic_0001>
module attributes {stable_mosaic.version = 11 : i64} {
  func.func @_eeg_inception_kernel(%arg0: i32, %arg1: memref<1x128x8xf32, #tpu.memory_space<vmem>>, %arg2: memref<128x192xbf16, #tpu.memory_space<vmem>>, %arg3: memref<2x192xf32, #tpu.memory_space<vmem>>, %arg4: memref<192x48xbf16, #tpu.memory_space<vmem>>, %arg5: memref<2x48xf32, #tpu.memory_space<vmem>>, %arg6: memref<192x24xbf16, #tpu.memory_space<vmem>>, %arg7: memref<2x24xf32, #tpu.memory_space<vmem>>, %arg8: memref<192x12xbf16, #tpu.memory_space<vmem>>, %arg9: memref<2x12xf32, #tpu.memory_space<vmem>>, %arg10: memref<48x6xbf16, #tpu.memory_space<vmem>>, %arg11: memref<2x6xf32, #tpu.memory_space<vmem>>, %arg12: memref<2x8x6xf32, #tpu.memory_space<vmem>>, %arg13: memref<1x2xf32, #tpu.memory_space<vmem>>, %arg14: memref<1x1x2xf32, #tpu.memory_space<vmem>>, %arg15: memref<144x8xf32, #tpu.memory_space<vmem>>, %arg16: memref<144x48xf32, #tpu.memory_space<vmem>>, %arg17: memref<48x24xf32, #tpu.memory_space<vmem>>, %arg18: memref<28x12xf32, #tpu.memory_space<vmem>>) attributes {dimension_semantics = [#tpu.dimension_semantics<parallel>], iteration_bounds = array<i64: 2>, scalar_prefetch = 0 : i64, scratch_operands = 4 : i64, tpu.core_type = #tpu.core_type<tc>, window_params = [{transform_indices = @transform_0, window_bounds = array<i64: 1, 128, 8>}, {pipeline_mode = #tpu.pipeline_mode<synchronous>, transform_indices = @transform_1, window_bounds = array<i64: 128, 192>}, {pipeline_mode = #tpu.pipeline_mode<synchronous>, transform_indices = @transform_2, window_bounds = array<i64: 2, 192>}, {pipeline_mode = #tpu.pipeline_mode<synchronous>, transform_indices = @transform_3, window_bounds = array<i64: 192, 48>}, {pipeline_mode = #tpu.pipeline_mode<synchronous>, transform_indices = @transform_4, window_bounds = array<i64: 2, 48>}, {pipeline_mode = #tpu.pipeline_mode<synchronous>, transform_indices = @transform_5, window_bounds = array<i64: 192, 24>}, {pipeline_mode = #tpu.pipeline_mode<synchronous>, transform_indices = @transform_6, window_bounds = array<i64: 2, 24>}, {pipeline_mode = #tpu.pipeline_mode<synchronous>, transform_indices = @transform_7, window_bounds = array<i64: 192, 12>}, {pipeline_mode = #tpu.pipeline_mode<synchronous>, transform_indices = @transform_8, window_bounds = array<i64: 2, 12>}, {pipeline_mode = #tpu.pipeline_mode<synchronous>, transform_indices = @transform_9, window_bounds = array<i64: 48, 6>}, {pipeline_mode = #tpu.pipeline_mode<synchronous>, transform_indices = @transform_10, window_bounds = array<i64: 2, 6>}, {pipeline_mode = #tpu.pipeline_mode<synchronous>, transform_indices = @transform_11, window_bounds = array<i64: 2, 8, 6>}, {pipeline_mode = #tpu.pipeline_mode<synchronous>, transform_indices = @transform_12, window_bounds = array<i64: 1, 2>}, {transform_indices = @transform_13, window_bounds = array<i64: 1, 1, 2>}]} {
    %cst = arith.constant 0.000000e+00 : f32
    %0 = vector.broadcast %cst : f32 to vector<144x8xf32>
    %c0 = arith.constant 0 : index
    %c0_0 = arith.constant 0 : index
    %1 = vector.load %arg15[%c0, %c0_0] : memref<144x8xf32, #tpu.memory_space<vmem>>, vector<144x8xf32>
    tpu.vector_store %arg15[%c0, %c0_0], %0 {strides = array<i32>} : memref<144x8xf32, #tpu.memory_space<vmem>>, vector<144x8xf32>,
    %cst_1 = arith.constant 0.000000e+00 : f32
    %2 = vector.broadcast %cst_1 : f32 to vector<144x48xf32>
    %c0_2 = arith.constant 0 : index
    %c0_3 = arith.constant 0 : index
    %3 = vector.load %arg16[%c0_2, %c0_3] : memref<144x48xf32, #tpu.memory_space<vmem>>, vector<144x48xf32>
    tpu.vector_store %arg16[%c0_2, %c0_3], %2 {strides = array<i32>} : memref<144x48xf32, #tpu.memory_space<vmem>>, vector<144x48xf32>,
    %cst_4 = arith.constant 0.000000e+00 : f32
    %4 = vector.broadcast %cst_4 : f32 to vector<48x24xf32>
    %c0_5 = arith.constant 0 : index
    %c0_6 = arith.constant 0 : index
    %5 = vector.load %arg17[%c0_5, %c0_6] : memref<48x24xf32, #tpu.memory_space<vmem>>, vector<48x24xf32>
    tpu.vector_store %arg17[%c0_5, %c0_6], %4 {strides = array<i32>} : memref<48x24xf32, #tpu.memory_space<vmem>>, vector<48x24xf32>,
    %cst_7 = arith.constant 0.000000e+00 : f32
    %6 = vector.broadcast %cst_7 : f32 to vector<28x12xf32>
    %c0_8 = arith.constant 0 : index
    %c0_9 = arith.constant 0 : index
    %7 = vector.load %arg18[%c0_8, %c0_9] : memref<28x12xf32, #tpu.memory_space<vmem>>, vector<28x12xf32>
    tpu.vector_store %arg18[%c0_8, %c0_9], %6 {strides = array<i32>} : memref<28x12xf32, #tpu.memory_space<vmem>>, vector<28x12xf32>,
    %c0_10 = arith.constant 0 : index
    %c0_11 = arith.constant 0 : index
    %c0_12 = arith.constant 0 : index
    %8 = vector.load %arg1[%c0_10, %c0_11, %c0_12] : memref<1x128x8xf32, #tpu.memory_space<vmem>>, vector<1x128x8xf32>
    %9 = vector.shape_cast %8 : vector<1x128x8xf32> to vector<128x8xf32>
    %c8 = arith.constant 8 : index
    %c0_13 = arith.constant 0 : index
    %10 = vector.load %arg15[%c8, %c0_13] : memref<144x8xf32, #tpu.memory_space<vmem>>, vector<128x8xf32>
    tpu.vector_store %arg15[%c8, %c0_13], %9 {strides = array<i32>} : memref<144x8xf32, #tpu.memory_space<vmem>>, vector<128x8xf32>,
    %c1 = arith.constant 1 : index
    %c0_14 = arith.constant 0 : index
    %11 = vector.load %arg15[%c1, %c0_14] : memref<144x8xf32, #tpu.memory_space<vmem>>, vector<128x8xf32>
    %c2 = arith.constant 2 : index
    %c0_15 = arith.constant 0 : index
    %12 = vector.load %arg15[%c2, %c0_15] : memref<144x8xf32, #tpu.memory_space<vmem>>, vector<128x8xf32>
    %c3 = arith.constant 3 : index
    %c0_16 = arith.constant 0 : index
    %13 = vector.load %arg15[%c3, %c0_16] : memref<144x8xf32, #tpu.memory_space<vmem>>, vector<128x8xf32>
    %c4 = arith.constant 4 : index
    %c0_17 = arith.constant 0 : index
    %14 = vector.load %arg15[%c4, %c0_17] : memref<144x8xf32, #tpu.memory_space<vmem>>, vector<128x8xf32>
    %c5 = arith.constant 5 : index
    %c0_18 = arith.constant 0 : index
    %15 = vector.load %arg15[%c5, %c0_18] : memref<144x8xf32, #tpu.memory_space<vmem>>, vector<128x8xf32>
    %c6 = arith.constant 6 : index
    %c0_19 = arith.constant 0 : index
    %16 = vector.load %arg15[%c6, %c0_19] : memref<144x8xf32, #tpu.memory_space<vmem>>, vector<128x8xf32>
    %c7 = arith.constant 7 : index
    %c0_20 = arith.constant 0 : index
    %17 = vector.load %arg15[%c7, %c0_20] : memref<144x8xf32, #tpu.memory_space<vmem>>, vector<128x8xf32>
    %c8_21 = arith.constant 8 : index
    %c0_22 = arith.constant 0 : index
    %18 = vector.load %arg15[%c8_21, %c0_22] : memref<144x8xf32, #tpu.memory_space<vmem>>, vector<128x8xf32>
    %c9 = arith.constant 9 : index
    %c0_23 = arith.constant 0 : index
    %19 = vector.load %arg15[%c9, %c0_23] : memref<144x8xf32, #tpu.memory_space<vmem>>, vector<128x8xf32>
    %c10 = arith.constant 10 : index
    %c0_24 = arith.constant 0 : index
    %20 = vector.load %arg15[%c10, %c0_24] : memref<144x8xf32, #tpu.memory_space<vmem>>, vector<128x8xf32>
    %c11 = arith.constant 11 : index
    %c0_25 = arith.constant 0 : index
    %21 = vector.load %arg15[%c11, %c0_25] : memref<144x8xf32, #tpu.memory_space<vmem>>, vector<128x8xf32>
    %c12 = arith.constant 12 : index
    %c0_26 = arith.constant 0 : index
    %22 = vector.load %arg15[%c12, %c0_26] : memref<144x8xf32, #tpu.memory_space<vmem>>, vector<128x8xf32>
    %c13 = arith.constant 13 : index
    %c0_27 = arith.constant 0 : index
    %23 = vector.load %arg15[%c13, %c0_27] : memref<144x8xf32, #tpu.memory_space<vmem>>, vector<128x8xf32>
    %c14 = arith.constant 14 : index
    %c0_28 = arith.constant 0 : index
    %24 = vector.load %arg15[%c14, %c0_28] : memref<144x8xf32, #tpu.memory_space<vmem>>, vector<128x8xf32>
    %c15 = arith.constant 15 : index
    %c0_29 = arith.constant 0 : index
    %25 = vector.load %arg15[%c15, %c0_29] : memref<144x8xf32, #tpu.memory_space<vmem>>, vector<128x8xf32>
    %c16 = arith.constant 16 : index
    %c0_30 = arith.constant 0 : index
    %26 = vector.load %arg15[%c16, %c0_30] : memref<144x8xf32, #tpu.memory_space<vmem>>, vector<128x8xf32>
    %27 = tpu.concatenate %11, %12, %13, %14, %15, %16, %17, %18, %19, %20, %21, %22, %23, %24, %25, %26 in 1 : vector<128x8xf32>, vector<128x8xf32>, vector<128x8xf32>, vector<128x8xf32>, vector<128x8xf32>, vector<128x8xf32>, vector<128x8xf32>, vector<128x8xf32>, vector<128x8xf32>, vector<128x8xf32>, vector<128x8xf32>, vector<128x8xf32>, vector<128x8xf32>, vector<128x8xf32>, vector<128x8xf32>, vector<128x8xf32> -> vector<128x128xf32>
    %28 = arith.truncf %27 : vector<128x128xf32> to vector<128x128xbf16>
    %c0_31 = arith.constant 0 : index
    %c0_32 = arith.constant 0 : index
    %29 = vector.load %arg2[%c0_31, %c0_32] : memref<128x192xbf16, #tpu.memory_space<vmem>>, vector<128x192xbf16>
    %cst_33 = arith.constant dense<0.000000e+00> : vector<128x192xf32>
    %30 = tpu.matmul %28, %29, %cst_33 {dimension_numbers = #tpu.dot_dimension_numbers<[1], [0], [0], [1], [0, 0, 1, 1], [], []>} : vector<128x128xbf16>, vector<128x192xbf16>, vector<128x192xf32> -> vector<128x192xf32>
    %c0_34 = arith.constant 0 : index
    %c0_35 = arith.constant 0 : index
    %31 = vector.load %arg3[%c0_34, %c0_35] : memref<2x192xf32, #tpu.memory_space<vmem>>, vector<1x192xf32>
    %32 = vector.broadcast %31 : vector<1x192xf32> to vector<128x192xf32>
    %33 = arith.mulf %30, %32 : vector<128x192xf32>
    %c1_36 = arith.constant 1 : index
    %c0_37 = arith.constant 0 : index
    %34 = vector.load %arg3[%c1_36, %c0_37] : memref<2x192xf32, #tpu.memory_space<vmem>>, vector<1x192xf32>
    %35 = vector.broadcast %34 : vector<1x192xf32> to vector<128x192xf32>
    %36 = arith.addf %33, %35 : vector<128x192xf32>
    %cst_38 = arith.constant 0.000000e+00 : f32
    %37 = vector.broadcast %cst_38 : f32 to vector<128x192xf32>
    %38 = arith.cmpf ogt, %36, %37 : vector<128x192xf32>
    %cst_39 = arith.constant 0.000000e+00 : f32
    %39 = vector.broadcast %cst_39 : f32 to vector<128x192xf32>
    %40 = arith.minimumf %36, %39 : vector<128x192xf32>
    %41 = math.exp %40 : vector<128x192xf32>
    %cst_40 = arith.constant 1.000000e+00 : f32
    %42 = vector.broadcast %cst_40 : f32 to vector<128x192xf32>
    %43 = arith.subf %41, %42 : vector<128x192xf32>
    %44 = arith.select %38, %36, %43 : vector<128x192xi1>, vector<128x192xf32>
    %45 = arith.truncf %44 : vector<128x192xf32> to vector<128x192xbf16>
    %c0_41 = arith.constant 0 : index
    %c0_42 = arith.constant 0 : index
    %46 = vector.load %arg4[%c0_41, %c0_42] : memref<192x48xbf16, #tpu.memory_space<vmem>>, vector<192x48xbf16>
    %cst_43 = arith.constant dense<0.000000e+00> : vector<128x48xf32>
    %47 = tpu.matmul %45, %46, %cst_43 {dimension_numbers = #tpu.dot_dimension_numbers<[1], [0], [0], [1], [0, 0, 1, 1], [], []>} : vector<128x192xbf16>, vector<192x48xbf16>, vector<128x48xf32> -> vector<128x48xf32>
    %c0_44 = arith.constant 0 : index
    %c0_45 = arith.constant 0 : index
    %48 = vector.load %arg5[%c0_44, %c0_45] : memref<2x48xf32, #tpu.memory_space<vmem>>, vector<1x48xf32>
    %49 = vector.broadcast %48 : vector<1x48xf32> to vector<128x48xf32>
    %50 = arith.mulf %47, %49 : vector<128x48xf32>
    %c1_46 = arith.constant 1 : index
    %c0_47 = arith.constant 0 : index
    %51 = vector.load %arg5[%c1_46, %c0_47] : memref<2x48xf32, #tpu.memory_space<vmem>>, vector<1x48xf32>
    %52 = vector.broadcast %51 : vector<1x48xf32> to vector<128x48xf32>
    %53 = arith.addf %50, %52 : vector<128x48xf32>
    %cst_48 = arith.constant 0.000000e+00 : f32
    %54 = vector.broadcast %cst_48 : f32 to vector<128x48xf32>
    %55 = arith.cmpf ogt, %53, %54 : vector<128x48xf32>
    %cst_49 = arith.constant 0.000000e+00 : f32
    %56 = vector.broadcast %cst_49 : f32 to vector<128x48xf32>
    %57 = arith.minimumf %53, %56 : vector<128x48xf32>
    %58 = math.exp %57 : vector<128x48xf32>
    %cst_50 = arith.constant 1.000000e+00 : f32
    %59 = vector.broadcast %cst_50 : f32 to vector<128x48xf32>
    %60 = arith.subf %58, %59 : vector<128x48xf32>
    %61 = arith.select %55, %53, %60 : vector<128x48xi1>, vector<128x48xf32>
    %c8_51 = arith.constant 8 : index
    %c0_52 = arith.constant 0 : index
    %62 = vector.load %arg16[%c8_51, %c0_52] : memref<144x48xf32, #tpu.memory_space<vmem>>, vector<128x48xf32>
    tpu.vector_store %arg16[%c8_51, %c0_52], %61 {strides = array<i32>} : memref<144x48xf32, #tpu.memory_space<vmem>>, vector<128x48xf32>,
    %c4_53 = arith.constant 4 : index
    %c0_54 = arith.constant 0 : index
    %63 = tpu.strided_load %arg16[%c4_53, %c0_54] {strides = array<i32: 4, 1>} : memref<144x48xf32, #tpu.memory_space<vmem>>, vector<32x48xf32>
    %c5_55 = arith.constant 5 : index
    %c0_56 = arith.constant 0 : index
    %64 = tpu.strided_load %arg16[%c5_55, %c0_56] {strides = array<i32: 4, 1>} : memref<144x48xf32, #tpu.memory_space<vmem>>, vector<32x48xf32>
    %65 = arith.addf %63, %64 : vector<32x48xf32>
    %c6_57 = arith.constant 6 : index
    %c0_58 = arith.constant 0 : index
    %66 = tpu.strided_load %arg16[%c6_57, %c0_58] {strides = array<i32: 4, 1>} : memref<144x48xf32, #tpu.memory_space<vmem>>, vector<32x48xf32>
    %67 = arith.addf %65, %66 : vector<32x48xf32>
    %c7_59 = arith.constant 7 : index
    %c0_60 = arith.constant 0 : index
    %68 = tpu.strided_load %arg16[%c7_59, %c0_60] {strides = array<i32: 4, 1>} : memref<144x48xf32, #tpu.memory_space<vmem>>, vector<32x48xf32>
    %69 = arith.addf %67, %68 : vector<32x48xf32>
    %c8_61 = arith.constant 8 : index
    %c0_62 = arith.constant 0 : index
    %70 = tpu.strided_load %arg16[%c8_61, %c0_62] {strides = array<i32: 4, 1>} : memref<144x48xf32, #tpu.memory_space<vmem>>, vector<32x48xf32>
    %c9_63 = arith.constant 9 : index
    %c0_64 = arith.constant 0 : index
    %71 = tpu.strided_load %arg16[%c9_63, %c0_64] {strides = array<i32: 4, 1>} : memref<144x48xf32, #tpu.memory_space<vmem>>, vector<32x48xf32>
    %72 = arith.addf %70, %71 : vector<32x48xf32>
    %c10_65 = arith.constant 10 : index
    %c0_66 = arith.constant 0 : index
    %73 = tpu.strided_load %arg16[%c10_65, %c0_66] {strides = array<i32: 4, 1>} : memref<144x48xf32, #tpu.memory_space<vmem>>, vector<32x48xf32>
    %74 = arith.addf %72, %73 : vector<32x48xf32>
    %c11_67 = arith.constant 11 : index
    %c0_68 = arith.constant 0 : index
    %75 = tpu.strided_load %arg16[%c11_67, %c0_68] {strides = array<i32: 4, 1>} : memref<144x48xf32, #tpu.memory_space<vmem>>, vector<32x48xf32>
    %76 = arith.addf %74, %75 : vector<32x48xf32>
    %c12_69 = arith.constant 12 : index
    %c0_70 = arith.constant 0 : index
    %77 = tpu.strided_load %arg16[%c12_69, %c0_70] {strides = array<i32: 4, 1>} : memref<144x48xf32, #tpu.memory_space<vmem>>, vector<32x48xf32>
    %c13_71 = arith.constant 13 : index
    %c0_72 = arith.constant 0 : index
    %78 = tpu.strided_load %arg16[%c13_71, %c0_72] {strides = array<i32: 4, 1>} : memref<144x48xf32, #tpu.memory_space<vmem>>, vector<32x48xf32>
    %79 = arith.addf %77, %78 : vector<32x48xf32>
    %c14_73 = arith.constant 14 : index
    %c0_74 = arith.constant 0 : index
    %80 = tpu.strided_load %arg16[%c14_73, %c0_74] {strides = array<i32: 4, 1>} : memref<144x48xf32, #tpu.memory_space<vmem>>, vector<32x48xf32>
    %81 = arith.addf %79, %80 : vector<32x48xf32>
    %c15_75 = arith.constant 15 : index
    %c0_76 = arith.constant 0 : index
    %82 = tpu.strided_load %arg16[%c15_75, %c0_76] {strides = array<i32: 4, 1>} : memref<144x48xf32, #tpu.memory_space<vmem>>, vector<32x48xf32>
    %83 = arith.addf %81, %82 : vector<32x48xf32>
    %c16_77 = arith.constant 16 : index
    %c0_78 = arith.constant 0 : index
    %84 = tpu.strided_load %arg16[%c16_77, %c0_78] {strides = array<i32: 4, 1>} : memref<144x48xf32, #tpu.memory_space<vmem>>, vector<32x48xf32>
    %c17 = arith.constant 17 : index
    %c0_79 = arith.constant 0 : index
    %85 = tpu.strided_load %arg16[%c17, %c0_79] {strides = array<i32: 4, 1>} : memref<144x48xf32, #tpu.memory_space<vmem>>, vector<32x48xf32>
    %86 = arith.addf %84, %85 : vector<32x48xf32>
    %c18 = arith.constant 18 : index
    %c0_80 = arith.constant 0 : index
    %87 = tpu.strided_load %arg16[%c18, %c0_80] {strides = array<i32: 4, 1>} : memref<144x48xf32, #tpu.memory_space<vmem>>, vector<32x48xf32>
    %88 = arith.addf %86, %87 : vector<32x48xf32>
    %c19 = arith.constant 19 : index
    %c0_81 = arith.constant 0 : index
    %89 = tpu.strided_load %arg16[%c19, %c0_81] {strides = array<i32: 4, 1>} : memref<144x48xf32, #tpu.memory_space<vmem>>, vector<32x48xf32>
    %90 = arith.addf %88, %89 : vector<32x48xf32>
    %91 = tpu.concatenate %69, %76, %83, %90 in 1 : vector<32x48xf32>, vector<32x48xf32>, vector<32x48xf32>, vector<32x48xf32> -> vector<32x192xf32>
    %cst_82 = arith.constant 2.500000e-01 : f32
    %92 = vector.broadcast %cst_82 : f32 to vector<32x192xf32>
    %93 = arith.mulf %91, %92 : vector<32x192xf32>
    %94 = arith.truncf %93 : vector<32x192xf32> to vector<32x192xbf16>
    %c0_83 = arith.constant 0 : index
    %c0_84 = arith.constant 0 : index
    %95 = vector.load %arg6[%c0_83, %c0_84] : memref<192x24xbf16, #tpu.memory_space<vmem>>, vector<192x24xbf16>
    %cst_85 = arith.constant dense<0.000000e+00> : vector<32x24xf32>
    %96 = tpu.matmul %94, %95, %cst_85 {dimension_numbers = #tpu.dot_dimension_numbers<[1], [0], [0], [1], [0, 0, 1, 1], [], []>} : vector<32x192xbf16>, vector<192x24xbf16>, vector<32x24xf32> -> vector<32x24xf32>
    %c0_86 = arith.constant 0 : index
    %c0_87 = arith.constant 0 : index
    %97 = vector.load %arg7[%c0_86, %c0_87] : memref<2x24xf32, #tpu.memory_space<vmem>>, vector<1x24xf32>
    %98 = vector.broadcast %97 : vector<1x24xf32> to vector<32x24xf32>
    %99 = arith.mulf %96, %98 : vector<32x24xf32>
    %c1_88 = arith.constant 1 : index
    %c0_89 = arith.constant 0 : index
    %100 = vector.load %arg7[%c1_88, %c0_89] : memref<2x24xf32, #tpu.memory_space<vmem>>, vector<1x24xf32>
    %101 = vector.broadcast %100 : vector<1x24xf32> to vector<32x24xf32>
    %102 = arith.addf %99, %101 : vector<32x24xf32>
    %cst_90 = arith.constant 0.000000e+00 : f32
    %103 = vector.broadcast %cst_90 : f32 to vector<32x24xf32>
    %104 = arith.cmpf ogt, %102, %103 : vector<32x24xf32>
    %cst_91 = arith.constant 0.000000e+00 : f32
    %105 = vector.broadcast %cst_91 : f32 to vector<32x24xf32>
    %106 = arith.minimumf %102, %105 : vector<32x24xf32>
    %107 = math.exp %106 : vector<32x24xf32>
    %cst_92 = arith.constant 1.000000e+00 : f32
    %108 = vector.broadcast %cst_92 : f32 to vector<32x24xf32>
    %109 = arith.subf %107, %108 : vector<32x24xf32>
    %110 = arith.select %104, %102, %109 : vector<32x24xi1>, vector<32x24xf32>
    %c8_93 = arith.constant 8 : index
    %c0_94 = arith.constant 0 : index
    %111 = vector.load %arg17[%c8_93, %c0_94] : memref<48x24xf32, #tpu.memory_space<vmem>>, vector<32x24xf32>
    tpu.vector_store %arg17[%c8_93, %c0_94], %110 {strides = array<i32>} : memref<48x24xf32, #tpu.memory_space<vmem>>, vector<32x24xf32>,
    %c2_95 = arith.constant 2 : index
    %c0_96 = arith.constant 0 : index
    %112 = tpu.strided_load %arg17[%c2_95, %c0_96] {strides = array<i32: 2, 1>} : memref<48x24xf32, #tpu.memory_space<vmem>>, vector<16x24xf32>
    %c3_97 = arith.constant 3 : index
    %c0_98 = arith.constant 0 : index
    %113 = tpu.strided_load %arg17[%c3_97, %c0_98] {strides = array<i32: 2, 1>} : memref<48x24xf32, #tpu.memory_space<vmem>>, vector<16x24xf32>
    %114 = arith.addf %112, %113 : vector<16x24xf32>
    %c4_99 = arith.constant 4 : index
    %c0_100 = arith.constant 0 : index
    %115 = tpu.strided_load %arg17[%c4_99, %c0_100] {strides = array<i32: 2, 1>} : memref<48x24xf32, #tpu.memory_space<vmem>>, vector<16x24xf32>
    %c5_101 = arith.constant 5 : index
    %c0_102 = arith.constant 0 : index
    %116 = tpu.strided_load %arg17[%c5_101, %c0_102] {strides = array<i32: 2, 1>} : memref<48x24xf32, #tpu.memory_space<vmem>>, vector<16x24xf32>
    %117 = arith.addf %115, %116 : vector<16x24xf32>
    %c6_103 = arith.constant 6 : index
    %c0_104 = arith.constant 0 : index
    %118 = tpu.strided_load %arg17[%c6_103, %c0_104] {strides = array<i32: 2, 1>} : memref<48x24xf32, #tpu.memory_space<vmem>>, vector<16x24xf32>
    %c7_105 = arith.constant 7 : index
    %c0_106 = arith.constant 0 : index
    %119 = tpu.strided_load %arg17[%c7_105, %c0_106] {strides = array<i32: 2, 1>} : memref<48x24xf32, #tpu.memory_space<vmem>>, vector<16x24xf32>
    %120 = arith.addf %118, %119 : vector<16x24xf32>
    %c8_107 = arith.constant 8 : index
    %c0_108 = arith.constant 0 : index
    %121 = tpu.strided_load %arg17[%c8_107, %c0_108] {strides = array<i32: 2, 1>} : memref<48x24xf32, #tpu.memory_space<vmem>>, vector<16x24xf32>
    %c9_109 = arith.constant 9 : index
    %c0_110 = arith.constant 0 : index
    %122 = tpu.strided_load %arg17[%c9_109, %c0_110] {strides = array<i32: 2, 1>} : memref<48x24xf32, #tpu.memory_space<vmem>>, vector<16x24xf32>
    %123 = arith.addf %121, %122 : vector<16x24xf32>
    %c10_111 = arith.constant 10 : index
    %c0_112 = arith.constant 0 : index
    %124 = tpu.strided_load %arg17[%c10_111, %c0_112] {strides = array<i32: 2, 1>} : memref<48x24xf32, #tpu.memory_space<vmem>>, vector<16x24xf32>
    %c11_113 = arith.constant 11 : index
    %c0_114 = arith.constant 0 : index
    %125 = tpu.strided_load %arg17[%c11_113, %c0_114] {strides = array<i32: 2, 1>} : memref<48x24xf32, #tpu.memory_space<vmem>>, vector<16x24xf32>
    %126 = arith.addf %124, %125 : vector<16x24xf32>
    %c12_115 = arith.constant 12 : index
    %c0_116 = arith.constant 0 : index
    %127 = tpu.strided_load %arg17[%c12_115, %c0_116] {strides = array<i32: 2, 1>} : memref<48x24xf32, #tpu.memory_space<vmem>>, vector<16x24xf32>
    %c13_117 = arith.constant 13 : index
    %c0_118 = arith.constant 0 : index
    %128 = tpu.strided_load %arg17[%c13_117, %c0_118] {strides = array<i32: 2, 1>} : memref<48x24xf32, #tpu.memory_space<vmem>>, vector<16x24xf32>
    %129 = arith.addf %127, %128 : vector<16x24xf32>
    %c14_119 = arith.constant 14 : index
    %c0_120 = arith.constant 0 : index
    %130 = tpu.strided_load %arg17[%c14_119, %c0_120] {strides = array<i32: 2, 1>} : memref<48x24xf32, #tpu.memory_space<vmem>>, vector<16x24xf32>
    %c15_121 = arith.constant 15 : index
    %c0_122 = arith.constant 0 : index
    %131 = tpu.strided_load %arg17[%c15_121, %c0_122] {strides = array<i32: 2, 1>} : memref<48x24xf32, #tpu.memory_space<vmem>>, vector<16x24xf32>
    %132 = arith.addf %130, %131 : vector<16x24xf32>
    %c16_123 = arith.constant 16 : index
    %c0_124 = arith.constant 0 : index
    %133 = tpu.strided_load %arg17[%c16_123, %c0_124] {strides = array<i32: 2, 1>} : memref<48x24xf32, #tpu.memory_space<vmem>>, vector<16x24xf32>
    %c17_125 = arith.constant 17 : index
    %c0_126 = arith.constant 0 : index
    %134 = tpu.strided_load %arg17[%c17_125, %c0_126] {strides = array<i32: 2, 1>} : memref<48x24xf32, #tpu.memory_space<vmem>>, vector<16x24xf32>
    %135 = arith.addf %133, %134 : vector<16x24xf32>
    %136 = tpu.concatenate %114, %117, %120, %123, %126, %129, %132, %135 in 1 : vector<16x24xf32>, vector<16x24xf32>, vector<16x24xf32>, vector<16x24xf32>, vector<16x24xf32>, vector<16x24xf32>, vector<16x24xf32>, vector<16x24xf32> -> vector<16x192xf32>
    %cst_127 = arith.constant 5.000000e-01 : f32
    %137 = vector.broadcast %cst_127 : f32 to vector<16x192xf32>
    %138 = arith.mulf %136, %137 : vector<16x192xf32>
    %139 = arith.truncf %138 : vector<16x192xf32> to vector<16x192xbf16>
    %c0_128 = arith.constant 0 : index
    %c0_129 = arith.constant 0 : index
    %140 = vector.load %arg8[%c0_128, %c0_129] : memref<192x12xbf16, #tpu.memory_space<vmem>>, vector<192x12xbf16>
    %cst_130 = arith.constant dense<0.000000e+00> : vector<16x12xf32>
    %141 = tpu.matmul %139, %140, %cst_130 {dimension_numbers = #tpu.dot_dimension_numbers<[1], [0], [0], [1], [0, 0, 1, 1], [], []>} : vector<16x192xbf16>, vector<192x12xbf16>, vector<16x12xf32> -> vector<16x12xf32>
    %c0_131 = arith.constant 0 : index
    %c0_132 = arith.constant 0 : index
    %142 = vector.load %arg9[%c0_131, %c0_132] : memref<2x12xf32, #tpu.memory_space<vmem>>, vector<1x12xf32>
    %143 = vector.broadcast %142 : vector<1x12xf32> to vector<16x12xf32>
    %144 = arith.mulf %141, %143 : vector<16x12xf32>
    %c1_133 = arith.constant 1 : index
    %c0_134 = arith.constant 0 : index
    %145 = vector.load %arg9[%c1_133, %c0_134] : memref<2x12xf32, #tpu.memory_space<vmem>>, vector<1x12xf32>
    %146 = vector.broadcast %145 : vector<1x12xf32> to vector<16x12xf32>
    %147 = arith.addf %144, %146 : vector<16x12xf32>
    %cst_135 = arith.constant 0.000000e+00 : f32
    %148 = vector.broadcast %cst_135 : f32 to vector<16x12xf32>
    %149 = arith.cmpf ogt, %147, %148 : vector<16x12xf32>
    %cst_136 = arith.constant 0.000000e+00 : f32
    %150 = vector.broadcast %cst_136 : f32 to vector<16x12xf32>
    %151 = arith.minimumf %147, %150 : vector<16x12xf32>
    %152 = math.exp %151 : vector<16x12xf32>
    %cst_137 = arith.constant 1.000000e+00 : f32
    %153 = vector.broadcast %cst_137 : f32 to vector<16x12xf32>
    %154 = arith.subf %152, %153 : vector<16x12xf32>
    %155 = arith.select %149, %147, %154 : vector<16x12xi1>, vector<16x12xf32>
    %c8_138 = arith.constant 8 : index
    %c0_139 = arith.constant 0 : index
    %156 = vector.load %arg18[%c8_138, %c0_139] : memref<28x12xf32, #tpu.memory_space<vmem>>, vector<16x12xf32>
    tpu.vector_store %arg18[%c8_138, %c0_139], %155 {strides = array<i32>} : memref<28x12xf32, #tpu.memory_space<vmem>>, vector<16x12xf32>,
    %c6_140 = arith.constant 6 : index
    %c0_141 = arith.constant 0 : index
    %157 = tpu.strided_load %arg18[%c6_140, %c0_141] {strides = array<i32: 2, 1>} : memref<28x12xf32, #tpu.memory_space<vmem>>, vector<8x12xf32>
    %c7_142 = arith.constant 7 : index
    %c0_143 = arith.constant 0 : index
    %158 = tpu.strided_load %arg18[%c7_142, %c0_143] {strides = array<i32: 2, 1>} : memref<28x12xf32, #tpu.memory_space<vmem>>, vector<8x12xf32>
    %159 = arith.addf %157, %158 : vector<8x12xf32>
    %c8_144 = arith.constant 8 : index
    %c0_145 = arith.constant 0 : index
    %160 = tpu.strided_load %arg18[%c8_144, %c0_145] {strides = array<i32: 2, 1>} : memref<28x12xf32, #tpu.memory_space<vmem>>, vector<8x12xf32>
    %c9_146 = arith.constant 9 : index
    %c0_147 = arith.constant 0 : index
    %161 = tpu.strided_load %arg18[%c9_146, %c0_147] {strides = array<i32: 2, 1>} : memref<28x12xf32, #tpu.memory_space<vmem>>, vector<8x12xf32>
    %162 = arith.addf %160, %161 : vector<8x12xf32>
    %c10_148 = arith.constant 10 : index
    %c0_149 = arith.constant 0 : index
    %163 = tpu.strided_load %arg18[%c10_148, %c0_149] {strides = array<i32: 2, 1>} : memref<28x12xf32, #tpu.memory_space<vmem>>, vector<8x12xf32>
    %c11_150 = arith.constant 11 : index
    %c0_151 = arith.constant 0 : index
    %164 = tpu.strided_load %arg18[%c11_150, %c0_151] {strides = array<i32: 2, 1>} : memref<28x12xf32, #tpu.memory_space<vmem>>, vector<8x12xf32>
    %165 = arith.addf %163, %164 : vector<8x12xf32>
    %c12_152 = arith.constant 12 : index
    %c0_153 = arith.constant 0 : index
    %166 = tpu.strided_load %arg18[%c12_152, %c0_153] {strides = array<i32: 2, 1>} : memref<28x12xf32, #tpu.memory_space<vmem>>, vector<8x12xf32>
    %c13_154 = arith.constant 13 : index
    %c0_155 = arith.constant 0 : index
    %167 = tpu.strided_load %arg18[%c13_154, %c0_155] {strides = array<i32: 2, 1>} : memref<28x12xf32, #tpu.memory_space<vmem>>, vector<8x12xf32>
    %168 = arith.addf %166, %167 : vector<8x12xf32>
    %169 = tpu.concatenate %159, %162, %165, %168 in 1 : vector<8x12xf32>, vector<8x12xf32>, vector<8x12xf32>, vector<8x12xf32> -> vector<8x48xf32>
    %cst_156 = arith.constant 5.000000e-01 : f32
    %170 = vector.broadcast %cst_156 : f32 to vector<8x48xf32>
    %171 = arith.mulf %169, %170 : vector<8x48xf32>
    %172 = arith.truncf %171 : vector<8x48xf32> to vector<8x48xbf16>
    %c0_157 = arith.constant 0 : index
    %c0_158 = arith.constant 0 : index
    %173 = vector.load %arg10[%c0_157, %c0_158] : memref<48x6xbf16, #tpu.memory_space<vmem>>, vector<48x6xbf16>
    %cst_159 = arith.constant dense<0.000000e+00> : vector<8x6xf32>
    %174 = tpu.matmul %172, %173, %cst_159 {dimension_numbers = #tpu.dot_dimension_numbers<[1], [0], [0], [1], [0, 0, 1, 1], [], []>} : vector<8x48xbf16>, vector<48x6xbf16>, vector<8x6xf32> -> vector<8x6xf32>
    %c0_160 = arith.constant 0 : index
    %c0_161 = arith.constant 0 : index
    %175 = vector.load %arg11[%c0_160, %c0_161] : memref<2x6xf32, #tpu.memory_space<vmem>>, vector<1x6xf32>
    %176 = vector.broadcast %175 : vector<1x6xf32> to vector<8x6xf32>
    %177 = arith.mulf %174, %176 : vector<8x6xf32>
    %c1_162 = arith.constant 1 : index
    %c0_163 = arith.constant 0 : index
    %178 = vector.load %arg11[%c1_162, %c0_163] : memref<2x6xf32, #tpu.memory_space<vmem>>, vector<1x6xf32>
    %179 = vector.broadcast %178 : vector<1x6xf32> to vector<8x6xf32>
    %180 = arith.addf %177, %179 : vector<8x6xf32>
    %cst_164 = arith.constant 0.000000e+00 : f32
    %181 = vector.broadcast %cst_164 : f32 to vector<8x6xf32>
    %182 = arith.cmpf ogt, %180, %181 : vector<8x6xf32>
    %cst_165 = arith.constant 0.000000e+00 : f32
    %183 = vector.broadcast %cst_165 : f32 to vector<8x6xf32>
    %184 = arith.minimumf %180, %183 : vector<8x6xf32>
    %185 = math.exp %184 : vector<8x6xf32>
    %cst_166 = arith.constant 1.000000e+00 : f32
    %186 = vector.broadcast %cst_166 : f32 to vector<8x6xf32>
    %187 = arith.subf %185, %186 : vector<8x6xf32>
    %188 = arith.select %182, %180, %187 : vector<8x6xi1>, vector<8x6xf32>
    %c0_167 = arith.constant 0 : index
    %c0_168 = arith.constant 0 : index
    %c0_169 = arith.constant 0 : index
    %189 = vector.load %arg12[%c0_167, %c0_168, %c0_169] : memref<2x8x6xf32, #tpu.memory_space<vmem>>, vector<1x8x6xf32>
    %190 = vector.shape_cast %189 : vector<1x8x6xf32> to vector<8x6xf32>
    %191 = arith.mulf %188, %190 : vector<8x6xf32>
    %cst_170 = arith.constant dense<0.000000e+00> : vector<8xf32>
    %192 = vector.multi_reduction <add>, %191, %cst_170 [1] : vector<8x6xf32> to vector<8xf32>
    %193 = vector.shape_cast %192 : vector<8xf32> to vector<8x1xf32>
    %c1_171 = arith.constant 1 : index
    %c0_172 = arith.constant 0 : index
    %c0_173 = arith.constant 0 : index
    %194 = vector.load %arg12[%c1_171, %c0_172, %c0_173] : memref<2x8x6xf32, #tpu.memory_space<vmem>>, vector<1x8x6xf32>
    %195 = vector.shape_cast %194 : vector<1x8x6xf32> to vector<8x6xf32>
    %196 = arith.mulf %188, %195 : vector<8x6xf32>
    %cst_174 = arith.constant dense<0.000000e+00> : vector<8xf32>
    %197 = vector.multi_reduction <add>, %196, %cst_174 [1] : vector<8x6xf32> to vector<8xf32>
    %198 = vector.shape_cast %197 : vector<8xf32> to vector<8x1xf32>
    %199 = tpu.concatenate %193, %198 in 1 : vector<8x1xf32>, vector<8x1xf32> -> vector<8x2xf32>
    %cst_175 = arith.constant dense<0.000000e+00> : vector<2xf32>
    %200 = vector.multi_reduction <add>, %199, %cst_175 [0] : vector<8x2xf32> to vector<2xf32>
    %201 = vector.shape_cast %200 : vector<2xf32> to vector<1x2xf32>
    %c0_176 = arith.constant 0 : index
    %c0_177 = arith.constant 0 : index
    %202 = vector.load %arg13[%c0_176, %c0_177] : memref<1x2xf32, #tpu.memory_space<vmem>>, vector<1x2xf32>
    %203 = arith.addf %201, %202 : vector<1x2xf32>
    %c0_178 = arith.constant 0 : index
    %c0_179 = arith.constant 0 : index
    %c0_180 = arith.constant 0 : index
    %204 = vector.load %arg14[%c0_178, %c0_179, %c0_180] : memref<1x1x2xf32, #tpu.memory_space<vmem>>, vector<1x1x2xf32>
    %205 = vector.shape_cast %204 : vector<1x1x2xf32> to vector<1x2xf32>
    %206 = vector.shape_cast %203 : vector<1x2xf32> to vector<1x1x2xf32>
    tpu.vector_store %arg14[%c0_178, %c0_179, %c0_180], %206 {strides = array<i32>} : memref<1x1x2xf32, #tpu.memory_space<vmem>>, vector<1x1x2xf32>,
    return
  }
  func.func @transform_0(%arg0: i32) -> (i32, i32, i32) {
    %c0_i32 = arith.constant 0 : i32
    %c0_i32_0 = arith.constant 0 : i32
    %c0_i32_1 = arith.constant 0 : i32
    return %arg0, %c0_i32, %c0_i32_0 : i32, i32, i32
  }
  func.func @transform_1(%arg0: i32) -> (i32, i32) {
    %c0_i32 = arith.constant 0 : i32
    %c0_i32_0 = arith.constant 0 : i32
    %c0_i32_1 = arith.constant 0 : i32
    return %c0_i32, %c0_i32_0 : i32, i32
  }
  func.func @transform_2(%arg0: i32) -> (i32, i32) {
    %c0_i32 = arith.constant 0 : i32
    %c0_i32_0 = arith.constant 0 : i32
    %c0_i32_1 = arith.constant 0 : i32
    return %c0_i32, %c0_i32_0 : i32, i32
  }
  func.func @transform_3(%arg0: i32) -> (i32, i32) {
    %c0_i32 = arith.constant 0 : i32
    %c0_i32_0 = arith.constant 0 : i32
    %c0_i32_1 = arith.constant 0 : i32
    return %c0_i32, %c0_i32_0 : i32, i32
  }
  func.func @transform_4(%arg0: i32) -> (i32, i32) {
    %c0_i32 = arith.constant 0 : i32
    %c0_i32_0 = arith.constant 0 : i32
    %c0_i32_1 = arith.constant 0 : i32
    return %c0_i32, %c0_i32_0 : i32, i32
  }
  func.func @transform_5(%arg0: i32) -> (i32, i32) {
    %c0_i32 = arith.constant 0 : i32
    %c0_i32_0 = arith.constant 0 : i32
    %c0_i32_1 = arith.constant 0 : i32
    return %c0_i32, %c0_i32_0 : i32, i32
  }
  func.func @transform_6(%arg0: i32) -> (i32, i32) {
    %c0_i32 = arith.constant 0 : i32
    %c0_i32_0 = arith.constant 0 : i32
    %c0_i32_1 = arith.constant 0 : i32
    return %c0_i32, %c0_i32_0 : i32, i32
  }
  func.func @transform_7(%arg0: i32) -> (i32, i32) {
    %c0_i32 = arith.constant 0 : i32
    %c0_i32_0 = arith.constant 0 : i32
    %c0_i32_1 = arith.constant 0 : i32
    return %c0_i32, %c0_i32_0 : i32, i32
  }
  func.func @transform_8(%arg0: i32) -> (i32, i32) {
    %c0_i32 = arith.constant 0 : i32
    %c0_i32_0 = arith.constant 0 : i32
    %c0_i32_1 = arith.constant 0 : i32
    return %c0_i32, %c0_i32_0 : i32, i32
  }
  func.func @transform_9(%arg0: i32) -> (i32, i32) {
    %c0_i32 = arith.constant 0 : i32
    %c0_i32_0 = arith.constant 0 : i32
    %c0_i32_1 = arith.constant 0 : i32
    return %c0_i32, %c0_i32_0 : i32, i32
  }
  func.func @transform_10(%arg0: i32) -> (i32, i32) {
    %c0_i32 = arith.constant 0 : i32
    %c0_i32_0 = arith.constant 0 : i32
    %c0_i32_1 = arith.constant 0 : i32
    return %c0_i32, %c0_i32_0 : i32, i32
  }
  func.func @transform_11(%arg0: i32) -> (i32, i32, i32) {
    %c0_i32 = arith.constant 0 : i32
    %c0_i32_0 = arith.constant 0 : i32
    %c0_i32_1 = arith.constant 0 : i32
    %c0_i32_2 = arith.constant 0 : i32
    return %c0_i32, %c0_i32_0, %c0_i32_1 : i32, i32, i32
  }
  func.func @transform_12(%arg0: i32) -> (i32, i32) {
    %c0_i32 = arith.constant 0 : i32
    %c0_i32_0 = arith.constant 0 : i32
    %c0_i32_1 = arith.constant 0 : i32
    return %c0_i32, %c0_i32_0 : i32, i32
  }
  func.func @transform_13(%arg0: i32) -> (i32, i32, i32) {
    %c0_i32 = arith.constant 0 : i32
    %c0_i32_0 = arith.constant 0 : i32
    %c0_i32_1 = arith.constant 0 : i32
    return %arg0, %c0_i32, %c0_i32_0 : i32, i32, i32
  }
}

</mosaic_0001>

<llo_original>
// kernel: eeg_inception_forward.1
$region0: #{eeg_inception_forward.1}
  #allocation0 [shape = 'u32[]', space=smem, size = 0x4, offset = 0x4, fixed_abs, tag = 'smem constant byte address 0x4 - core index']
  #allocation1 [shape = 'u32[144,128]{1,0:T(1,128)}', space=vmem, size = 0x12000, scoped, tag = 'internal scratch']
  #allocation2 [shape = 'f32[144,8]{1,0:T(8,128)}', space=vmem, size = 0x12000, scoped, tag = 'scratch operand']
  #allocation3 [shape = 'f32[144,48]{1,0:T(8,128)}', space=vmem, size = 0x12000, scoped, tag = 'scratch operand']
  #allocation4 [shape = 'f32[48,24]{1,0:T(8,128)}', space=vmem, size = 0x6000, scoped, tag = 'scratch operand']
  #allocation5 [shape = 'f32[28,12]{1,0:T(8,128)}', space=vmem, size = 0x4000, scoped, tag = 'scratch operand']
  %s0 = inlined_call_operand.vmem [shape: f32[2,128,8], index: 0, kind: input, shape index: {}]
  %s1 = inlined_call_operand.vmem [shape: bf16[128,192], index: 1, kind: input, shape index: {}]
  %s2 = inlined_call_operand.vmem [shape: f32[2,192], index: 2, kind: input, shape index: {}]
  %s3 = inlined_call_operand.vmem [shape: bf16[192,48], index: 3, kind: input, shape index: {}]
  %s4 = inlined_call_operand.vmem [shape: f32[2,48], index: 4, kind: input, shape index: {}]
  %s5 = inlined_call_operand.vmem [shape: bf16[192,24], index: 5, kind: input, shape index: {}]
  %s6 = inlined_call_operand.vmem [shape: f32[2,24], index: 6, kind: input, shape index: {}]
  %s7 = inlined_call_operand.vmem [shape: bf16[192,12], index: 7, kind: input, shape index: {}]
  %s8 = inlined_call_operand.vmem [shape: f32[2,12], index: 8, kind: input, shape index: {}]
  %s9 = inlined_call_operand.vmem [shape: bf16[48,6], index: 9, kind: input, shape index: {}]
  %s10 = inlined_call_operand.vmem [shape: f32[2,6], index: 10, kind: input, shape index: {}]
  %s11 = inlined_call_operand.vmem [shape: f32[2,8,6], index: 11, kind: input, shape index: {}]
  %s12 = inlined_call_operand.vmem [shape: f32[1,2], index: 12, kind: input, shape index: {}]
  %s13 = inlined_call_operand.hbm [shape: f32[2,1,2], index: 13, kind: output, shape index: {}]
  %s14 = sld [smem:[#allocation0]]
  $region85: #{eeg_inception_forward.1} parent=0
    _
  %s16 = ssub.s32 1, %s14
  %s17 = scalar_select 0, %s16, %s14
  $region1: #{eeg_inception_forward.1} parent=0
    #allocation6 [shape = 'u8[1024]{0}', space=vmem, size = 0x400, scoped, tag = 'output window, operand 0']
    #allocation7 [shape = 's32[2]{0}', space=sflag, size = 0x8, scoped, tag = 'scoped memory for eeg_inception_forward.1']
    %18 = vsyncpa [#allocation7], 0
    %s19 = scalar_lea.sflag [#allocation7], 1
    %20 = vsyncpa %s19, 0
    loop: start=0, step=1, limit=4
    $region2: #{eeg_inception_forward.1} parent=1 // loop_pre_header
      _
    $region3: #{eeg_inception_forward.1} parent=1 // loop_header
      %s22 = sphi 0, %s26
      %p23 = scmp.ge.s32.totalorder %s22, 4
      %s32 = sphi 0, %s34
      %s35 = sphi 0, %s32
      %s36 = sphi 0, %s35
      %s52 = sphi 0, %s36
      %s56 = sphi 0, %s56
      %s58 = sphi 0, %s56
      %s59 = sphi 0, %s58
      %s73 = sphi 0, %s59
      %s77 = sphi 0, %s77
      %s79 = sphi 0, %s77
      %s80 = sphi 0, %s79
      %s94 = sphi 0, %s80
      %s98 = sphi 0, %s98
      %s100 = sphi 0, %s98
      %s101 = sphi 0, %s100
      %s115 = sphi 0, %s101
      %s119 = sphi 0, %s119
      %s121 = sphi 0, %s119
      %s122 = sphi 0, %s121
      %s136 = sphi 0, %s122
      %s140 = sphi 0, %s140
      %s142 = sphi 0, %s140
      %s143 = sphi 0, %s142
      %s157 = sphi 0, %s143
      %s161 = sphi 0, %s161
      %s163 = sphi 0, %s161
      %s164 = sphi 0, %s163
      %s178 = sphi 0, %s164
      %s182 = sphi 0, %s182
      %s184 = sphi 0, %s182
      %s185 = sphi 0, %s184
      %s199 = sphi 0, %s185
      %s203 = sphi 0, %s203
      %s205 = sphi 0, %s203
      %s206 = sphi 0, %s205
      %s220 = sphi 0, %s206
      %s224 = sphi 0, %s224
      %s226 = sphi 0, %s224
      %s227 = sphi 0, %s226
      %s241 = sphi 0, %s227
      %s245 = sphi 0, %s245
      %s247 = sphi 0, %s245
      %s248 = sphi 0, %s247
      %s262 = sphi 0, %s248
      %s266 = sphi 0, %s266
      %s268 = sphi 0, %s266
      %s269 = sphi 0, %s268
      %s283 = sphi 0, %s269
      %s287 = sphi 0, %s287
      %s289 = sphi 0, %s287
      %s290 = sphi 0, %s289
      %s304 = sphi 0, %s290
      %s310 = sphi 0, %s312
      %s313 = sphi 0, %s310
      %s314 = sphi 0, %s313
      %s330 = sphi 0, %s314
    $region4: #{eeg_inception_forward.1} parent=1 // loop_header_branch
      %25 = sbr.rel (%p23) target = $region8
    $region5: #{eeg_inception_forward.1} parent=1 // loop_body
      %s27 = ssub.s32 %s22, 1
      %s28 = ssub.s32 %s22, 2
      %s29 = sadd.s32 %s22, 1
      %s30 = ssub.s32 %s22, %s29
      %p31 = scmp.eq.s32.totalorder %s30, 0
      %s33 = sadd.s32 %s32, 1
      %s34 = scalar_select %p31, %s32, %s33
      %p37 = pneg %p31
      %p38 = scmp.eq.s32.totalorder %s22, 1
      %p39 = por %p37, %p38
      %p40 = scmp.ne.s32.totalorder %s32, %s35
      %p41 = scmp.eq.s32.totalorder %s22, 0
      %p42 = por %p40, %p41
      %p43 = scmp.ne.s32.totalorder %s32, %s35
      %p44 = scmp.eq.s32.totalorder %s27, 1
      %p45 = por %p43, %p44
      %p46 = scmp.ne.s32.totalorder %s35, %s36
      %p47 = scmp.eq.s32.totalorder %s27, 0
      %p48 = por %p46, %p47
      %p49 = scmp.ne.s32.totalorder %s35, %s36
      %p50 = scmp.eq.s32.totalorder %s28, 1
      %p51 = por %p49, %p50
      %p53 = scmp.ne.s32.totalorder %s36, %s52
      %p54 = scmp.eq.s32.totalorder %s28, 0
      %p55 = por %p53, %p54
      %s57 = sadd.s32 %s56, 1
      %p60 = scmp.eq.s32.totalorder %s22, 1
      %p61 = scmp.ne.s32.totalorder %s56, %s58
      %p62 = scmp.eq.s32.totalorder %s22, 0
      %p63 = por %p61, %p62
      %p64 = scmp.ne.s32.totalorder %s56, %s58
      %p65 = scmp.eq.s32.totalorder %s27, 1
      %p66 = por %p64, %p65
      %p67 = scmp.ne.s32.totalorder %s58, %s59
      %p68 = scmp.eq.s32.totalorder %s27, 0
      %p69 = por %p67, %p68
      %p70 = scmp.ne.s32.totalorder %s58, %s59
      %p71 = scmp.eq.s32.totalorder %s28, 1
      %p72 = por %p70, %p71
      %p74 = scmp.ne.s32.totalorder %s59, %s73
      %p75 = scmp.eq.s32.totalorder %s28, 0
      %p76 = por %p74, %p75
      %s78 = sadd.s32 %s77, 1
      %p81 = scmp.eq.s32.totalorder %s22, 1
      %p82 = scmp.ne.s32.totalorder %s77, %s79
      %p83 = scmp.eq.s32.totalorder %s22, 0
      %p84 = por %p82, %p83
      %p85 = scmp.ne.s32.totalorder %s77, %s79
      %p86 = scmp.eq.s32.totalorder %s27, 1
      %p87 = por %p85, %p86
      %p88 = scmp.ne.s32.totalorder %s79, %s80
      %p89 = scmp.eq.s32.totalorder %s27, 0
      %p90 = por %p88, %p89
      %p91 = scmp.ne.s32.totalorder %s79, %s80
      %p92 = scmp.eq.s32.totalorder %s28, 1
      %p93 = por %p91, %p92
      %p95 = scmp.ne.s32.totalorder %s80, %s94
      %p96 = scmp.eq.s32.totalorder %s28, 0
      %p97 = por %p95, %p96
      %s99 = sadd.s32 %s98, 1
      %p102 = scmp.eq.s32.totalorder %s22, 1
      %p103 = scmp.ne.s32.totalorder %s98, %s100
      %p104 = scmp.eq.s32.totalorder %s22, 0
      %p105 = por %p103, %p104
      %p106 = scmp.ne.s32.totalorder %s98, %s100
      %p107 = scmp.eq.s32.totalorder %s27, 1
      %p108 = por %p106, %p107
      %p109 = scmp.ne.s32.totalorder %s100, %s101
      %p110 = scmp.eq.s32.totalorder %s27, 0
      %p111 = por %p109, %p110
      %p112 = scmp.ne.s32.totalorder %s100, %s101
      %p113 = scmp.eq.s32.totalorder %s28, 1
      %p114 = por %p112, %p113
      %p116 = scmp.ne.s32.totalorder %s101, %s115
      %p117 = scmp.eq.s32.totalorder %s28, 0
      %p118 = por %p116, %p117
      %s120 = sadd.s32 %s119, 1
      %p123 = scmp.eq.s32.totalorder %s22, 1
      %p124 = scmp.ne.s32.totalorder %s119, %s121
      %p125 = scmp.eq.s32.totalorder %s22, 0
      %p126 = por %p124, %p125
      %p127 = scmp.ne.s32.totalorder %s119, %s121
      %p128 = scmp.eq.s32.totalorder %s27, 1
      %p129 = por %p127, %p128
      %p130 = scmp.ne.s32.totalorder %s121, %s122
      %p131 = scmp.eq.s32.totalorder %s27, 0
      %p132 = por %p130, %p131
      %p133 = scmp.ne.s32.totalorder %s121, %s122
      %p134 = scmp.eq.s32.totalorder %s28, 1
      %p135 = por %p133, %p134
      %p137 = scmp.ne.s32.totalorder %s122, %s136
      %p138 = scmp.eq.s32.totalorder %s28, 0
      %p139 = por %p137, %p138
      %s141 = sadd.s32 %s140, 1
      %p144 = scmp.eq.s32.totalorder %s22, 1
      %p145 = scmp.ne.s32.totalorder %s140, %s142
      %p146 = scmp.eq.s32.totalorder %s22, 0
      %p147 = por %p145, %p146
      %p148 = scmp.ne.s32.totalorder %s140, %s142
      %p149 = scmp.eq.s32.totalorder %s27, 1
      %p150 = por %p148, %p149
      %p151 = scmp.ne.s32.totalorder %s142, %s143
      %p152 = scmp.eq.s32.totalorder %s27, 0
      %p153 = por %p151, %p152
      %p154 = scmp.ne.s32.totalorder %s142, %s143
      %p155 = scmp.eq.s32.totalorder %s28, 1
      %p156 = por %p154, %p155
      %p158 = scmp.ne.s32.totalorder %s143, %s157
      %p159 = scmp.eq.s32.totalorder %s28, 0
      %p160 = por %p158, %p159
      %s162 = sadd.s32 %s161, 1
      %p165 = scmp.eq.s32.totalorder %s22, 1
      %p166 = scmp.ne.s32.totalorder %s161, %s163
      %p167 = scmp.eq.s32.totalorder %s22, 0
      %p168 = por %p166, %p167
      %p169 = scmp.ne.s32.totalorder %s161, %s163
      %p170 = scmp.eq.s32.totalorder %s27, 1
      %p171 = por %p169, %p170
      %p172 = scmp.ne.s32.totalorder %s163, %s164
      %p173 = scmp.eq.s32.totalorder %s27, 0
      %p174 = por %p172, %p173
      %p175 = scmp.ne.s32.totalorder %s163, %s164
      %p176 = scmp.eq.s32.totalorder %s28, 1
      %p177 = por %p175, %p176
      %p179 = scmp.ne.s32.totalorder %s164, %s178
      %p180 = scmp.eq.s32.totalorder %s28, 0
      %p181 = por %p179, %p180
      %s183 = sadd.s32 %s182, 1
      %p186 = scmp.eq.s32.totalorder %s22, 1
      %p187 = scmp.ne.s32.totalorder %s182, %s184
      %p188 = scmp.eq.s32.totalorder %s22, 0
      %p189 = por %p187, %p188
      %p190 = scmp.ne.s32.totalorder %s182, %s184
      %p191 = scmp.eq.s32.totalorder %s27, 1
      %p192 = por %p190, %p191
      %p193 = scmp.ne.s32.totalorder %s184, %s185
      %p194 = scmp.eq.s32.totalorder %s27, 0
      %p195 = por %p193, %p194
      %p196 = scmp.ne.s32.totalorder %s184, %s185
      %p197 = scmp.eq.s32.totalorder %s28, 1
      %p198 = por %p196, %p197
      %p200 = scmp.ne.s32.totalorder %s185, %s199
      %p201 = scmp.eq.s32.totalorder %s28, 0
      %p202 = por %p200, %p201
      %s204 = sadd.s32 %s203, 1
      %p207 = scmp.eq.s32.totalorder %s22, 1
      %p208 = scmp.ne.s32.totalorder %s203, %s205
      %p209 = scmp.eq.s32.totalorder %s22, 0
      %p210 = por %p208, %p209
      %p211 = scmp.ne.s32.totalorder %s203, %s205
      %p212 = scmp.eq.s32.totalorder %s27, 1
      %p213 = por %p211, %p212
      %p214 = scmp.ne.s32.totalorder %s205, %s206
      %p215 = scmp.eq.s32.totalorder %s27, 0
      %p216 = por %p214, %p215
      %p217 = scmp.ne.s32.totalorder %s205, %s206
      %p218 = scmp.eq.s32.totalorder %s28, 1
      %p219 = por %p217, %p218
      %p221 = scmp.ne.s32.totalorder %s206, %s220
      %p222 = scmp.eq.s32.totalorder %s28, 0
      %p223 = por %p221, %p222
      %s225 = sadd.s32 %s224, 1
      %p228 = scmp.eq.s32.totalorder %s22, 1
      %p229 = scmp.ne.s32.totalorder %s224, %s226
      %p230 = scmp.eq.s32.totalorder %s22, 0
      %p231 = por %p229, %p230
      %p232 = scmp.ne.s32.totalorder %s224, %s226
      %p233 = scmp.eq.s32.totalorder %s27, 1
      %p234 = por %p232, %p233
      %p235 = scmp.ne.s32.totalorder %s226, %s227
      %p236 = scmp.eq.s32.totalorder %s27, 0
      %p237 = por %p235, %p236
      %p238 = scmp.ne.s32.totalorder %s226, %s227
      %p239 = scmp.eq.s32.totalorder %s28, 1
      %p240 = por %p238, %p239
      %p242 = scmp.ne.s32.totalorder %s227, %s241
      %p243 = scmp.eq.s32.totalorder %s28, 0
      %p244 = por %p242, %p243
      %s246 = sadd.s32 %s245, 1
      %p249 = scmp.eq.s32.totalorder %s22, 1
      %p250 = scmp.ne.s32.totalorder %s245, %s247
      %p251 = scmp.eq.s32.totalorder %s22, 0
      %p252 = por %p250, %p251
      %p253 = scmp.ne.s32.totalorder %s245, %s247
      %p254 = scmp.eq.s32.totalorder %s27, 1
      %p255 = por %p253, %p254
      %p256 = scmp.ne.s32.totalorder %s247, %s248
      %p257 = scmp.eq.s32.totalorder %s27, 0
      %p258 = por %p256, %p257
      %p259 = scmp.ne.s32.totalorder %s247, %s248
      %p260 = scmp.eq.s32.totalorder %s28, 1
      %p261 = por %p259, %p260
      %p263 = scmp.ne.s32.totalorder %s248, %s262
      %p264 = scmp.eq.s32.totalorder %s28, 0
      %p265 = por %p263, %p264
      %s267 = sadd.s32 %s266, 1
      %p270 = scmp.eq.s32.totalorder %s22, 1
      %p271 = scmp.ne.s32.totalorder %s266, %s268
      %p272 = scmp.eq.s32.totalorder %s22, 0
      %p273 = por %p271, %p272
      %p274 = scmp.ne.s32.totalorder %s266, %s268
      %p275 = scmp.eq.s32.totalorder %s27, 1
      %p276 = por %p274, %p275
      %p277 = scmp.ne.s32.totalorder %s268, %s269
      %p278 = scmp.eq.s32.totalorder %s27, 0
      %p279 = por %p277, %p278
      %p280 = scmp.ne.s32.totalorder %s268, %s269
      %p281 = scmp.eq.s32.totalorder %s28, 1
      %p282 = por %p280, %p281
      %p284 = scmp.ne.s32.totalorder %s269, %s283
      %p285 = scmp.eq.s32.totalorder %s28, 0
      %p286 = por %p284, %p285
      %s288 = sadd.s32 %s287, 1
      %p291 = scmp.eq.s32.totalorder %s22, 1
      %p292 = scmp.ne.s32.totalorder %s287, %s289
      %p293 = scmp.eq.s32.totalorder %s22, 0
      %p294 = por %p292, %p293
      %p295 = scmp.ne.s32.totalorder %s287, %s289
      %p296 = scmp.eq.s32.totalorder %s27, 1
      %p297 = por %p295, %p296
      %p298 = scmp.ne.s32.totalorder %s289, %s290
      %p299 = scmp.eq.s32.totalorder %s27, 0
      %p300 = por %p298, %p299
      %p301 = scmp.ne.s32.totalorder %s289, %s290
      %p302 = scmp.eq.s32.totalorder %s28, 1
      %p303 = por %p301, %p302
      %p305 = scmp.ne.s32.totalorder %s290, %s304
      %p306 = scmp.eq.s32.totalorder %s28, 0
      %p307 = por %p305, %p306
      %s308 = ssub.s32 %s22, %s29
      %p309 = scmp.eq.s32.totalorder %s308, 0
      %s311 = sadd.s32 %s310, 1
      %s312 = scalar_select %p309, %s310, %s311
      %p315 = pneg %p309
      %p316 = scmp.eq.s32.totalorder %s22, 1
      %p317 = por %p315, %p316
      %p318 = scmp.ne.s32.totalorder %s310, %s313
      %p319 = scmp.eq.s32.totalorder %s22, 0
      %p320 = por %p318, %p319
      %p321 = scmp.ne.s32.totalorder %s310, %s313
      %p322 = scmp.eq.s32.totalorder %s27, 1
      %p323 = por %p321, %p322
      %p324 = scmp.ne.s32.totalorder %s313, %s314
      %p325 = scmp.eq.s32.totalorder %s27, 0
      %p326 = por %p324, %p325
      %p327 = scmp.ne.s32.totalorder %s313, %s314
      %p328 = scmp.eq.s32.totalorder %s28, 1
      %p329 = por %p327, %p328
      %p331 = scmp.ne.s32.totalorder %s314, %s330
      %p332 = scmp.eq.s32.totalorder %s28, 0
      %p333 = por %p331, %p332
      %p334 = scmp.le.s32.totalorder 1, %s22
      %p335 = scmp.lt.s32.totalorder %s22, 3
      %p336 = pnand %p334, %p335
      %p337 = pneg %p336
      // Predicated region
      $region9: #{eeg_inception_forward.1} parent=5 // pred_check
        _
      $region10: #{eeg_inception_forward.1} parent=5 // pred_check_branch
        %339 = sbr.rel (%p336) target = $region12
      $region11: #{eeg_inception_forward.1} parent=5 // pred_region
        %s340 = ssub.s32 %s22, 1
        // Predicated region
        $region13: #{eeg_inception_forward.1} parent=11 // pred_check
          %p341 = pneg %p69
        $region14: #{eeg_inception_forward.1} parent=11 // pred_check_branch
          %343 = sbr.rel (%p341) target = $region16
        $region15: #{eeg_inception_forward.1} parent=11 // pred_region
          _
        $region16: #{eeg_inception_forward.1} parent=11 // pred_fallthru
          _
        // Predicated region
        $region17: #{eeg_inception_forward.1} parent=11 // pred_check
          %p344 = pneg %p90
        $region18: #{eeg_inception_forward.1} parent=11 // pred_check_branch
          %346 = sbr.rel (%p344) target = $region20
        $region19: #{eeg_inception_forward.1} parent=11 // pred_region
          _
        $region20: #{eeg_inception_forward.1} parent=11 // pred_fallthru
          _
        // Predicated region
        $region21: #{eeg_inception_forward.1} parent=11 // pred_check
          %p347 = pneg %p111
        $region22: #{eeg_inception_forward.1} parent=11 // pred_check_branch
          %349 = sbr.rel (%p347) target = $region24
        $region23: #{eeg_inception_forward.1} parent=11 // pred_region
          _
        $region24: #{eeg_inception_forward.1} parent=11 // pred_fallthru
          _
        // Predicated region
        $region25: #{eeg_inception_forward.1} parent=11 // pred_check
          %p350 = pneg %p132
        $region26: #{eeg_inception_forward.1} parent=11 // pred_check_branch
          %352 = sbr.rel (%p350) target = $region28
        $region27: #{eeg_inception_forward.1} parent=11 // pred_region
          _
        $region28: #{eeg_inception_forward.1} parent=11 // pred_fallthru
          _
        // Predicated region
        $region29: #{eeg_inception_forward.1} parent=11 // pred_check
          %p353 = pneg %p153
        $region30: #{eeg_inception_forward.1} parent=11 // pred_check_branch
          %355 = sbr.rel (%p353) target = $region32
        $region31: #{eeg_inception_forward.1} parent=11 // pred_region
          _
        $region32: #{eeg_inception_forward.1} parent=11 // pred_fallthru
          _
        // Predicated region
        $region33: #{eeg_inception_forward.1} parent=11 // pred_check
          %p356 = pneg %p174
        $region34: #{eeg_inception_forward.1} parent=11 // pred_check_branch
          %358 = sbr.rel (%p356) target = $region36
        $region35: #{eeg_inception_forward.1} parent=11 // pred_region
          _
        $region36: #{eeg_inception_forward.1} parent=11 // pred_fallthru
          _
        // Predicated region
        $region37: #{eeg_inception_forward.1} parent=11 // pred_check
          %p359 = pneg %p195
        $region38: #{eeg_inception_forward.1} parent=11 // pred_check_branch
          %361 = sbr.rel (%p359) target = $region40
        $region39: #{eeg_inception_forward.1} parent=11 // pred_region
          _
        $region40: #{eeg_inception_forward.1} parent=11 // pred_fallthru
          _
        // Predicated region
        $region41: #{eeg_inception_forward.1} parent=11 // pred_check
          %p362 = pneg %p216
        $region42: #{eeg_inception_forward.1} parent=11 // pred_check_branch
          %364 = sbr.rel (%p362) target = $region44
        $region43: #{eeg_inception_forward.1} parent=11 // pred_region
          _
        $region44: #{eeg_inception_forward.1} parent=11 // pred_fallthru
          _
        // Predicated region
        $region45: #{eeg_inception_forward.1} parent=11 // pred_check
          %p365 = pneg %p237
        $region46: #{eeg_inception_forward.1} parent=11 // pred_check_branch
          %367 = sbr.rel (%p365) target = $region48
        $region47: #{eeg_inception_forward.1} parent=11 // pred_region
          _
        $region48: #{eeg_inception_forward.1} parent=11 // pred_fallthru
          _
        // Predicated region
        $region49: #{eeg_inception_forward.1} parent=11 // pred_check
          %p368 = pneg %p258
        $region50: #{eeg_inception_forward.1} parent=11 // pred_check_branch
          %370 = sbr.rel (%p368) target = $region52
        $region51: #{eeg_inception_forward.1} parent=11 // pred_region
          _
        $region52: #{eeg_inception_forward.1} parent=11 // pred_fallthru
          _
        // Predicated region
        $region53: #{eeg_inception_forward.1} parent=11 // pred_check
          %p371 = pneg %p279
        $region54: #{eeg_inception_forward.1} parent=11 // pred_check_branch
          %373 = sbr.rel (%p371) target = $region56
        $region55: #{eeg_inception_forward.1} parent=11 // pred_region
          _
        $region56: #{eeg_inception_forward.1} parent=11 // pred_fallthru
          _
        // Predicated region
        $region57: #{eeg_inception_forward.1} parent=11 // pred_check
          %p374 = pneg %p300
        $region58: #{eeg_inception_forward.1} parent=11 // pred_check_branch
          %376 = sbr.rel (%p374) target = $region60
        $region59: #{eeg_inception_forward.1} parent=11 // pred_region
          _
        $region60: #{eeg_inception_forward.1} parent=11 // pred_fallthru
          _
      $region12: #{eeg_inception_forward.1} parent=5 // pred_fallthru
        _
      %p377 = scmp.lt.s32.totalorder %s22, 2
      // Predicated region
      $region61: #{eeg_inception_forward.1} parent=5 // pred_check
        %p378 = pneg %p377
      $region62: #{eeg_inception_forward.1} parent=5 // pred_check_branch
        %380 = sbr.rel (%p378) target = $region64
      $region63: #{eeg_inception_forward.1} parent=5 // pred_region
        // Predicated region
        $region65: #{eeg_inception_forward.1} parent=63 // pred_check
          %p381 = pneg %p42
        $region66: #{eeg_inception_forward.1} parent=63 // pred_check_branch
          %383 = sbr.rel (%p381) target = $region68
        $region67: #{eeg_inception_forward.1} parent=63 // pred_region
          %p384 = scmp.lt.s32.totalorder %s22, 1
          %s385 = scalar_select %p384, %s22, 1
          %s386 = smul.addr %s385, 16
          %s387 = smul.addr %s386, 8
          %s388 = scalar_lea.vmem %s0, %s387
        $region68: #{eeg_inception_forward.1} parent=63 // pred_fallthru
          _
      $region64: #{eeg_inception_forward.1} parent=5 // pred_fallthru
        _
      %p389 = scmp.le.s32.totalorder 1, %s22
      %p390 = scmp.lt.s32.totalorder %s22, 3
      %p391 = pnand %p389, %p390
      %p392 = pneg %p391
      // Predicated region
      $region69: #{eeg_inception_forward.1} parent=5 // pred_check
        _
      $region70: #{eeg_inception_forward.1} parent=5 // pred_check_branch
        %394 = sbr.rel (%p391) target = $region72
      $region71: #{eeg_inception_forward.1} parent=5 // pred_region
        %s395 = ssub.s32 %s22, 1
        %p396 = scmp.lt.s32.totalorder %s27, 1
        %s397 = scalar_select %p396, %s27, 1
        %s398 = smul.addr %s397, 16
        %s399 = smul.addr %s398, 8
        %s400 = scalar_lea.vmem %s0, %s399
        %p401 = pneg %p48
        %p402 = pneg %p45
        %p403 = pneg %p69
        %p404 = pneg %p66
        %p405 = pneg %p90
        %p406 = pneg %p87
        %p407 = pneg %p111
        %p408 = pneg %p108
        %p409 = pneg %p132
        %p410 = pneg %p129
        %p411 = pneg %p153
        %p412 = pneg %p150
        %p413 = pneg %p174
        %p414 = pneg %p171
        %p415 = pneg %p195
        %p416 = pneg %p192
        %p417 = pneg %p216
        %p418 = pneg %p213
        %p419 = pneg %p237
        %p420 = pneg %p234
        %p421 = pneg %p258
        %p422 = pneg %p255
        %p423 = pneg %p279
        %p424 = pneg %p276
        %p425 = pneg %p300
        %p426 = pneg %p297
        %p427 = pneg %p326
        %p428 = pneg %p323
        %s429 = sand.u32 %s313, 1
        %s430 = scalar_lea.sflag [#allocation7], %s429
        %s431 = sand.u32 %s313, 1
        %s432 = scalar_lea.vmem [#allocation6], %s431
        %p433 = scmp.lt.s32.totalorder %s27, 1
        %s434 = scalar_select %p433, %s27, 1
        %s435 = smul.addr %s434, 16
        %s436 = smul.addr %s435, 8
        %s437 = scalar_lea.vmem %s0, %s436
        %vm439 = vcmask 64512
        %440 = vst.msk [vmem:[#allocation2] sm:$0xff] %vm439, 0.0
        %441 = vst.msk [vmem:[#allocation2 + $0x8] sm:$0xff] %vm439, 0.0
        %442 = vst.msk [vmem:[#allocation2 + $0x10] sm:$0xff] %vm439, 0.0
        %443 = vst.msk [vmem:[#allocation2 + $0x18] sm:$0xff] %vm439, 0.0
        %444 = vst.msk [vmem:[#allocation2 + $0x20] sm:$0xff] %vm439, 0.0
        %445 = vst.msk [vmem:[#allocation2 + $0x28] sm:$0xff] %vm439, 0.0
        %446 = vst.msk [vmem:[#allocation2 + $0x30] sm:$0xff] %vm439, 0.0
        %447 = vst.msk [vmem:[#allocation2 + $0x38] sm:$0xff] %vm439, 0.0
        %448 = vst.msk [vmem:[#allocation2 + $0x40] sm:$0xff] %vm439, 0.0
        %449 = vst.msk [vmem:[#allocation2 + $0x48] sm:$0xff] %vm439, 0.0
        %450 = vst.msk [vmem:[#allocation2 + $0x50] sm:$0xff] %vm439, 0.0
        %451 = vst.msk [vmem:[#allocation2 + $0x58] sm:$0xff] %vm439, 0.0
        %452 = vst.msk [vmem:[#allocation2 + $0x60] sm:$0xff] %vm439, 0.0
        %453 = vst.msk [vmem:[#allocation2 + $0x68] sm:$0xff] %vm439, 0.0
        %454 = vst.msk [vmem:[#allocation2 + $0x70] sm:$0xff] %vm439, 0.0
        %455 = vst.msk [vmem:[#allocation2 + $0x78] sm:$0xff] %vm439, 0.0
        %456 = vst.msk [vmem:[#allocation2 + $0x80] sm:$0xff] %vm439, 0.0
        %457 = vst.msk [vmem:[#allocation2 + $0x88] sm:$0xff] %vm439, 0.0
        %vm458 = vcmask 392192
        %459 = vst.msk [vmem:[#allocation3] sm:$0xff] %vm458, 0.0
        %460 = vst.msk [vmem:[#allocation3 + $0x8] sm:$0xff] %vm458, 0.0
        %461 = vst.msk [vmem:[#allocation3 + $0x10] sm:$0xff] %vm458, 0.0
        %462 = vst.msk [vmem:[#allocation3 + $0x18] sm:$0xff] %vm458, 0.0
        %463 = vst.msk [vmem:[#allocation3 + $0x20] sm:$0xff] %vm458, 0.0
        %464 = vst.msk [vmem:[#allocation3 + $0x28] sm:$0xff] %vm458, 0.0
        %465 = vst.msk [vmem:[#allocation3 + $0x30] sm:$0xff] %vm458, 0.0
        %466 = vst.msk [vmem:[#allocation3 + $0x38] sm:$0xff] %vm458, 0.0
        %467 = vst.msk [vmem:[#allocation3 + $0x40] sm:$0xff] %vm458, 0.0
        %468 = vst.msk [vmem:[#allocation3 + $0x48] sm:$0xff] %vm458, 0.0
        %469 = vst.msk [vmem:[#allocation3 + $0x50] sm:$0xff] %vm458, 0.0
        %470 = vst.msk [vmem:[#allocation3 + $0x58] sm:$0xff] %vm458, 0.0
        %471 = vst.msk [vmem:[#allocation3 + $0x60] sm:$0xff] %vm458, 0.0
        %472 = vst.msk [vmem:[#allocation3 + $0x68] sm:$0xff] %vm458, 0.0
        %473 = vst.msk [vmem:[#allocation3 + $0x70] sm:$0xff] %vm458, 0.0
        %474 = vst.msk [vmem:[#allocation3 + $0x78] sm:$0xff] %vm458, 0.0
        %475 = vst.msk [vmem:[#allocation3 + $0x80] sm:$0xff] %vm458, 0.0
        %476 = vst.msk [vmem:[#allocation3 + $0x88] sm:$0xff] %vm458, 0.0
        %vm477 = vcmask 195584
        %478 = vst.msk [vmem:[#allocation4] sm:$0xff] %vm477, 0.0
        %479 = vst.msk [vmem:[#allocation4 + $0x8] sm:$0xff] %vm477, 0.0
        %480 = vst.msk [vmem:[#allocation4 + $0x10] sm:$0xff] %vm477, 0.0
        %481 = vst.msk [vmem:[#allocation4 + $0x18] sm:$0xff] %vm477, 0.0
        %482 = vst.msk [vmem:[#allocation4 + $0x20] sm:$0xff] %vm477, 0.0
        %483 = vst.msk [vmem:[#allocation4 + $0x28] sm:$0xff] %vm477, 0.0
        %vm484 = vcmask 97280
        %485 = vst.msk [vmem:[#allocation5] sm:$0xff] %vm484, 0.0
        %486 = vst.msk [vmem:[#allocation5 + $0x8] sm:$0xff] %vm484, 0.0
        %487 = vst.msk [vmem:[#allocation5 + $0x10] sm:$0xff] %vm484, 0.0
        %vm488 = vcmask 93184
        %489 = vst.msk [vmem:[#allocation5 + $0x18] sm:$0xf] %vm488, 0.0
        %v490 = vld [vmem:[%s437] sm:$0xff]
        %v491 = vld [vmem:[%s437 + $0x8] sm:$0xff]
        %v492 = vld [vmem:[%s437 + $0x10] sm:$0xff]
        %v493 = vld [vmem:[%s437 + $0x18] sm:$0xff]
        %v494 = vld [vmem:[%s437 + $0x20] sm:$0xff]
        %v495 = vld [vmem:[%s437 + $0x28] sm:$0xff]
        %v496 = vld [vmem:[%s437 + $0x30] sm:$0xff]
        %v497 = vld [vmem:[%s437 + $0x38] sm:$0xff]
        %v498 = vld [vmem:[%s437 + $0x40] sm:$0xff]
        %v499 = vld [vmem:[%s437 + $0x48] sm:$0xff]
        %v500 = vld [vmem:[%s437 + $0x50] sm:$0xff]
        %v501 = vld [vmem:[%s437 + $0x58] sm:$0xff]
        %v502 = vld [vmem:[%s437 + $0x60] sm:$0xff]
        %v503 = vld [vmem:[%s437 + $0x68] sm:$0xff]
        %v504 = vld [vmem:[%s437 + $0x70] sm:$0xff]
        %v505 = vld [vmem:[%s437 + $0x78] sm:$0xff]
        %506 = vst.msk [vmem:[#allocation2 + $0x8] sm:$0xff] %vm439, %v490
        %507 = vst.msk [vmem:[#allocation2 + $0x10] sm:$0xff] %vm439, %v491
        %508 = vst.msk [vmem:[#allocation2 + $0x18] sm:$0xff] %vm439, %v492
        %509 = vst.msk [vmem:[#allocation2 + $0x20] sm:$0xff] %vm439, %v493
        %510 = vst.msk [vmem:[#allocation2 + $0x28] sm:$0xff] %vm439, %v494
        %511 = vst.msk [vmem:[#allocation2 + $0x30] sm:$0xff] %vm439, %v495
        %512 = vst.msk [vmem:[#allocation2 + $0x38] sm:$0xff] %vm439, %v496
        %513 = vst.msk [vmem:[#allocation2 + $0x40] sm:$0xff] %vm439, %v497
        %514 = vst.msk [vmem:[#allocation2 + $0x48] sm:$0xff] %vm439, %v498
        %515 = vst.msk [vmem:[#allocation2 + $0x50] sm:$0xff] %vm439, %v499
        %516 = vst.msk [vmem:[#allocation2 + $0x58] sm:$0xff] %vm439, %v500
        %517 = vst.msk [vmem:[#allocation2 + $0x60] sm:$0xff] %vm439, %v501
        %518 = vst.msk [vmem:[#allocation2 + $0x68] sm:$0xff] %vm439, %v502
        %519 = vst.msk [vmem:[#allocation2 + $0x70] sm:$0xff] %vm439, %v503
        %520 = vst.msk [vmem:[#allocation2 + $0x78] sm:$0xff] %vm439, %v504
        %521 = vst.msk [vmem:[#allocation2 + $0x80] sm:$0xff] %vm439, %v505
        %v522 = vld [vmem:[#allocation2 + $0x1] sm:$0xff]
        %v523 = vld [vmem:[#allocation2 + $0x9] sm:$0xff]
        %v524 = vld [vmem:[#allocation2 + $0x11] sm:$0xff]
        %v525 = vld [vmem:[#allocation2 + $0x19] sm:$0xff]
        %v526 = vld [vmem:[#allocation2 + $0x21] sm:$0xff]
        %v527 = vld [vmem:[#allocation2 + $0x29] sm:$0xff]
        %v528 = vld [vmem:[#allocation2 + $0x31] sm:$0xff]
        %v529 = vld [vmem:[#allocation2 + $0x39] sm:$0xff]
        %v530 = vld [vmem:[#allocation2 + $0x41] sm:$0xff]
        %v531 = vld [vmem:[#allocation2 + $0x49] sm:$0xff]
        %v532 = vld [vmem:[#allocation2 + $0x51] sm:$0xff]
        %v533 = vld [vmem:[#allocation2 + $0x59] sm:$0xff]
        %v534 = vld [vmem:[#allocation2 + $0x61] sm:$0xff]
        %v535 = vld [vmem:[#allocation2 + $0x69] sm:$0xff]
        %v536 = vld [vmem:[#allocation2 + $0x71] sm:$0xff]
        %v537 = vld [vmem:[#allocation2 + $0x79] sm:$0xff]
        %v538 = vld [vmem:[#allocation2 + $0x2] sm:$0xff]
        %v539 = vld [vmem:[#allocation2 + $0xa] sm:$0xff]
        %v540 = vld [vmem:[#allocation2 + $0x12] sm:$0xff]
        %v541 = vld [vmem:[#allocation2 + $0x1a] sm:$0xff]
        %v542 = vld [vmem:[#allocation2 + $0x22] sm:$0xff]
        %v543 = vld [vmem:[#allocation2 + $0x2a] sm:$0xff]
        %v544 = vld [vmem:[#allocation2 + $0x32] sm:$0xff]
        %v545 = vld [vmem:[#allocation2 + $0x3a] sm:$0xff]
        %v546 = vld [vmem:[#allocation2 + $0x42] sm:$0xff]
        %v547 = vld [vmem:[#allocation2 + $0x4a] sm:$0xff]
        %v548 = vld [vmem:[#allocation2 + $0x52] sm:$0xff]
        %v549 = vld [vmem:[#allocation2 + $0x5a] sm:$0xff]
        %v550 = vld [vmem:[#allocation2 + $0x62] sm:$0xff]
        %v551 = vld [vmem:[#allocation2 + $0x6a] sm:$0xff]
        %v552 = vld [vmem:[#allocation2 + $0x72] sm:$0xff]
        %v553 = vld [vmem:[#allocation2 + $0x7a] sm:$0xff]
        %v554 = vld [vmem:[#allocation2 + $0x3] sm:$0xff]
        %v555 = vld [vmem:[#allocation2 + $0xb] sm:$0xff]
        %v556 = vld [vmem:[#allocation2 + $0x13] sm:$0xff]
        %v557 = vld [vmem:[#allocation2 + $0x1b] sm:$0xff]
        %v558 = vld [vmem:[#allocation2 + $0x23] sm:$0xff]
        %v559 = vld [vmem:[#allocation2 + $0x2b] sm:$0xff]
        %v560 = vld [vmem:[#allocation2 + $0x33] sm:$0xff]
        %v561 = vld [vmem:[#allocation2 + $0x3b] sm:$0xff]
        %v562 = vld [vmem:[#allocation2 + $0x43] sm:$0xff]
        %v563 = vld [vmem:[#allocation2 + $0x4b] sm:$0xff]
        %v564 = vld [vmem:[#allocation2 + $0x53] sm:$0xff]
        %v565 = vld [vmem:[#allocation2 + $0x5b] sm:$0xff]
        %v566 = vld [vmem:[#allocation2 + $0x63] sm:$0xff]
        %v567 = vld [vmem:[#allocation2 + $0x6b] sm:$0xff]
        %v568 = vld [vmem:[#allocation2 + $0x73] sm:$0xff]
        %v569 = vld [vmem:[#allocation2 + $0x7b] sm:$0xff]
        %v570 = vld [vmem:[#allocation2 + $0x4] sm:$0xff]
        %v571 = vld [vmem:[#allocation2 + $0xc] sm:$0xff]
        %v572 = vld [vmem:[#allocation2 + $0x14] sm:$0xff]
        %v573 = vld [vmem:[#allocation2 + $0x1c] sm:$0xff]
        %v574 = vld [vmem:[#allocation2 + $0x24] sm:$0xff]
        %v575 = vld [vmem:[#allocation2 + $0x2c] sm:$0xff]
        %v576 = vld [vmem:[#allocation2 + $0x34] sm:$0xff]
        %v577 = vld [vmem:[#allocation2 + $0x3c] sm:$0xff]
        %v578 = vld [vmem:[#allocation2 + $0x44] sm:$0xff]
        %v579 = vld [vmem:[#allocation2 + $0x4c] sm:$0xff]
        %v580 = vld [vmem:[#allocation2 + $0x54] sm:$0xff]
        %v581 = vld [vmem:[#allocation2 + $0x5c] sm:$0xff]
        %v582 = vld [vmem:[#allocation2 + $0x64] sm:$0xff]
        %v583 = vld [vmem:[#allocation2 + $0x6c] sm:$0xff]
        %v584 = vld [vmem:[#allocation2 + $0x74] sm:$0xff]
        %v585 = vld [vmem:[#allocation2 + $0x7c] sm:$0xff]
        %v586 = vld [vmem:[#allocation2 + $0x5] sm:$0xff]
        %v587 = vld [vmem:[#allocation2 + $0xd] sm:$0xff]
        %v588 = vld [vmem:[#allocation2 + $0x15] sm:$0xff]
        %v589 = vld [vmem:[#allocation2 + $0x1d] sm:$0xff]
        %v590 = vld [vmem:[#allocation2 + $0x25] sm:$0xff]
        %v591 = vld [vmem:[#allocation2 + $0x2d] sm:$0xff]
        %v592 = vld [vmem:[#allocation2 + $0x35] sm:$0xff]
        %v593 = vld [vmem:[#allocation2 + $0x3d] sm:$0xff]
        %v594 = vld [vmem:[#allocation2 + $0x45] sm:$0xff]
        %v595 = vld [vmem:[#allocation2 + $0x4d] sm:$0xff]
        %v596 = vld [vmem:[#allocation2 + $0x55] sm:$0xff]
        %v597 = vld [vmem:[#allocation2 + $0x5d] sm:$0xff]
        %v598 = vld [vmem:[#allocation2 + $0x65] sm:$0xff]
        %v599 = vld [vmem:[#allocation2 + $0x6d] sm:$0xff]
        %v600 = vld [vmem:[#allocation2 + $0x75] sm:$0xff]
        %v601 = vld [vmem:[#allocation2 + $0x7d] sm:$0xff]
        %v602 = vld [vmem:[#allocation2 + $0x6] sm:$0xff]
        %v603 = vld [vmem:[#allocation2 + $0xe] sm:$0xff]
        %v604 = vld [vmem:[#allocation2 + $0x16] sm:$0xff]
        %v605 = vld [vmem:[#allocation2 + $0x1e] sm:$0xff]
        %v606 = vld [vmem:[#allocation2 + $0x26] sm:$0xff]
        %v607 = vld [vmem:[#allocation2 + $0x2e] sm:$0xff]
        %v608 = vld [vmem:[#allocation2 + $0x36] sm:$0xff]
        %v609 = vld [vmem:[#allocation2 + $0x3e] sm:$0xff]
        %v610 = vld [vmem:[#allocation2 + $0x46] sm:$0xff]
        %v611 = vld [vmem:[#allocation2 + $0x4e] sm:$0xff]
        %v612 = vld [vmem:[#allocation2 + $0x56] sm:$0xff]
        %v613 = vld [vmem:[#allocation2 + $0x5e] sm:$0xff]
        %v614 = vld [vmem:[#allocation2 + $0x66] sm:$0xff]
        %v615 = vld [vmem:[#allocation2 + $0x6e] sm:$0xff]
        %v616 = vld [vmem:[#allocation2 + $0x76] sm:$0xff]
        %v617 = vld [vmem:[#allocation2 + $0x7e] sm:$0xff]
        %v618 = vld [vmem:[#allocation2 + $0x7] sm:$0xff]
        %v619 = vld [vmem:[#allocation2 + $0xf] sm:$0xff]
        %v620 = vld [vmem:[#allocation2 + $0x17] sm:$0xff]
        %v621 = vld [vmem:[#allocation2 + $0x1f] sm:$0xff]
        %v622 = vld [vmem:[#allocation2 + $0x27] sm:$0xff]
        %v623 = vld [vmem:[#allocation2 + $0x2f] sm:$0xff]
        %v624 = vld [vmem:[#allocation2 + $0x37] sm:$0xff]
        %v625 = vld [vmem:[#allocation2 + $0x3f] sm:$0xff]
        %v626 = vld [vmem:[#allocation2 + $0x47] sm:$0xff]
        %v627 = vld [vmem:[#allocation2 + $0x4f] sm:$0xff]
        %v628 = vld [vmem:[#allocation2 + $0x57] sm:$0xff]
        %v629 = vld [vmem:[#allocation2 + $0x5f] sm:$0xff]
        %v630 = vld [vmem:[#allocation2 + $0x67] sm:$0xff]
        %v631 = vld [vmem:[#allocation2 + $0x6f] sm:$0xff]
        %v632 = vld [vmem:[#allocation2 + $0x77] sm:$0xff]
        %v633 = vld [vmem:[#allocation2 + $0x7f] sm:$0xff]
        %v634 = vld [vmem:[#allocation2 + $0x8] sm:$0xff]
        %v635 = vld [vmem:[#allocation2 + $0x10] sm:$0xff]
        %v636 = vld [vmem:[#allocation2 + $0x18] sm:$0xff]
        %v637 = vld [vmem:[#allocation2 + $0x20] sm:$0xff]
        %v638 = vld [vmem:[#allocation2 + $0x28] sm:$0xff]
        %v639 = vld [vmem:[#allocation2 + $0x30] sm:$0xff]
        %v640 = vld [vmem:[#allocation2 + $0x38] sm:$0xff]
        %v641 = vld [vmem:[#allocation2 + $0x40] sm:$0xff]
        %v642 = vld [vmem:[#allocation2 + $0x48] sm:$0xff]
        %v643 = vld [vmem:[#allocation2 + $0x50] sm:$0xff]
        %v644 = vld [vmem:[#allocation2 + $0x58] sm:$0xff]
        %v645 = vld [vmem:[#allocation2 + $0x60] sm:$0xff]
        %v646 = vld [vmem:[#allocation2 + $0x68] sm:$0xff]
        %v647 = vld [vmem:[#allocation2 + $0x70] sm:$0xff]
        %v648 = vld [vmem:[#allocation2 + $0x78] sm:$0xff]
        %v649 = vld [vmem:[#allocation2 + $0x80] sm:$0xff]
        %v650 = vld [vmem:[#allocation2 + $0x81] sm:$0xff]
        %v651 = vld [vmem:[#allocation2 + $0x82] sm:$0xff]
        %v652 = vld [vmem:[#allocation2 + $0x83] sm:$0xff]
        %v653 = vld [vmem:[#allocation2 + $0x84] sm:$0xff]
        %v654 = vld [vmem:[#allocation2 + $0x85] sm:$0xff]
        %v655 = vld [vmem:[#allocation2 + $0x86] sm:$0xff]
        %v656 = vld [vmem:[#allocation2 + $0x87] sm:$0xff]
        %v657 = vld [vmem:[#allocation2 + $0x88] sm:$0xff]
        %674 = vrot.lane.b32.xlu0 %v538, 8
        %v675 = vpop.permute.xlu0 %674
        %676 = vrot.lane.b32.xlu0 %v539, 8
        %v677 = vpop.permute.xlu0 %676
        %678 = vrot.lane.b32.xlu0 %v540, 8
        %v679 = vpop.permute.xlu0 %678
        %680 = vrot.lane.b32.xlu0 %v541, 8
        %v681 = vpop.permute.xlu0 %680
        %682 = vrot.lane.b32.xlu0 %v542, 8
        %v683 = vpop.permute.xlu0 %682
        %684 = vrot.lane.b32.xlu0 %v543, 8
        %v685 = vpop.permute.xlu0 %684
        %686 = vrot.lane.b32.xlu0 %v544, 8
        %v687 = vpop.permute.xlu0 %686
        %688 = vrot.lane.b32.xlu0 %v545, 8
        %v689 = vpop.permute.xlu0 %688
        %690 = vrot.lane.b32.xlu0 %v546, 8
        %v691 = vpop.permute.xlu0 %690
        %692 = vrot.lane.b32.xlu0 %v547, 8
        %v693 = vpop.permute.xlu0 %692
        %694 = vrot.lane.b32.xlu0 %v548, 8
        %v695 = vpop.permute.xlu0 %694
        %696 = vrot.lane.b32.xlu0 %v549, 8
        %v697 = vpop.permute.xlu0 %696
        %698 = vrot.lane.b32.xlu0 %v550, 8
        %v699 = vpop.permute.xlu0 %698
        %700 = vrot.lane.b32.xlu0 %v551, 8
        %v701 = vpop.permute.xlu0 %700
        %702 = vrot.lane.b32.xlu0 %v552, 8
        %v703 = vpop.permute.xlu0 %702
        %704 = vrot.lane.b32.xlu0 %v553, 8
        %v705 = vpop.permute.xlu0 %704
        %738 = vrot.lane.b32.xlu0 %v554, 16
        %v739 = vpop.permute.xlu0 %738
        %740 = vrot.lane.b32.xlu0 %v555, 16
        %v741 = vpop.permute.xlu0 %740
        %742 = vrot.lane.b32.xlu0 %v556, 16
        %v743 = vpop.permute.xlu0 %742
        %744 = vrot.lane.b32.xlu0 %v557, 16
        %v745 = vpop.permute.xlu0 %744
        %746 = vrot.lane.b32.xlu0 %v558, 16
        %v747 = vpop.permute.xlu0 %746
        %748 = vrot.lane.b32.xlu0 %v559, 16
        %v749 = vpop.permute.xlu0 %748
        %750 = vrot.lane.b32.xlu0 %v560, 16
        %v751 = vpop.permute.xlu0 %750
        %752 = vrot.lane.b32.xlu0 %v561, 16
        %v753 = vpop.permute.xlu0 %752
        %754 = vrot.lane.b32.xlu0 %v562, 16
        %v755 = vpop.permute.xlu0 %754
        %756 = vrot.lane.b32.xlu0 %v563, 16
        %v757 = vpop.permute.xlu0 %756
        %758 = vrot.lane.b32.xlu0 %v564, 16
        %v759 = vpop.permute.xlu0 %758
        %760 = vrot.lane.b32.xlu0 %v565, 16
        %v761 = vpop.permute.xlu0 %760
        %762 = vrot.lane.b32.xlu0 %v566, 16
        %v763 = vpop.permute.xlu0 %762
        %764 = vrot.lane.b32.xlu0 %v567, 16
        %v765 = vpop.permute.xlu0 %764
        %766 = vrot.lane.b32.xlu0 %v568, 16
        %v767 = vpop.permute.xlu0 %766
        %768 = vrot.lane.b32.xlu0 %v569, 16
        %v769 = vpop.permute.xlu0 %768
        %802 = vrot.lane.b32.xlu0 %v570, 24
        %v803 = vpop.permute.xlu0 %802
        %804 = vrot.lane.b32.xlu0 %v571, 24
        %v805 = vpop.permute.xlu0 %804
        %806 = vrot.lane.b32.xlu0 %v572, 24
        %v807 = vpop.permute.xlu0 %806
        %808 = vrot.lane.b32.xlu0 %v573, 24
        %v809 = vpop.permute.xlu0 %808
        %810 = vrot.lane.b32.xlu0 %v574, 24
        %v811 = vpop.permute.xlu0 %810
        %812 = vrot.lane.b32.xlu0 %v575, 24
        %v813 = vpop.permute.xlu0 %812
        %814 = vrot.lane.b32.xlu0 %v576, 24
        %v815 = vpop.permute.xlu0 %814
        %816 = vrot.lane.b32.xlu0 %v577, 24
        %v817 = vpop.permute.xlu0 %816
        %818 = vrot.lane.b32.xlu0 %v578, 24
        %v819 = vpop.permute.xlu0 %818
        %820 = vrot.lane.b32.xlu0 %v579, 24
        %v821 = vpop.permute.xlu0 %820
        %822 = vrot.lane.b32.xlu0 %v580, 24
        %v823 = vpop.permute.xlu0 %822
        %824 = vrot.lane.b32.xlu0 %v581, 24
        %v825 = vpop.permute.xlu0 %824
        %826 = vrot.lane.b32.xlu0 %v582, 24
        %v827 = vpop.permute.xlu0 %826
        %828 = vrot.lane.b32.xlu0 %v583, 24
        %v829 = vpop.permute.xlu0 %828
        %830 = vrot.lane.b32.xlu0 %v584, 24
        %v831 = vpop.permute.xlu0 %830
        %832 = vrot.lane.b32.xlu0 %v585, 24
        %v833 = vpop.permute.xlu0 %832
        %866 = vrot.lane.b32.xlu0 %v586, 32
        %v867 = vpop.permute.xlu0 %866
        %868 = vrot.lane.b32.xlu0 %v587, 32
        %v869 = vpop.permute.xlu0 %868
        %870 = vrot.lane.b32.xlu0 %v588, 32
        %v871 = vpop.permute.xlu0 %870
        %872 = vrot.lane.b32.xlu0 %v589, 32
        %v873 = vpop.permute.xlu0 %872
        %874 = vrot.lane.b32.xlu0 %v590, 32
        %v875 = vpop.permute.xlu0 %874
        %876 = vrot.lane.b32.xlu0 %v591, 32
        %v877 = vpop.permute.xlu0 %876
        %878 = vrot.lane.b32.xlu0 %v592, 32
        %v879 = vpop.permute.xlu0 %878
        %880 = vrot.lane.b32.xlu0 %v593, 32
        %v881 = vpop.permute.xlu0 %880
        %882 = vrot.lane.b32.xlu0 %v594, 32
        %v883 = vpop.permute.xlu0 %882
        %884 = vrot.lane.b32.xlu0 %v595, 32
        %v885 = vpop.permute.xlu0 %884
        %886 = vrot.lane.b32.xlu0 %v596, 32
        %v887 = vpop.permute.xlu0 %886
        %888 = vrot.lane.b32.xlu0 %v597, 32
        %v889 = vpop.permute.xlu0 %888
        %890 = vrot.lane.b32.xlu0 %v598, 32
        %v891 = vpop.permute.xlu0 %890
        %892 = vrot.lane.b32.xlu0 %v599, 32
        %v893 = vpop.permute.xlu0 %892
        %894 = vrot.lane.b32.xlu0 %v600, 32
        %v895 = vpop.permute.xlu0 %894
        %896 = vrot.lane.b32.xlu0 %v601, 32
        %v897 = vpop.permute.xlu0 %896
        %930 = vrot.lane.b32.xlu0 %v602, 40
        %v931 = vpop.permute.xlu0 %930
        %932 = vrot.lane.b32.xlu0 %v603, 40
        %v933 = vpop.permute.xlu0 %932
        %934 = vrot.lane.b32.xlu0 %v604, 40
        %v935 = vpop.permute.xlu0 %934
        %936 = vrot.lane.b32.xlu0 %v605, 40
        %v937 = vpop.permute.xlu0 %936
        %938 = vrot.lane.b32.xlu0 %v606, 40
        %v939 = vpop.permute.xlu0 %938
        %940 = vrot.lane.b32.xlu0 %v607, 40
        %v941 = vpop.permute.xlu0 %940
        %942 = vrot.lane.b32.xlu0 %v608, 40
        %v943 = vpop.permute.xlu0 %942
        %944 = vrot.lane.b32.xlu0 %v609, 40
        %v945 = vpop.permute.xlu0 %944
        %946 = vrot.lane.b32.xlu0 %v610, 40
        %v947 = vpop.permute.xlu0 %946
        %948 = vrot.lane.b32.xlu0 %v611, 40
        %v949 = vpop.permute.xlu0 %948
        %950 = vrot.lane.b32.xlu0 %v612, 40
        %v951 = vpop.permute.xlu0 %950
        %952 = vrot.lane.b32.xlu0 %v613, 40
        %v953 = vpop.permute.xlu0 %952
        %954 = vrot.lane.b32.xlu0 %v614, 40
        %v955 = vpop.permute.xlu0 %954
        %956 = vrot.lane.b32.xlu0 %v615, 40
        %v957 = vpop.permute.xlu0 %956
        %958 = vrot.lane.b32.xlu0 %v616, 40
        %v959 = vpop.permute.xlu0 %958
        %960 = vrot.lane.b32.xlu0 %v617, 40
        %v961 = vpop.permute.xlu0 %960
        %994 = vrot.lane.b32.xlu0 %v618, 48
        %v995 = vpop.permute.xlu0 %994
        %996 = vrot.lane.b32.xlu0 %v619, 48
        %v997 = vpop.permute.xlu0 %996
        %998 = vrot.lane.b32.xlu0 %v620, 48
        %v999 = vpop.permute.xlu0 %998
        %1000 = vrot.lane.b32.xlu0 %v621, 48
        %v1001 = vpop.permute.xlu0 %1000
        %1002 = vrot.lane.b32.xlu0 %v622, 48
        %v1003 = vpop.permute.xlu0 %1002
        %1004 = vrot.lane.b32.xlu0 %v623, 48
        %v1005 = vpop.permute.xlu0 %1004
        %1006 = vrot.lane.b32.xlu0 %v624, 48
        %v1007 = vpop.permute.xlu0 %1006
        %1008 = vrot.lane.b32.xlu0 %v625, 48
        %v1009 = vpop.permute.xlu0 %1008
        %1010 = vrot.lane.b32.xlu0 %v626, 48
        %v1011 = vpop.permute.xlu0 %1010
        %1012 = vrot.lane.b32.xlu0 %v627, 48
        %v1013 = vpop.permute.xlu0 %1012
        %1014 = vrot.lane.b32.xlu0 %v628, 48
        %v1015 = vpop.permute.xlu0 %1014
        %1016 = vrot.lane.b32.xlu0 %v629, 48
        %v1017 = vpop.permute.xlu0 %1016
        %1018 = vrot.lane.b32.xlu0 %v630, 48
        %v1019 = vpop.permute.xlu0 %1018
        %1020 = vrot.lane.b32.xlu0 %v631, 48
        %v1021 = vpop.permute.xlu0 %1020
        %1022 = vrot.lane.b32.xlu0 %v632, 48
        %v1023 = vpop.permute.xlu0 %1022
        %1024 = vrot.lane.b32.xlu0 %v633, 48
        %v1025 = vpop.permute.xlu0 %1024
        %1058 = vrot.lane.b32.xlu0 %v634, 56
        %v1059 = vpop.permute.xlu0 %1058
        %1060 = vrot.lane.b32.xlu0 %v635, 56
        %v1061 = vpop.permute.xlu0 %1060
        %1062 = vrot.lane.b32.xlu0 %v636, 56
        %v1063 = vpop.permute.xlu0 %1062
        %1064 = vrot.lane.b32.xlu0 %v637, 56
        %v1065 = vpop.permute.xlu0 %1064
        %1066 = vrot.lane.b32.xlu0 %v638, 56
        %v1067 = vpop.permute.xlu0 %1066
        %1068 = vrot.lane.b32.xlu0 %v639, 56
        %v1069 = vpop.permute.xlu0 %1068
        %1070 = vrot.lane.b32.xlu0 %v640, 56
        %v1071 = vpop.permute.xlu0 %1070
        %1072 = vrot.lane.b32.xlu0 %v641, 56
        %v1073 = vpop.permute.xlu0 %1072
        %1074 = vrot.lane.b32.xlu0 %v642, 56
        %v1075 = vpop.permute.xlu0 %1074
        %1076 = vrot.lane.b32.xlu0 %v643, 56
        %v1077 = vpop.permute.xlu0 %1076
        %1078 = vrot.lane.b32.xlu0 %v644, 56
        %v1079 = vpop.permute.xlu0 %1078
        %1080 = vrot.lane.b32.xlu0 %v645, 56
        %v1081 = vpop.permute.xlu0 %1080
        %1082 = vrot.lane.b32.xlu0 %v646, 56
        %v1083 = vpop.permute.xlu0 %1082
        %1084 = vrot.lane.b32.xlu0 %v647, 56
        %v1085 = vpop.permute.xlu0 %1084
        %1086 = vrot.lane.b32.xlu0 %v648, 56
        %v1087 = vpop.permute.xlu0 %1086
        %1088 = vrot.lane.b32.xlu0 %v649, 56
        %v1089 = vpop.permute.xlu0 %1088
        %1122 = vrot.lane.b32.xlu0 %v523, 64
        %v1123 = vpop.permute.xlu0 %1122
        %1124 = vrot.lane.b32.xlu0 %v524, 64
        %v1125 = vpop.permute.xlu0 %1124
        %1126 = vrot.lane.b32.xlu0 %v525, 64
        %v1127 = vpop.permute.xlu0 %1126
        %1128 = vrot.lane.b32.xlu0 %v526, 64
        %v1129 = vpop.permute.xlu0 %1128
        %1130 = vrot.lane.b32.xlu0 %v527, 64
        %v1131 = vpop.permute.xlu0 %1130
        %1132 = vrot.lane.b32.xlu0 %v528, 64
        %v1133 = vpop.permute.xlu0 %1132
        %1134 = vrot.lane.b32.xlu0 %v529, 64
        %v1135 = vpop.permute.xlu0 %1134
        %1136 = vrot.lane.b32.xlu0 %v530, 64
        %v1137 = vpop.permute.xlu0 %1136
        %1138 = vrot.lane.b32.xlu0 %v531, 64
        %v1139 = vpop.permute.xlu0 %1138
        %1140 = vrot.lane.b32.xlu0 %v532, 64
        %v1141 = vpop.permute.xlu0 %1140
        %1142 = vrot.lane.b32.xlu0 %v533, 64
        %v1143 = vpop.permute.xlu0 %1142
        %1144 = vrot.lane.b32.xlu0 %v534, 64
        %v1145 = vpop.permute.xlu0 %1144
        %1146 = vrot.lane.b32.xlu0 %v535, 64
        %v1147 = vpop.permute.xlu0 %1146
        %1148 = vrot.lane.b32.xlu0 %v536, 64
        %v1149 = vpop.permute.xlu0 %1148
        %1150 = vrot.lane.b32.xlu0 %v537, 64
        %v1151 = vpop.permute.xlu0 %1150
        %1152 = vrot.lane.b32.xlu0 %v650, 64
        %v1153 = vpop.permute.xlu0 %1152
        %1171 = vrot.lane.b32.xlu0 %v539, 72
        %v1172 = vpop.permute.xlu0 %1171
        %1173 = vrot.lane.b32.xlu0 %v540, 72
        %v1174 = vpop.permute.xlu0 %1173
        %1175 = vrot.lane.b32.xlu0 %v541, 72
        %v1176 = vpop.permute.xlu0 %1175
        %1177 = vrot.lane.b32.xlu0 %v542, 72
        %v1178 = vpop.permute.xlu0 %1177
        %1179 = vrot.lane.b32.xlu0 %v543, 72
        %v1180 = vpop.permute.xlu0 %1179
        %1181 = vrot.lane.b32.xlu0 %v544, 72
        %v1182 = vpop.permute.xlu0 %1181
        %1183 = vrot.lane.b32.xlu0 %v545, 72
        %v1184 = vpop.permute.xlu0 %1183
        %1185 = vrot.lane.b32.xlu0 %v546, 72
        %v1186 = vpop.permute.xlu0 %1185
        %1187 = vrot.lane.b32.xlu0 %v547, 72
        %v1188 = vpop.permute.xlu0 %1187
        %1189 = vrot.lane.b32.xlu0 %v548, 72
        %v1190 = vpop.permute.xlu0 %1189
        %1191 = vrot.lane.b32.xlu0 %v549, 72
        %v1192 = vpop.permute.xlu0 %1191
        %1193 = vrot.lane.b32.xlu0 %v550, 72
        %v1194 = vpop.permute.xlu0 %1193
        %1195 = vrot.lane.b32.xlu0 %v551, 72
        %v1196 = vpop.permute.xlu0 %1195
        %1197 = vrot.lane.b32.xlu0 %v552, 72
        %v1198 = vpop.permute.xlu0 %1197
        %1199 = vrot.lane.b32.xlu0 %v553, 72
        %v1200 = vpop.permute.xlu0 %1199
        %1201 = vrot.lane.b32.xlu0 %v651, 72
        %v1202 = vpop.permute.xlu0 %1201
        %1220 = vrot.lane.b32.xlu0 %v555, 80
        %v1221 = vpop.permute.xlu0 %1220
        %1222 = vrot.lane.b32.xlu0 %v556, 80
        %v1223 = vpop.permute.xlu0 %1222
        %1224 = vrot.lane.b32.xlu0 %v557, 80
        %v1225 = vpop.permute.xlu0 %1224
        %1226 = vrot.lane.b32.xlu0 %v558, 80
        %v1227 = vpop.permute.xlu0 %1226
        %1228 = vrot.lane.b32.xlu0 %v559, 80
        %v1229 = vpop.permute.xlu0 %1228
        %1230 = vrot.lane.b32.xlu0 %v560, 80
        %v1231 = vpop.permute.xlu0 %1230
        %1232 = vrot.lane.b32.xlu0 %v561, 80
        %v1233 = vpop.permute.xlu0 %1232
        %1234 = vrot.lane.b32.xlu0 %v562, 80
        %v1235 = vpop.permute.xlu0 %1234
        %1236 = vrot.lane.b32.xlu0 %v563, 80
        %v1237 = vpop.permute.xlu0 %1236
        %1238 = vrot.lane.b32.xlu0 %v564, 80
        %v1239 = vpop.permute.xlu0 %1238
        %1240 = vrot.lane.b32.xlu0 %v565, 80
        %v1241 = vpop.permute.xlu0 %1240
        %1242 = vrot.lane.b32.xlu0 %v566, 80
        %v1243 = vpop.permute.xlu0 %1242
        %1244 = vrot.lane.b32.xlu0 %v567, 80
        %v1245 = vpop.permute.xlu0 %1244
        %1246 = vrot.lane.b32.xlu0 %v568, 80
        %v1247 = vpop.permute.xlu0 %1246
        %1248 = vrot.lane.b32.xlu0 %v569, 80
        %v1249 = vpop.permute.xlu0 %1248
        %1250 = vrot.lane.b32.xlu0 %v652, 80
        %v1251 = vpop.permute.xlu0 %1250
        %1269 = vrot.lane.b32.xlu0 %v571, 88
        %v1270 = vpop.permute.xlu0 %1269
        %1271 = vrot.lane.b32.xlu0 %v572, 88
        %v1272 = vpop.permute.xlu0 %1271
        %1273 = vrot.lane.b32.xlu0 %v573, 88
        %v1274 = vpop.permute.xlu0 %1273
        %1275 = vrot.lane.b32.xlu0 %v574, 88
        %v1276 = vpop.permute.xlu0 %1275
        %1277 = vrot.lane.b32.xlu0 %v575, 88
        %v1278 = vpop.permute.xlu0 %1277
        %1279 = vrot.lane.b32.xlu0 %v576, 88
        %v1280 = vpop.permute.xlu0 %1279
        %1281 = vrot.lane.b32.xlu0 %v577, 88
        %v1282 = vpop.permute.xlu0 %1281
        %1283 = vrot.lane.b32.xlu0 %v578, 88
        %v1284 = vpop.permute.xlu0 %1283
        %1285 = vrot.lane.b32.xlu0 %v579, 88
        %v1286 = vpop.permute.xlu0 %1285
        %1287 = vrot.lane.b32.xlu0 %v580, 88
        %v1288 = vpop.permute.xlu0 %1287
        %1289 = vrot.lane.b32.xlu0 %v581, 88
        %v1290 = vpop.permute.xlu0 %1289
        %1291 = vrot.lane.b32.xlu0 %v582, 88
        %v1292 = vpop.permute.xlu0 %1291
        %1293 = vrot.lane.b32.xlu0 %v583, 88
        %v1294 = vpop.permute.xlu0 %1293
        %1295 = vrot.lane.b32.xlu0 %v584, 88
        %v1296 = vpop.permute.xlu0 %1295
        %1297 = vrot.lane.b32.xlu0 %v585, 88
        %v1298 = vpop.permute.xlu0 %1297
        %1299 = vrot.lane.b32.xlu0 %v653, 88
        %v1300 = vpop.permute.xlu0 %1299
        %1318 = vrot.lane.b32.xlu0 %v587, 96
        %v1319 = vpop.permute.xlu0 %1318
        %1320 = vrot.lane.b32.xlu0 %v588, 96
        %v1321 = vpop.permute.xlu0 %1320
        %1322 = vrot.lane.b32.xlu0 %v589, 96
        %v1323 = vpop.permute.xlu0 %1322
        %1324 = vrot.lane.b32.xlu0 %v590, 96
        %v1325 = vpop.permute.xlu0 %1324
        %1326 = vrot.lane.b32.xlu0 %v591, 96
        %v1327 = vpop.permute.xlu0 %1326
        %1328 = vrot.lane.b32.xlu0 %v592, 96
        %v1329 = vpop.permute.xlu0 %1328
        %1330 = vrot.lane.b32.xlu0 %v593, 96
        %v1331 = vpop.permute.xlu0 %1330
        %1332 = vrot.lane.b32.xlu0 %v594, 96
        %v1333 = vpop.permute.xlu0 %1332
        %1334 = vrot.lane.b32.xlu0 %v595, 96
        %v1335 = vpop.permute.xlu0 %1334
        %1336 = vrot.lane.b32.xlu0 %v596, 96
        %v1337 = vpop.permute.xlu0 %1336
        %1338 = vrot.lane.b32.xlu0 %v597, 96
        %v1339 = vpop.permute.xlu0 %1338
        %1340 = vrot.lane.b32.xlu0 %v598, 96
        %v1341 = vpop.permute.xlu0 %1340
        %1342 = vrot.lane.b32.xlu0 %v599, 96
        %v1343 = vpop.permute.xlu0 %1342
        %1344 = vrot.lane.b32.xlu0 %v600, 96
        %v1345 = vpop.permute.xlu0 %1344
        %1346 = vrot.lane.b32.xlu0 %v601, 96
        %v1347 = vpop.permute.xlu0 %1346
        %1348 = vrot.lane.b32.xlu0 %v654, 96
        %v1349 = vpop.permute.xlu0 %1348
        %1367 = vrot.lane.b32.xlu0 %v603, 104
        %v1368 = vpop.permute.xlu0 %1367
        %1369 = vrot.lane.b32.xlu0 %v604, 104
        %v1370 = vpop.permute.xlu0 %1369
        %1371 = vrot.lane.b32.xlu0 %v605, 104
        %v1372 = vpop.permute.xlu0 %1371
        %1373 = vrot.lane.b32.xlu0 %v606, 104
        %v1374 = vpop.permute.xlu0 %1373
        %1375 = vrot.lane.b32.xlu0 %v607, 104
        %v1376 = vpop.permute.xlu0 %1375
        %1377 = vrot.lane.b32.xlu0 %v608, 104
        %v1378 = vpop.permute.xlu0 %1377
        %1379 = vrot.lane.b32.xlu0 %v609, 104
        %v1380 = vpop.permute.xlu0 %1379
        %1381 = vrot.lane.b32.xlu0 %v610, 104
        %v1382 = vpop.permute.xlu0 %1381
        %1383 = vrot.lane.b32.xlu0 %v611, 104
        %v1384 = vpop.permute.xlu0 %1383
        %1385 = vrot.lane.b32.xlu0 %v612, 104
        %v1386 = vpop.permute.xlu0 %1385
        %1387 = vrot.lane.b32.xlu0 %v613, 104
        %v1388 = vpop.permute.xlu0 %1387
        %1389 = vrot.lane.b32.xlu0 %v614, 104
        %v1390 = vpop.permute.xlu0 %1389
        %1391 = vrot.lane.b32.xlu0 %v615, 104
        %v1392 = vpop.permute.xlu0 %1391
        %1393 = vrot.lane.b32.xlu0 %v616, 104
        %v1394 = vpop.permute.xlu0 %1393
        %1395 = vrot.lane.b32.xlu0 %v617, 104
        %v1396 = vpop.permute.xlu0 %1395
        %1397 = vrot.lane.b32.xlu0 %v655, 104
        %v1398 = vpop.permute.xlu0 %1397
        %1416 = vrot.lane.b32.xlu0 %v619, 112
        %v1417 = vpop.permute.xlu0 %1416
        %1418 = vrot.lane.b32.xlu0 %v620, 112
        %v1419 = vpop.permute.xlu0 %1418
        %1420 = vrot.lane.b32.xlu0 %v621, 112
        %v1421 = vpop.permute.xlu0 %1420
        %1422 = vrot.lane.b32.xlu0 %v622, 112
        %v1423 = vpop.permute.xlu0 %1422
        %1424 = vrot.lane.b32.xlu0 %v623, 112
        %v1425 = vpop.permute.xlu0 %1424
        %1426 = vrot.lane.b32.xlu0 %v624, 112
        %v1427 = vpop.permute.xlu0 %1426
        %1428 = vrot.lane.b32.xlu0 %v625, 112
        %v1429 = vpop.permute.xlu0 %1428
        %1430 = vrot.lane.b32.xlu0 %v626, 112
        %v1431 = vpop.permute.xlu0 %1430
        %1432 = vrot.lane.b32.xlu0 %v627, 112
        %v1433 = vpop.permute.xlu0 %1432
        %1434 = vrot.lane.b32.xlu0 %v628, 112
        %v1435 = vpop.permute.xlu0 %1434
        %1436 = vrot.lane.b32.xlu0 %v629, 112
        %v1437 = vpop.permute.xlu0 %1436
        %1438 = vrot.lane.b32.xlu0 %v630, 112
        %v1439 = vpop.permute.xlu0 %1438
        %1440 = vrot.lane.b32.xlu0 %v631, 112
        %v1441 = vpop.permute.xlu0 %1440
        %1442 = vrot.lane.b32.xlu0 %v632, 112
        %v1443 = vpop.permute.xlu0 %1442
        %1444 = vrot.lane.b32.xlu0 %v633, 112
        %v1445 = vpop.permute.xlu0 %1444
        %1446 = vrot.lane.b32.xlu0 %v656, 112
        %v1447 = vpop.permute.xlu0 %1446
        %1465 = vrot.lane.b32.xlu0 %v635, 120
        %v1466 = vpop.permute.xlu0 %1465
        %1467 = vrot.lane.b32.xlu0 %v636, 120
        %v1468 = vpop.permute.xlu0 %1467
        %1469 = vrot.lane.b32.xlu0 %v637, 120
        %v1470 = vpop.permute.xlu0 %1469
        %1471 = vrot.lane.b32.xlu0 %v638, 120
        %v1472 = vpop.permute.xlu0 %1471
        %1473 = vrot.lane.b32.xlu0 %v639, 120
        %v1474 = vpop.permute.xlu0 %1473
        %1475 = vrot.lane.b32.xlu0 %v640, 120
        %v1476 = vpop.permute.xlu0 %1475
        %1477 = vrot.lane.b32.xlu0 %v641, 120
        %v1478 = vpop.permute.xlu0 %1477
        %1479 = vrot.lane.b32.xlu0 %v642, 120
        %v1480 = vpop.permute.xlu0 %1479
        %1481 = vrot.lane.b32.xlu0 %v643, 120
        %v1482 = vpop.permute.xlu0 %1481
        %1483 = vrot.lane.b32.xlu0 %v644, 120
        %v1484 = vpop.permute.xlu0 %1483
        %1485 = vrot.lane.b32.xlu0 %v645, 120
        %v1486 = vpop.permute.xlu0 %1485
        %1487 = vrot.lane.b32.xlu0 %v646, 120
        %v1488 = vpop.permute.xlu0 %1487
        %1489 = vrot.lane.b32.xlu0 %v647, 120
        %v1490 = vpop.permute.xlu0 %1489
        %1491 = vrot.lane.b32.xlu0 %v648, 120
        %v1492 = vpop.permute.xlu0 %1491
        %1493 = vrot.lane.b32.xlu0 %v649, 120
        %v1494 = vpop.permute.xlu0 %1493
        %1495 = vrot.lane.b32.xlu0 %v657, 120
        %v1496 = vpop.permute.xlu0 %1495
        %v1513 = vsel %vm439, %v522, %v675
        %v1514 = vsel %vm439, %v523, %v677
        %v1515 = vsel %vm439, %v524, %v679
        %v1516 = vsel %vm439, %v525, %v681
        %v1517 = vsel %vm439, %v526, %v683
        %v1518 = vsel %vm439, %v527, %v685
        %v1519 = vsel %vm439, %v528, %v687
        %v1520 = vsel %vm439, %v529, %v689
        %v1521 = vsel %vm439, %v530, %v691
        %v1522 = vsel %vm439, %v531, %v693
        %v1523 = vsel %vm439, %v532, %v695
        %v1524 = vsel %vm439, %v533, %v697
        %v1525 = vsel %vm439, %v534, %v699
        %v1526 = vsel %vm439, %v535, %v701
        %v1527 = vsel %vm439, %v536, %v703
        %v1528 = vsel %vm439, %v537, %v705
        %vm1529 = vcmask 130048
        %v1530 = vsel %vm1529, %v1513, %v739
        %v1531 = vsel %vm1529, %v1514, %v741
        %v1532 = vsel %vm1529, %v1515, %v743
        %v1533 = vsel %vm1529, %v1516, %v745
        %v1534 = vsel %vm1529, %v1517, %v747
        %v1535 = vsel %vm1529, %v1518, %v749
        %v1536 = vsel %vm1529, %v1519, %v751
        %v1537 = vsel %vm1529, %v1520, %v753
        %v1538 = vsel %vm1529, %v1521, %v755
        %v1539 = vsel %vm1529, %v1522, %v757
        %v1540 = vsel %vm1529, %v1523, %v759
        %v1541 = vsel %vm1529, %v1524, %v761
        %v1542 = vsel %vm1529, %v1525, %v763
        %v1543 = vsel %vm1529, %v1526, %v765
        %v1544 = vsel %vm1529, %v1527, %v767
        %v1545 = vsel %vm1529, %v1528, %v769
        %v1546 = vsel %vm477, %v1530, %v803
        %v1547 = vsel %vm477, %v1531, %v805
        %v1548 = vsel %vm477, %v1532, %v807
        %v1549 = vsel %vm477, %v1533, %v809
        %v1550 = vsel %vm477, %v1534, %v811
        %v1551 = vsel %vm477, %v1535, %v813
        %v1552 = vsel %vm477, %v1536, %v815
        %v1553 = vsel %vm477, %v1537, %v817
        %v1554 = vsel %vm477, %v1538, %v819
        %v1555 = vsel %vm477, %v1539, %v821
        %v1556 = vsel %vm477, %v1540, %v823
        %v1557 = vsel %vm477, %v1541, %v825
        %v1558 = vsel %vm477, %v1542, %v827
        %v1559 = vsel %vm477, %v1543, %v829
        %v1560 = vsel %vm477, %v1544, %v831
        %v1561 = vsel %vm477, %v1545, %v833
        %vm1562 = vcmask 261120
        %v1563 = vsel %vm1562, %v1546, %v867
        %v1564 = vsel %vm1562, %v1547, %v869
        %v1565 = vsel %vm1562, %v1548, %v871
        %v1566 = vsel %vm1562, %v1549, %v873
        %v1567 = vsel %vm1562, %v1550, %v875
        %v1568 = vsel %vm1562, %v1551, %v877
        %v1569 = vsel %vm1562, %v1552, %v879
        %v1570 = vsel %vm1562, %v1553, %v881
        %v1571 = vsel %vm1562, %v1554, %v883
        %v1572 = vsel %vm1562, %v1555, %v885
        %v1573 = vsel %vm1562, %v1556, %v887
        %v1574 = vsel %vm1562, %v1557, %v889
        %v1575 = vsel %vm1562, %v1558, %v891
        %v1576 = vsel %vm1562, %v1559, %v893
        %v1577 = vsel %vm1562, %v1560, %v895
        %v1578 = vsel %vm1562, %v1561, %v897
        %vm1579 = vcmask 326656
        %v1580 = vsel %vm1579, %v1563, %v931
        %v1581 = vsel %vm1579, %v1564, %v933
        %v1582 = vsel %vm1579, %v1565, %v935
        %v1583 = vsel %vm1579, %v1566, %v937
        %v1584 = vsel %vm1579, %v1567, %v939
        %v1585 = vsel %vm1579, %v1568, %v941
        %v1586 = vsel %vm1579, %v1569, %v943
        %v1587 = vsel %vm1579, %v1570, %v945
        %v1588 = vsel %vm1579, %v1571, %v947
        %v1589 = vsel %vm1579, %v1572, %v949
        %v1590 = vsel %vm1579, %v1573, %v951
        %v1591 = vsel %vm1579, %v1574, %v953
        %v1592 = vsel %vm1579, %v1575, %v955
        %v1593 = vsel %vm1579, %v1576, %v957
        %v1594 = vsel %vm1579, %v1577, %v959
        %v1595 = vsel %vm1579, %v1578, %v961
        %v1596 = vsel %vm458, %v1580, %v995
        %v1597 = vsel %vm458, %v1581, %v997
        %v1598 = vsel %vm458, %v1582, %v999
        %v1599 = vsel %vm458, %v1583, %v1001
        %v1600 = vsel %vm458, %v1584, %v1003
        %v1601 = vsel %vm458, %v1585, %v1005
        %v1602 = vsel %vm458, %v1586, %v1007
        %v1603 = vsel %vm458, %v1587, %v1009
        %v1604 = vsel %vm458, %v1588, %v1011
        %v1605 = vsel %vm458, %v1589, %v1013
        %v1606 = vsel %vm458, %v1590, %v1015
        %v1607 = vsel %vm458, %v1591, %v1017
        %v1608 = vsel %vm458, %v1592, %v1019
        %v1609 = vsel %vm458, %v1593, %v1021
        %v1610 = vsel %vm458, %v1594, %v1023
        %v1611 = vsel %vm458, %v1595, %v1025
        %vm1612 = vcmask 457728
        %v1613 = vsel %vm1612, %v1596, %v1059
        %v1614 = vsel %vm1612, %v1597, %v1061
        %v1615 = vsel %vm1612, %v1598, %v1063
        %v1616 = vsel %vm1612, %v1599, %v1065
        %v1617 = vsel %vm1612, %v1600, %v1067
        %v1618 = vsel %vm1612, %v1601, %v1069
        %v1619 = vsel %vm1612, %v1602, %v1071
        %v1620 = vsel %vm1612, %v1603, %v1073
        %v1621 = vsel %vm1612, %v1604, %v1075
        %v1622 = vsel %vm1612, %v1605, %v1077
        %v1623 = vsel %vm1612, %v1606, %v1079
        %v1624 = vsel %vm1612, %v1607, %v1081
        %v1625 = vsel %vm1612, %v1608, %v1083
        %v1626 = vsel %vm1612, %v1609, %v1085
        %v1627 = vsel %vm1612, %v1610, %v1087
        %v1628 = vsel %vm1612, %v1611, %v1089
        %vm1629 = vcmask 523264
        %v1630 = vsel %vm1629, %v1613, %v1123
        %v1631 = vsel %vm1629, %v1614, %v1125
        %v1632 = vsel %vm1629, %v1615, %v1127
        %v1633 = vsel %vm1629, %v1616, %v1129
        %v1634 = vsel %vm1629, %v1617, %v1131
        %v1635 = vsel %vm1629, %v1618, %v1133
        %v1636 = vsel %vm1629, %v1619, %v1135
        %v1637 = vsel %vm1629, %v1620, %v1137
        %v1638 = vsel %vm1629, %v1621, %v1139
        %v1639 = vsel %vm1629, %v1622, %v1141
        %v1640 = vsel %vm1629, %v1623, %v1143
        %v1641 = vsel %vm1629, %v1624, %v1145
        %v1642 = vsel %vm1629, %v1625, %v1147
        %v1643 = vsel %vm1629, %v1626, %v1149
        %v1644 = vsel %vm1629, %v1627, %v1151
        %v1645 = vsel %vm1629, %v1628, %v1153
        %vm1646 = vcmask 588800
        %v1647 = vsel %vm1646, %v1630, %v1172
        %v1648 = vsel %vm1646, %v1631, %v1174
        %v1649 = vsel %vm1646, %v1632, %v1176
        %v1650 = vsel %vm1646, %v1633, %v1178
        %v1651 = vsel %vm1646, %v1634, %v1180
        %v1652 = vsel %vm1646, %v1635, %v1182
        %v1653 = vsel %vm1646, %v1636, %v1184
        %v1654 = vsel %vm1646, %v1637, %v1186
        %v1655 = vsel %vm1646, %v1638, %v1188
        %v1656 = vsel %vm1646, %v1639, %v1190
        %v1657 = vsel %vm1646, %v1640, %v1192
        %v1658 = vsel %vm1646, %v1641, %v1194
        %v1659 = vsel %vm1646, %v1642, %v1196
        %v1660 = vsel %vm1646, %v1643, %v1198
        %v1661 = vsel %vm1646, %v1644, %v1200
        %v1662 = vsel %vm1646, %v1645, %v1202
        %vm1663 = vcmask 654336
        %v1664 = vsel %vm1663, %v1647, %v1221
        %v1665 = vsel %vm1663, %v1648, %v1223
        %v1666 = vsel %vm1663, %v1649, %v1225
        %v1667 = vsel %vm1663, %v1650, %v1227
        %v1668 = vsel %vm1663, %v1651, %v1229
        %v1669 = vsel %vm1663, %v1652, %v1231
        %v1670 = vsel %vm1663, %v1653, %v1233
        %v1671 = vsel %vm1663, %v1654, %v1235
        %v1672 = vsel %vm1663, %v1655, %v1237
        %v1673 = vsel %vm1663, %v1656, %v1239
        %v1674 = vsel %vm1663, %v1657, %v1241
        %v1675 = vsel %vm1663, %v1658, %v1243
        %v1676 = vsel %vm1663, %v1659, %v1245
        %v1677 = vsel %vm1663, %v1660, %v1247
        %v1678 = vsel %vm1663, %v1661, %v1249
        %v1679 = vsel %vm1663, %v1662, %v1251
        %vm1680 = vcmask 719872
        %v1681 = vsel %vm1680, %v1664, %v1270
        %v1682 = vsel %vm1680, %v1665, %v1272
        %v1683 = vsel %vm1680, %v1666, %v1274
        %v1684 = vsel %vm1680, %v1667, %v1276
        %v1685 = vsel %vm1680, %v1668, %v1278
        %v1686 = vsel %vm1680, %v1669, %v1280
        %v1687 = vsel %vm1680, %v1670, %v1282
        %v1688 = vsel %vm1680, %v1671, %v1284
        %v1689 = vsel %vm1680, %v1672, %v1286
        %v1690 = vsel %vm1680, %v1673, %v1288
        %v1691 = vsel %vm1680, %v1674, %v1290
        %v1692 = vsel %vm1680, %v1675, %v1292
        %v1693 = vsel %vm1680, %v1676, %v1294
        %v1694 = vsel %vm1680, %v1677, %v1296
        %v1695 = vsel %vm1680, %v1678, %v1298
        %v1696 = vsel %vm1680, %v1679, %v1300
        %vm1697 = vcmask 785408
        %v1698 = vsel %vm1697, %v1681, %v1319
        %v1699 = vsel %vm1697, %v1682, %v1321
        %v1700 = vsel %vm1697, %v1683, %v1323
        %v1701 = vsel %vm1697, %v1684, %v1325
        %v1702 = vsel %vm1697, %v1685, %v1327
        %v1703 = vsel %vm1697, %v1686, %v1329
        %v1704 = vsel %vm1697, %v1687, %v1331
        %v1705 = vsel %vm1697, %v1688, %v1333
        %v1706 = vsel %vm1697, %v1689, %v1335
        %v1707 = vsel %vm1697, %v1690, %v1337
        %v1708 = vsel %vm1697, %v1691, %v1339
        %v1709 = vsel %vm1697, %v1692, %v1341
        %v1710 = vsel %vm1697, %v1693, %v1343
        %v1711 = vsel %vm1697, %v1694, %v1345
        %v1712 = vsel %vm1697, %v1695, %v1347
        %v1713 = vsel %vm1697, %v1696, %v1349
        %vm1714 = vcmask 850944
        %v1715 = vsel %vm1714, %v1698, %v1368
        %v1716 = vsel %vm1714, %v1699, %v1370
        %v1717 = vsel %vm1714, %v1700, %v1372
        %v1718 = vsel %vm1714, %v1701, %v1374
        %v1719 = vsel %vm1714, %v1702, %v1376
        %v1720 = vsel %vm1714, %v1703, %v1378
        %v1721 = vsel %vm1714, %v1704, %v1380
        %v1722 = vsel %vm1714, %v1705, %v1382
        %v1723 = vsel %vm1714, %v1706, %v1384
        %v1724 = vsel %vm1714, %v1707, %v1386
        %v1725 = vsel %vm1714, %v1708, %v1388
        %v1726 = vsel %vm1714, %v1709, %v1390
        %v1727 = vsel %vm1714, %v1710, %v1392
        %v1728 = vsel %vm1714, %v1711, %v1394
        %v1729 = vsel %vm1714, %v1712, %v1396
        %v1730 = vsel %vm1714, %v1713, %v1398
        %vm1731 = vcmask 916480
        %v1732 = vsel %vm1731, %v1715, %v1417
        %v1733 = vsel %vm1731, %v1716, %v1419
        %v1734 = vsel %vm1731, %v1717, %v1421
        %v1735 = vsel %vm1731, %v1718, %v1423
        %v1736 = vsel %vm1731, %v1719, %v1425
        %v1737 = vsel %vm1731, %v1720, %v1427
        %v1738 = vsel %vm1731, %v1721, %v1429
        %v1739 = vsel %vm1731, %v1722, %v1431
        %v1740 = vsel %vm1731, %v1723, %v1433
        %v1741 = vsel %vm1731, %v1724, %v1435
        %v1742 = vsel %vm1731, %v1725, %v1437
        %v1743 = vsel %vm1731, %v1726, %v1439
        %v1744 = vsel %vm1731, %v1727, %v1441
        %v1745 = vsel %vm1731, %v1728, %v1443
        %v1746 = vsel %vm1731, %v1729, %v1445
        %v1747 = vsel %vm1731, %v1730, %v1447
        %vm1748 = vcmask 982016
        %v1749 = vsel %vm1748, %v1732, %v1466
        %v1750 = vsel %vm1748, %v1733, %v1468
        %v1751 = vsel %vm1748, %v1734, %v1470
        %v1752 = vsel %vm1748, %v1735, %v1472
        %v1753 = vsel %vm1748, %v1736, %v1474
        %v1754 = vsel %vm1748, %v1737, %v1476
        %v1755 = vsel %vm1748, %v1738, %v1478
        %v1756 = vsel %vm1748, %v1739, %v1480
        %v1757 = vsel %vm1748, %v1740, %v1482
        %v1758 = vsel %vm1748, %v1741, %v1484
        %v1759 = vsel %vm1748, %v1742, %v1486
        %v1760 = vsel %vm1748, %v1743, %v1488
        %v1761 = vsel %vm1748, %v1744, %v1490
        %v1762 = vsel %vm1748, %v1745, %v1492
        %v1763 = vsel %vm1748, %v1746, %v1494
        %v1764 = vsel %vm1748, %v1747, %v1496
        %v1765 = vpack.c.bf16 %v1750, %v1749
        %v1766 = vpack.c.bf16 %v1752, %v1751
        %v1767 = vpack.c.bf16 %v1754, %v1753
        %v1768 = vpack.c.bf16 %v1756, %v1755
        %v1769 = vpack.c.bf16 %v1758, %v1757
        %v1770 = vpack.c.bf16 %v1760, %v1759
        %v1771 = vpack.c.bf16 %v1762, %v1761
        %v1772 = vpack.c.bf16 %v1764, %v1763
        %v1773 = vld [vmem:[%s1] sm:$0xff]
        %v1774 = vld [vmem:[%s1 + $0x8] sm:$0xff]
        %v1775 = vld [vmem:[%s1 + $0x10] sm:$0xff]
        %v1776 = vld [vmem:[%s1 + $0x18] sm:$0xff]
        %v1777 = vld [vmem:[%s1 + $0x20] sm:$0xff]
        %v1778 = vld [vmem:[%s1 + $0x28] sm:$0xff]
        %v1779 = vld [vmem:[%s1 + $0x30] sm:$0xff]
        %v1780 = vld [vmem:[%s1 + $0x38] sm:$0xff]
        %v1781 = vld [vmem:[%s1 + $0x40] sm:$0xff]
        %v1782 = vld [vmem:[%s1 + $0x48] sm:$0xff]
        %v1783 = vld [vmem:[%s1 + $0x50] sm:$0xff]
        %v1784 = vld [vmem:[%s1 + $0x58] sm:$0xff]
        %v1785 = vld [vmem:[%s1 + $0x60] sm:$0xff]
        %v1786 = vld [vmem:[%s1 + $0x68] sm:$0xff]
        %v1787 = vld [vmem:[%s1 + $0x70] sm:$0xff]
        %v1788 = vld [vmem:[%s1 + $0x78] sm:$0xff]
        %v1805 = vunpack.c.l.b16 %v1773
        %v1806 = vunpack.c.h.b16 %v1773
        %v1807 = vunpack.c.l.b16 %v1774
        %v1808 = vunpack.c.h.b16 %v1774
        %v1809 = vunpack.c.l.b16 %v1775
        %v1810 = vunpack.c.h.b16 %v1775
        %v1811 = vunpack.c.l.b16 %v1776
        %v1812 = vunpack.c.h.b16 %v1776
        %v1813 = vunpack.c.l.b16 %v1777
        %v1814 = vunpack.c.h.b16 %v1777
        %v1815 = vunpack.c.l.b16 %v1778
        %v1816 = vunpack.c.h.b16 %v1778
        %v1817 = vunpack.c.l.b16 %v1779
        %v1818 = vunpack.c.h.b16 %v1779
        %v1819 = vunpack.c.l.b16 %v1780
        %v1820 = vunpack.c.h.b16 %v1780
        %v1821 = vunpack.c.l.b16 %v1781
        %v1822 = vunpack.c.h.b16 %v1781
        %v1823 = vunpack.c.l.b16 %v1782
        %v1824 = vunpack.c.h.b16 %v1782
        %v1825 = vunpack.c.l.b16 %v1783
        %v1826 = vunpack.c.h.b16 %v1783
        %v1827 = vunpack.c.l.b16 %v1784
        %v1828 = vunpack.c.h.b16 %v1784
        %v1829 = vunpack.c.l.b16 %v1785
        %v1830 = vunpack.c.h.b16 %v1785
        %v1831 = vunpack.c.l.b16 %v1786
        %v1832 = vunpack.c.h.b16 %v1786
        %v1833 = vunpack.c.l.b16 %v1787
        %v1834 = vunpack.c.h.b16 %v1787
        %v1835 = vunpack.c.l.b16 %v1788
        %v1836 = vunpack.c.h.b16 %v1788
        %v1837 = vpack.c.b16 %v1807, %v1805
        %v1838 = vpack.c.b16 %v1808, %v1806
        %v1839 = vpack.c.b16 %v1811, %v1809
        %v1840 = vpack.c.b16 %v1812, %v1810
        %v1841 = vpack.c.b16 %v1815, %v1813
        %v1842 = vpack.c.b16 %v1816, %v1814
        %v1843 = vpack.c.b16 %v1819, %v1817
        %v1844 = vpack.c.b16 %v1820, %v1818
        %v1845 = vpack.c.b16 %v1823, %v1821
        %v1846 = vpack.c.b16 %v1824, %v1822
        %v1847 = vpack.c.b16 %v1827, %v1825
        %v1848 = vpack.c.b16 %v1828, %v1826
        %v1849 = vpack.c.b16 %v1831, %v1829
        %v1850 = vpack.c.b16 %v1832, %v1830
        %v1851 = vpack.c.b16 %v1835, %v1833
        %v1852 = vpack.c.b16 %v1836, %v1834
        %1869 = vmatprep.subr.bf16.mxu0 %v1838
        %1870 = vmatpush1.bf16.msra.mxu0 %v1837
        %1871 = vmatprep.subr.bf16.mxu0 %v1840
        %1872 = vmatpush1.bf16.msra.mxu0 %v1839
        %1873 = vmatprep.subr.bf16.mxu0 %v1842
        %1874 = vmatpush1.bf16.msra.mxu0 %v1841
        %1875 = vmatprep.subr.bf16.mxu0 %v1844
        %1876 = vmatpush1.bf16.msra.mxu0 %v1843
        %1877 = vmatprep.subr.bf16.mxu0 %v1846
        %1878 = vmatpush1.bf16.msra.mxu0 %v1845
        %1879 = vmatprep.subr.bf16.mxu0 %v1848
        %1880 = vmatpush1.bf16.msra.mxu0 %v1847
        %1881 = vmatprep.subr.bf16.mxu0 %v1850
        %1882 = vmatpush1.bf16.msra.mxu0 %v1849
        %1883 = vmatprep.subr.bf16.mxu0 %v1852
        %1884 = vmatpush1.bf16.msra.mxu0 %v1851
        %1885 = vmatprep.subr.bf16.mxu0 0
        %1886 = vmatpush1.bf16.msra.mxu0 0
        %1887 = vmatprep.subr.bf16.mxu0 0
        %1888 = vmatpush1.bf16.msra.mxu0 0
        %1889 = vmatprep.subr.bf16.mxu0 0
        %1890 = vmatpush1.bf16.msra.mxu0 0
        %1891 = vmatprep.subr.bf16.mxu0 0
        %1892 = vmatpush1.bf16.msra.mxu0 0
        %1893 = vmatprep.subr.bf16.mxu0 0
        %1894 = vmatpush1.bf16.msra.mxu0 0
        %1895 = vmatprep.subr.bf16.mxu0 0
        %1896 = vmatpush1.bf16.msra.mxu0 0
        %1897 = vmatprep.subr.bf16.mxu0 0
        %1898 = vmatpush1.bf16.msra.mxu0 0
        %1899 = vmatprep.subr.bf16.mxu0 0
        %1900 = vmatpush1.bf16.msra.mxu0 0
        %1901 = vmatprep.mubr.bf16.mxu0 0
        %1902 = vmatmul.mubr.bf16.gmra.mrb[0].mxu0 %v1765
        %v1903 = vpop.f32.mrb[0].mxu0
        %v1904 = vadd.f32 0.0, %v1903
        %v1905 = vpop.f32.mrb[0].mxu0
        %v1906 = vadd.f32 0.0, %v1905
        %v1907 = vpop.f32.mrb[0].mxu0
        %v1908 = vadd.f32 0.0, %v1907
        %v1909 = vpop.f32.mrb[0].mxu0
        %v1910 = vadd.f32 0.0, %v1909
        %1911 = vmatprep.mubr.bf16.mxu0 0
        %1912 = vmatmul.mubr.bf16.gmra.mrb[0].mxu0 %v1766
        %v1913 = vpop.f32.mrb[0].mxu0
        %v1914 = vadd.f32 0.0, %v1913
        %v1915 = vpop.f32.mrb[0].mxu0
        %v1916 = vadd.f32 0.0, %v1915
        %v1917 = vpop.f32.mrb[0].mxu0
        %v1918 = vadd.f32 0.0, %v1917
        %v1919 = vpop.f32.mrb[0].mxu0
        %v1920 = vadd.f32 0.0, %v1919
        %1921 = vmatprep.mubr.bf16.mxu0 0
        %1922 = vmatmul.mubr.bf16.gmra.mrb[0].mxu0 %v1767
        %v1923 = vpop.f32.mrb[0].mxu0
        %v1924 = vadd.f32 0.0, %v1923
        %v1925 = vpop.f32.mrb[0].mxu0
        %v1926 = vadd.f32 0.0, %v1925
        %v1927 = vpop.f32.mrb[0].mxu0
        %v1928 = vadd.f32 0.0, %v1927
        %v1929 = vpop.f32.mrb[0].mxu0
        %v1930 = vadd.f32 0.0, %v1929
        %1931 = vmatprep.mubr.bf16.mxu0 0
        %1932 = vmatmul.mubr.bf16.gmra.mrb[0].mxu0 %v1768
        %v1933 = vpop.f32.mrb[0].mxu0
        %v1934 = vadd.f32 0.0, %v1933
        %v1935 = vpop.f32.mrb[0].mxu0
        %v1936 = vadd.f32 0.0, %v1935
        %v1937 = vpop.f32.mrb[0].mxu0
        %v1938 = vadd.f32 0.0, %v1937
        %v1939 = vpop.f32.mrb[0].mxu0
        %v1940 = vadd.f32 0.0, %v1939
        %1941 = vmatprep.mubr.bf16.mxu0 0
        %1942 = vmatmul.mubr.bf16.gmra.mrb[0].mxu0 %v1769
        %v1943 = vpop.f32.mrb[0].mxu0
        %v1944 = vadd.f32 0.0, %v1943
        %v1945 = vpop.f32.mrb[0].mxu0
        %v1946 = vadd.f32 0.0, %v1945
        %v1947 = vpop.f32.mrb[0].mxu0
        %v1948 = vadd.f32 0.0, %v1947
        %v1949 = vpop.f32.mrb[0].mxu0
        %v1950 = vadd.f32 0.0, %v1949
        %1951 = vmatprep.mubr.bf16.mxu0 0
        %1952 = vmatmul.mubr.bf16.gmra.mrb[0].mxu0 %v1770
        %v1953 = vpop.f32.mrb[0].mxu0
        %v1954 = vadd.f32 0.0, %v1953
        %v1955 = vpop.f32.mrb[0].mxu0
        %v1956 = vadd.f32 0.0, %v1955
        %v1957 = vpop.f32.mrb[0].mxu0
        %v1958 = vadd.f32 0.0, %v1957
        %v1959 = vpop.f32.mrb[0].mxu0
        %v1960 = vadd.f32 0.0, %v1959
        %1961 = vmatprep.mubr.bf16.mxu0 0
        %1962 = vmatmul.mubr.bf16.gmra.mrb[0].mxu0 %v1771
        %v1963 = vpop.f32.mrb[0].mxu0
        %v1964 = vadd.f32 0.0, %v1963
        %v1965 = vpop.f32.mrb[0].mxu0
        %v1966 = vadd.f32 0.0, %v1965
        %v1967 = vpop.f32.mrb[0].mxu0
        %v1968 = vadd.f32 0.0, %v1967
        %v1969 = vpop.f32.mrb[0].mxu0
        %v1970 = vadd.f32 0.0, %v1969
        %1971 = vmatprep.mubr.bf16.mxu0 0
        %1972 = vmatmul.mubr.bf16.gmra.mrb[0].mxu0 %v1772
        %v1973 = vpop.f32.mrb[0].mxu0
        %v1974 = vadd.f32 0.0, %v1973
        %v1975 = vpop.f32.mrb[0].mxu0
        %v1976 = vadd.f32 0.0, %v1975
        %v1977 = vpop.f32.mrb[0].mxu0
        %v1978 = vadd.f32 0.0, %v1977
        %v1979 = vpop.f32.mrb[0].mxu0
        %v1980 = vadd.f32 0.0, %v1979
        %1981 = vdwg.mxu0
        %v1982 = vld [vmem:[%s2] ss:$2 sm:$0x3]
        %v1984 = vlaneseq
        %v1985 = vshrl.u32 %v1984, 7
        %v1986 = vsub.s32 0, %v1985
        %v1987 = vrot.slane %v1982, %v1986
        %v1988 = vlaneseq
        %v1989 = vshrl.u32 %v1988, 7
        %v1990 = vsub.s32 1, %v1989
        %v1991 = vrot.slane %v1982, %v1990
        %v1994 = vmul.f32 %v1904, %v1987
        %v1995 = vmul.f32 %v1906, %v1991
        %v1996 = vmul.f32 %v1908, %v1987
        %v1997 = vmul.f32 %v1910, %v1991
        %v1998 = vmul.f32 %v1914, %v1987
        %v1999 = vmul.f32 %v1916, %v1991
        %v2000 = vmul.f32 %v1918, %v1987
        %v2001 = vmul.f32 %v1920, %v1991
        %v2002 = vmul.f32 %v1924, %v1987
        %v2003 = vmul.f32 %v1926, %v1991
        %v2004 = vmul.f32 %v1928, %v1987
        %v2005 = vmul.f32 %v1930, %v1991
        %v2006 = vmul.f32 %v1934, %v1987
        %v2007 = vmul.f32 %v1936, %v1991
        %v2008 = vmul.f32 %v1938, %v1987
        %v2009 = vmul.f32 %v1940, %v1991
        %v2010 = vmul.f32 %v1944, %v1987
        %v2011 = vmul.f32 %v1946, %v1991
        %v2012 = vmul.f32 %v1948, %v1987
        %v2013 = vmul.f32 %v1950, %v1991
        %v2014 = vmul.f32 %v1954, %v1987
        %v2015 = vmul.f32 %v1956, %v1991
        %v2016 = vmul.f32 %v1958, %v1987
        %v2017 = vmul.f32 %v1960, %v1991
        %v2018 = vmul.f32 %v1964, %v1987
        %v2019 = vmul.f32 %v1966, %v1991
        %v2020 = vmul.f32 %v1968, %v1987
        %v2021 = vmul.f32 %v1970, %v1991
        %v2022 = vmul.f32 %v1974, %v1987
        %v2023 = vmul.f32 %v1976, %v1991
        %v2024 = vmul.f32 %v1978, %v1987
        %v2025 = vmul.f32 %v1980, %v1991
        %s2026 = scalar_lea.vmem %s2, 1
        %v2027 = vld [vmem:[%s2026] ss:$2 sm:$0x3]
        %v2029 = vlaneseq
        %v2030 = vshrl.u32 %v2029, 7
        %v2031 = vsub.s32 0, %v2030
        %v2032 = vrot.slane %v2027, %v2031
        %v2033 = vlaneseq
        %v2034 = vshrl.u32 %v2033, 7
        %v2035 = vsub.s32 1, %v2034
        %v2036 = vrot.slane %v2027, %v2035
        %v2039 = vadd.f32 %v1994, %v2032
        %v2040 = vadd.f32 %v1995, %v2036
        %v2041 = vadd.f32 %v1996, %v2032
        %v2042 = vadd.f32 %v1997, %v2036
        %v2043 = vadd.f32 %v1998, %v2032
        %v2044 = vadd.f32 %v1999, %v2036
        %v2045 = vadd.f32 %v2000, %v2032
        %v2046 = vadd.f32 %v2001, %v2036
        %v2047 = vadd.f32 %v2002, %v2032
        %v2048 = vadd.f32 %v2003, %v2036
        %v2049 = vadd.f32 %v2004, %v2032
        %v2050 = vadd.f32 %v2005, %v2036
        %v2051 = vadd.f32 %v2006, %v2032
        %v2052 = vadd.f32 %v2007, %v2036
        %v2053 = vadd.f32 %v2008, %v2032
        %v2054 = vadd.f32 %v2009, %v2036
        %v2055 = vadd.f32 %v2010, %v2032
        %v2056 = vadd.f32 %v2011, %v2036
        %v2057 = vadd.f32 %v2012, %v2032
        %v2058 = vadd.f32 %v2013, %v2036
        %v2059 = vadd.f32 %v2014, %v2032
        %v2060 = vadd.f32 %v2015, %v2036
        %v2061 = vadd.f32 %v2016, %v2032
        %v2062 = vadd.f32 %v2017, %v2036
        %v2063 = vadd.f32 %v2018, %v2032
        %v2064 = vadd.f32 %v2019, %v2036
        %v2065 = vadd.f32 %v2020, %v2032
        %v2066 = vadd.f32 %v2021, %v2036
        %v2067 = vadd.f32 %v2022, %v2032
        %v2068 = vadd.f32 %v2023, %v2036
        %v2069 = vadd.f32 %v2024, %v2032
        %v2070 = vadd.f32 %v2025, %v2036
        %vm2071 = vcmp.gt.f32.partialorder %v2039, 0.0
        %vm2072 = vcmp.gt.f32.partialorder %v2040, 0.0
        %vm2073 = vcmp.gt.f32.partialorder %v2041, 0.0
        %vm2074 = vcmp.gt.f32.partialorder %v2042, 0.0
        %vm2075 = vcmp.gt.f32.partialorder %v2043, 0.0
        %vm2076 = vcmp.gt.f32.partialorder %v2044, 0.0
        %vm2077 = vcmp.gt.f32.partialorder %v2045, 0.0
        %vm2078 = vcmp.gt.f32.partialorder %v2046, 0.0
        %vm2079 = vcmp.gt.f32.partialorder %v2047, 0.0
        %vm2080 = vcmp.gt.f32.partialorder %v2048, 0.0
        %vm2081 = vcmp.gt.f32.partialorder %v2049, 0.0
        %vm2082 = vcmp.gt.f32.partialorder %v2050, 0.0
        %vm2083 = vcmp.gt.f32.partialorder %v2051, 0.0
        %vm2084 = vcmp.gt.f32.partialorder %v2052, 0.0
        %vm2085 = vcmp.gt.f32.partialorder %v2053, 0.0
        %vm2086 = vcmp.gt.f32.partialorder %v2054, 0.0
        %vm2087 = vcmp.gt.f32.partialorder %v2055, 0.0
        %vm2088 = vcmp.gt.f32.partialorder %v2056, 0.0
        %vm2089 = vcmp.gt.f32.partialorder %v2057, 0.0
        %vm2090 = vcmp.gt.f32.partialorder %v2058, 0.0
        %vm2091 = vcmp.gt.f32.partialorder %v2059, 0.0
        %vm2092 = vcmp.gt.f32.partialorder %v2060, 0.0
        %vm2093 = vcmp.gt.f32.partialorder %v2061, 0.0
        %vm2094 = vcmp.gt.f32.partialorder %v2062, 0.0
        %vm2095 = vcmp.gt.f32.partialorder %v2063, 0.0
        %vm2096 = vcmp.gt.f32.partialorder %v2064, 0.0
        %vm2097 = vcmp.gt.f32.partialorder %v2065, 0.0
        %vm2098 = vcmp.gt.f32.partialorder %v2066, 0.0
        %vm2099 = vcmp.gt.f32.partialorder %v2067, 0.0
        %vm2100 = vcmp.gt.f32.partialorder %v2068, 0.0
        %vm2101 = vcmp.gt.f32.partialorder %v2069, 0.0
        %vm2102 = vcmp.gt.f32.partialorder %v2070, 0.0
        %v2103 = vmin.f32 %v2039, 0.0
        %v2104 = vmin.f32 %v2040, 0.0
        %v2105 = vmin.f32 %v2041, 0.0
        %v2106 = vmin.f32 %v2042, 0.0
        %v2107 = vmin.f32 %v2043, 0.0
        %v2108 = vmin.f32 %v2044, 0.0
        %v2109 = vmin.f32 %v2045, 0.0
        %v2110 = vmin.f32 %v2046, 0.0
        %v2111 = vmin.f32 %v2047, 0.0
        %v2112 = vmin.f32 %v2048, 0.0
        %v2113 = vmin.f32 %v2049, 0.0
        %v2114 = vmin.f32 %v2050, 0.0
        %v2115 = vmin.f32 %v2051, 0.0
        %v2116 = vmin.f32 %v2052, 0.0
        %v2117 = vmin.f32 %v2053, 0.0
        %v2118 = vmin.f32 %v2054, 0.0
        %v2119 = vmin.f32 %v2055, 0.0
        %v2120 = vmin.f32 %v2056, 0.0
        %v2121 = vmin.f32 %v2057, 0.0
        %v2122 = vmin.f32 %v2058, 0.0
        %v2123 = vmin.f32 %v2059, 0.0
        %v2124 = vmin.f32 %v2060, 0.0
        %v2125 = vmin.f32 %v2061, 0.0
        %v2126 = vmin.f32 %v2062, 0.0
        %v2127 = vmin.f32 %v2063, 0.0
        %v2128 = vmin.f32 %v2064, 0.0
        %v2129 = vmin.f32 %v2065, 0.0
        %v2130 = vmin.f32 %v2066, 0.0
        %v2131 = vmin.f32 %v2067, 0.0
        %v2132 = vmin.f32 %v2068, 0.0
        %v2133 = vmin.f32 %v2069, 0.0
        %v2134 = vmin.f32 %v2070, 0.0
        %v2135 = vmul.f32 %v2103, 1.442695
        %v2136 = vpow.pop %v2135
        %v2137 = vmul.f32 %v2104, 1.442695
        %v2138 = vpow.pop %v2137
        %v2139 = vmul.f32 %v2105, 1.442695
        %v2140 = vpow.pop %v2139
        %v2141 = vmul.f32 %v2106, 1.442695
        %v2142 = vpow.pop %v2141
        %v2143 = vmul.f32 %v2107, 1.442695
        %v2144 = vpow.pop %v2143
        %v2145 = vmul.f32 %v2108, 1.442695
        %v2146 = vpow.pop %v2145
        %v2147 = vmul.f32 %v2109, 1.442695
        %v2148 = vpow.pop %v2147
        %v2149 = vmul.f32 %v2110, 1.442695
        %v2150 = vpow.pop %v2149
        %v2151 = vmul.f32 %v2111, 1.442695
        %v2152 = vpow.pop %v2151
        %v2153 = vmul.f32 %v2112, 1.442695
        %v2154 = vpow.pop %v2153
        %v2155 = vmul.f32 %v2113, 1.442695
        %v2156 = vpow.pop %v2155
        %v2157 = vmul.f32 %v2114, 1.442695
        %v2158 = vpow.pop %v2157
        %v2159 = vmul.f32 %v2115, 1.442695
        %v2160 = vpow.pop %v2159
        %v2161 = vmul.f32 %v2116, 1.442695
        %v2162 = vpow.pop %v2161
        %v2163 = vmul.f32 %v2117, 1.442695
        %v2164 = vpow.pop %v2163
        %v2165 = vmul.f32 %v2118, 1.442695
        %v2166 = vpow.pop %v2165
        %v2167 = vmul.f32 %v2119, 1.442695
        %v2168 = vpow.pop %v2167
        %v2169 = vmul.f32 %v2120, 1.442695
        %v2170 = vpow.pop %v2169
        %v2171 = vmul.f32 %v2121, 1.442695
        %v2172 = vpow.pop %v2171
        %v2173 = vmul.f32 %v2122, 1.442695
        %v2174 = vpow.pop %v2173
        %v2175 = vmul.f32 %v2123, 1.442695
        %v2176 = vpow.pop %v2175
        %v2177 = vmul.f32 %v2124, 1.442695
        %v2178 = vpow.pop %v2177
        %v2179 = vmul.f32 %v2125, 1.442695
        %v2180 = vpow.pop %v2179
        %v2181 = vmul.f32 %v2126, 1.442695
        %v2182 = vpow.pop %v2181
        %v2183 = vmul.f32 %v2127, 1.442695
        %v2184 = vpow.pop %v2183
        %v2185 = vmul.f32 %v2128, 1.442695
        %v2186 = vpow.pop %v2185
        %v2187 = vmul.f32 %v2129, 1.442695
        %v2188 = vpow.pop %v2187
        %v2189 = vmul.f32 %v2130, 1.442695
        %v2190 = vpow.pop %v2189
        %v2191 = vmul.f32 %v2131, 1.442695
        %v2192 = vpow.pop %v2191
        %v2193 = vmul.f32 %v2132, 1.442695
        %v2194 = vpow.pop %v2193
        %v2195 = vmul.f32 %v2133, 1.442695
        %v2196 = vpow.pop %v2195
        %v2197 = vmul.f32 %v2134, 1.442695
        %v2198 = vpow.pop %v2197
        %v2199 = vsub.f32 %v2136, 1.0
        %v2200 = vsub.f32 %v2138, 1.0
        %v2201 = vsub.f32 %v2140, 1.0
        %v2202 = vsub.f32 %v2142, 1.0
        %v2203 = vsub.f32 %v2144, 1.0
        %v2204 = vsub.f32 %v2146, 1.0
        %v2205 = vsub.f32 %v2148, 1.0
        %v2206 = vsub.f32 %v2150, 1.0
        %v2207 = vsub.f32 %v2152, 1.0
        %v2208 = vsub.f32 %v2154, 1.0
        %v2209 = vsub.f32 %v2156, 1.0
        %v2210 = vsub.f32 %v2158, 1.0
        %v2211 = vsub.f32 %v2160, 1.0
        %v2212 = vsub.f32 %v2162, 1.0
        %v2213 = vsub.f32 %v2164, 1.0
        %v2214 = vsub.f32 %v2166, 1.0
        %v2215 = vsub.f32 %v2168, 1.0
        %v2216 = vsub.f32 %v2170, 1.0
        %v2217 = vsub.f32 %v2172, 1.0
        %v2218 = vsub.f32 %v2174, 1.0
        %v2219 = vsub.f32 %v2176, 1.0
        %v2220 = vsub.f32 %v2178, 1.0
        %v2221 = vsub.f32 %v2180, 1.0
        %v2222 = vsub.f32 %v2182, 1.0
        %v2223 = vsub.f32 %v2184, 1.0
        %v2224 = vsub.f32 %v2186, 1.0
        %v2225 = vsub.f32 %v2188, 1.0
        %v2226 = vsub.f32 %v2190, 1.0
        %v2227 = vsub.f32 %v2192, 1.0
        %v2228 = vsub.f32 %v2194, 1.0
        %v2229 = vsub.f32 %v2196, 1.0
        %v2230 = vsub.f32 %v2198, 1.0
        %v2231 = vsel %vm2071, %v2039, %v2199
        %v2232 = vsel %vm2072, %v2040, %v2200
        %v2233 = vsel %vm2073, %v2041, %v2201
        %v2234 = vsel %vm2074, %v2042, %v2202
        %v2235 = vsel %vm2075, %v2043, %v2203
        %v2236 = vsel %vm2076, %v2044, %v2204
        %v2237 = vsel %vm2077, %v2045, %v2205
        %v2238 = vsel %vm2078, %v2046, %v2206
        %v2239 = vsel %vm2079, %v2047, %v2207
        %v2240 = vsel %vm2080, %v2048, %v2208
        %v2241 = vsel %vm2081, %v2049, %v2209
        %v2242 = vsel %vm2082, %v2050, %v2210
        %v2243 = vsel %vm2083, %v2051, %v2211
        %v2244 = vsel %vm2084, %v2052, %v2212
        %v2245 = vsel %vm2085, %v2053, %v2213
        %v2246 = vsel %vm2086, %v2054, %v2214
        %v2247 = vsel %vm2087, %v2055, %v2215
        %v2248 = vsel %vm2088, %v2056, %v2216
        %v2249 = vsel %vm2089, %v2057, %v2217
        %v2250 = vsel %vm2090, %v2058, %v2218
        %v2251 = vsel %vm2091, %v2059, %v2219
        %v2252 = vsel %vm2092, %v2060, %v2220
        %v2253 = vsel %vm2093, %v2061, %v2221
        %v2254 = vsel %vm2094, %v2062, %v2222
        %v2255 = vsel %vm2095, %v2063, %v2223
        %v2256 = vsel %vm2096, %v2064, %v2224
        %v2257 = vsel %vm2097, %v2065, %v2225
        %v2258 = vsel %vm2098, %v2066, %v2226
        %v2259 = vsel %vm2099, %v2067, %v2227
        %v2260 = vsel %vm2100, %v2068, %v2228
        %v2261 = vsel %vm2101, %v2069, %v2229
        %v2262 = vsel %vm2102, %v2070, %v2230
        %v2263 = vpack.c.bf16 %v2233, %v2231
        %v2264 = vpack.c.bf16 %v2234, %v2232
        %v2265 = vpack.c.bf16 %v2237, %v2235
        %v2266 = vpack.c.bf16 %v2238, %v2236
        %v2267 = vpack.c.bf16 %v2241, %v2239
        %v2268 = vpack.c.bf16 %v2242, %v2240
        %v2269 = vpack.c.bf16 %v2245, %v2243
        %v2270 = vpack.c.bf16 %v2246, %v2244
        %v2271 = vpack.c.bf16 %v2249, %v2247
        %v2272 = vpack.c.bf16 %v2250, %v2248
        %v2273 = vpack.c.bf16 %v2253, %v2251
        %v2274 = vpack.c.bf16 %v2254, %v2252
        %v2275 = vpack.c.bf16 %v2257, %v2255
        %v2276 = vpack.c.bf16 %v2258, %v2256
        %v2277 = vpack.c.bf16 %v2261, %v2259
        %v2278 = vpack.c.bf16 %v2262, %v2260
        %v2279 = vld [vmem:[%s3] sm:$0xf]
        %v2280 = vld [vmem:[%s3 + $0x4] sm:$0xf]
        %v2281 = vld [vmem:[%s3 + $0x8] sm:$0xf]
        %v2282 = vld [vmem:[%s3 + $0xc] sm:$0xf]
        %v2283 = vld [vmem:[%s3 + $0x10] sm:$0xf]
        %v2284 = vld [vmem:[%s3 + $0x14] sm:$0xf]
        %v2285 = vld [vmem:[%s3 + $0x18] sm:$0xf]
        %v2286 = vld [vmem:[%s3 + $0x1c] sm:$0xf]
        %v2287 = vld [vmem:[%s3 + $0x20] sm:$0xf]
        %v2288 = vld [vmem:[%s3 + $0x24] sm:$0xf]
        %v2289 = vld [vmem:[%s3 + $0x28] sm:$0xf]
        %v2290 = vld [vmem:[%s3 + $0x2c] sm:$0xf]
        %v2291 = vld [vmem:[%s3 + $0x30] sm:$0xf]
        %v2292 = vld [vmem:[%s3 + $0x34] sm:$0xf]
        %v2293 = vld [vmem:[%s3 + $0x38] sm:$0xf]
        %v2294 = vld [vmem:[%s3 + $0x3c] sm:$0xf]
        %v2295 = vld [vmem:[%s3 + $0x40] sm:$0xf]
        %v2296 = vld [vmem:[%s3 + $0x44] sm:$0xf]
        %v2297 = vld [vmem:[%s3 + $0x48] sm:$0xf]
        %v2298 = vld [vmem:[%s3 + $0x4c] sm:$0xf]
        %v2299 = vld [vmem:[%s3 + $0x50] sm:$0xf]
        %v2300 = vld [vmem:[%s3 + $0x54] sm:$0xf]
        %v2301 = vld [vmem:[%s3 + $0x58] sm:$0xf]
        %v2302 = vld [vmem:[%s3 + $0x5c] sm:$0xf]
        %v2327 = vunpack.c.l.b16 %v2279
        %v2328 = vunpack.c.l.b16 %v2280
        %v2329 = vunpack.c.l.b16 %v2281
        %v2330 = vunpack.c.l.b16 %v2282
        %v2331 = vunpack.c.l.b16 %v2283
        %v2332 = vunpack.c.l.b16 %v2284
        %v2333 = vunpack.c.l.b16 %v2285
        %v2334 = vunpack.c.l.b16 %v2286
        %v2335 = vunpack.c.l.b16 %v2287
        %v2336 = vunpack.c.l.b16 %v2288
        %v2337 = vunpack.c.l.b16 %v2289
        %v2338 = vunpack.c.l.b16 %v2290
        %v2339 = vunpack.c.l.b16 %v2291
        %v2340 = vunpack.c.l.b16 %v2292
        %v2341 = vunpack.c.l.b16 %v2293
        %v2342 = vunpack.c.l.b16 %v2294
        %v2343 = vunpack.c.l.b16 %v2295
        %v2344 = vunpack.c.l.b16 %v2296
        %v2345 = vunpack.c.l.b16 %v2297
        %v2346 = vunpack.c.l.b16 %v2298
        %v2347 = vunpack.c.l.b16 %v2299
        %v2348 = vunpack.c.l.b16 %v2300
        %v2349 = vunpack.c.l.b16 %v2301
        %v2350 = vunpack.c.l.b16 %v2302
        %v2351 = vpack.c.b16 %v2328, %v2327
        %v2352 = vpack.c.b16 %v2330, %v2329
        %v2353 = vpack.c.b16 %v2332, %v2331
        %v2354 = vpack.c.b16 %v2334, %v2333
        %v2355 = vpack.c.b16 %v2336, %v2335
        %v2356 = vpack.c.b16 %v2338, %v2337
        %v2357 = vpack.c.b16 %v2340, %v2339
        %v2358 = vpack.c.b16 %v2342, %v2341
        %v2359 = vpack.c.b16 %v2344, %v2343
        %v2360 = vpack.c.b16 %v2346, %v2345
        %v2361 = vpack.c.b16 %v2348, %v2347
        %v2362 = vpack.c.b16 %v2350, %v2349
        %v2376 = vsel %vm1629, %v2264, 0
        %v2379 = vsel %vm1629, %v2266, 0
        %v2382 = vsel %vm1629, %v2268, 0
        %v2385 = vsel %vm1629, %v2270, 0
        %v2388 = vsel %vm1629, %v2272, 0
        %v2391 = vsel %vm1629, %v2274, 0
        %v2394 = vsel %vm1629, %v2276, 0
        %v2397 = vsel %vm1629, %v2278, 0
        %2399 = vmatprep.subr.bf16.mxu0 0
        %2400 = vmatpush1.bf16.msra.mxu0 %v2351
        %2401 = vmatprep.subr.bf16.mxu0 0
        %2402 = vmatpush1.bf16.msra.mxu0 %v2352
        %2403 = vmatprep.subr.bf16.mxu0 0
        %2404 = vmatpush1.bf16.msra.mxu0 %v2353
        %2405 = vmatprep.subr.bf16.mxu0 0
        %2406 = vmatpush1.bf16.msra.mxu0 %v2354
        %2407 = vmatprep.subr.bf16.mxu0 0
        %2408 = vmatpush1.bf16.msra.mxu0 %v2355
        %2409 = vmatprep.subr.bf16.mxu0 0
        %2410 = vmatpush1.bf16.msra.mxu0 %v2356
        %2411 = vmatprep.subr.bf16.mxu0 0
        %2412 = vmatpush1.bf16.msra.mxu0 %v2357
        %2413 = vmatprep.subr.bf16.mxu0 0
        %2414 = vmatpush1.bf16.msra.mxu0 %v2358
        %2415 = vmatprep.subr.bf16.mxu0 0
        %2416 = vmatpush1.bf16.msra.mxu0 %v2359
        %2417 = vmatprep.subr.bf16.mxu0 0
        %2418 = vmatpush1.bf16.msra.mxu0 %v2360
        %2419 = vmatprep.subr.bf16.mxu0 0
        %2420 = vmatpush1.bf16.msra.mxu0 %v2361
        %2421 = vmatprep.subr.bf16.mxu0 0
        %2422 = vmatpush1.bf16.msra.mxu0 %v2362
        %2423 = vmatprep.subr.bf16.mxu0 0
        %2424 = vmatpush1.bf16.msra.mxu0 0
        %2425 = vmatprep.subr.bf16.mxu0 0
        %2426 = vmatpush1.bf16.msra.mxu0 0
        %2427 = vmatprep.subr.bf16.mxu0 0
        %2428 = vmatpush1.bf16.msra.mxu0 0
        %2429 = vmatprep.subr.bf16.mxu0 0
        %2430 = vmatpush1.bf16.msra.mxu0 0
        %2431 = vmatprep.mubr.bf16.mxu0 %v2376
        %2432 = vmatmul.mubr.bf16.gmra.mrb[0].mxu0 %v2263
        %v2433 = vpop.f32.mrb[0].mxu0
        %v2434 = vadd.f32 0.0, %v2433
        %v2435 = vpop.f32.mrb[0].mxu0
        %v2436 = vpop.f32.mrb[0].mxu0
        %v2437 = vadd.f32 0.0, %v2436
        %v2438 = vpop.f32.mrb[0].mxu0
        %2439 = vmatprep.mubr.bf16.mxu0 %v2379
        %2440 = vmatmul.mubr.bf16.gmra.mrb[0].mxu0 %v2265
        %v2441 = vpop.f32.mrb[0].mxu0
        %v2442 = vadd.f32 0.0, %v2441
        %v2443 = vpop.f32.mrb[0].mxu0
        %v2444 = vpop.f32.mrb[0].mxu0
        %v2445 = vadd.f32 0.0, %v2444
        %v2446 = vpop.f32.mrb[0].mxu0
        %2447 = vmatprep.mubr.bf16.mxu0 %v2382
        %2448 = vmatmul.mubr.bf16.gmra.mrb[0].mxu0 %v2267
        %v2449 = vpop.f32.mrb[0].mxu0
        %v2450 = vadd.f32 0.0, %v2449
        %v2451 = vpop.f32.mrb[0].mxu0
        %v2452 = vpop.f32.mrb[0].mxu0
        %v2453 = vadd.f32 0.0, %v2452
        %v2454 = vpop.f32.mrb[0].mxu0
        %2455 = vmatprep.mubr.bf16.mxu0 %v2385
        %2456 = vmatmul.mubr.bf16.gmra.mrb[0].mxu0 %v2269
        %v2457 = vpop.f32.mrb[0].mxu0
        %v2458 = vadd.f32 0.0, %v2457
        %v2459 = vpop.f32.mrb[0].mxu0
        %v2460 = vpop.f32.mrb[0].mxu0
        %v2461 = vadd.f32 0.0, %v2460
        %v2462 = vpop.f32.mrb[0].mxu0
        %2463 = vmatprep.mubr.bf16.mxu0 %v2388
        %2464 = vmatmul.mubr.bf16.gmra.mrb[0].mxu0 %v2271
        %v2465 = vpop.f32.mrb[0].mxu0
        %v2466 = vadd.f32 0.0, %v2465
        %v2467 = vpop.f32.mrb[0].mxu0
        %v2468 = vpop.f32.mrb[0].mxu0
        %v2469 = vadd.f32 0.0, %v2468
        %v2470 = vpop.f32.mrb[0].mxu0
        %2471 = vmatprep.mubr.bf16.mxu0 %v2391
        %2472 = vmatmul.mubr.bf16.gmra.mrb[0].mxu0 %v2273
        %v2473 = vpop.f32.mrb[0].mxu0
        %v2474 = vadd.f32 0.0, %v2473
        %v2475 = vpop.f32.mrb[0].mxu0
        %v2476 = vpop.f32.mrb[0].mxu0
        %v2477 = vadd.f32 0.0, %v2476
        %v2478 = vpop.f32.mrb[0].mxu0
        %2479 = vmatprep.mubr.bf16.mxu0 %v2394
        %2480 = vmatmul.mubr.bf16.gmra.mrb[0].mxu0 %v2275
        %v2481 = vpop.f32.mrb[0].mxu0
        %v2482 = vadd.f32 0.0, %v2481
        %v2483 = vpop.f32.mrb[0].mxu0
        %v2484 = vpop.f32.mrb[0].mxu0
        %v2485 = vadd.f32 0.0, %v2484
        %v2486 = vpop.f32.mrb[0].mxu0
        %2487 = vmatprep.mubr.bf16.mxu0 %v2397
        %2488 = vmatmul.mubr.bf16.gmra.mrb[0].mxu0 %v2277
        %v2489 = vpop.f32.mrb[0].mxu0
        %v2490 = vadd.f32 0.0, %v2489
        %v2491 = vpop.f32.mrb[0].mxu0
        %v2492 = vpop.f32.mrb[0].mxu0
        %v2493 = vadd.f32 0.0, %v2492
        %v2494 = vpop.f32.mrb[0].mxu0
        %2495 = vdwg.mxu0
        %v2496 = vld [vmem:[%s4] sm:$0x1]
        %v2497 = vlaneseq
        %v2498 = vshrl.u32 %v2497, 7
        %v2499 = vsub.s32 0, %v2498
        %v2500 = vrot.slane %v2496, %v2499
        %v2501 = vmul.f32 %v2434, %v2500
        %v2502 = vmul.f32 %v2437, %v2500
        %v2503 = vmul.f32 %v2442, %v2500
        %v2504 = vmul.f32 %v2445, %v2500
        %v2505 = vmul.f32 %v2450, %v2500
        %v2506 = vmul.f32 %v2453, %v2500
        %v2507 = vmul.f32 %v2458, %v2500
        %v2508 = vmul.f32 %v2461, %v2500
        %v2509 = vmul.f32 %v2466, %v2500
        %v2510 = vmul.f32 %v2469, %v2500
        %v2511 = vmul.f32 %v2474, %v2500
        %v2512 = vmul.f32 %v2477, %v2500
        %v2513 = vmul.f32 %v2482, %v2500
        %v2514 = vmul.f32 %v2485, %v2500
        %v2515 = vmul.f32 %v2490, %v2500
        %v2516 = vmul.f32 %v2493, %v2500
        %v2517 = vld [vmem:[%s4 + $0x1] sm:$0x1]
        %v2518 = vlaneseq
        %v2519 = vshrl.u32 %v2518, 7
        %v2520 = vsub.s32 0, %v2519
        %v2521 = vrot.slane %v2517, %v2520
        %v2522 = vadd.f32 %v2501, %v2521
        %v2523 = vadd.f32 %v2502, %v2521
        %v2524 = vadd.f32 %v2503, %v2521
        %v2525 = vadd.f32 %v2504, %v2521
        %v2526 = vadd.f32 %v2505, %v2521
        %v2527 = vadd.f32 %v2506, %v2521
        %v2528 = vadd.f32 %v2507, %v2521
        %v2529 = vadd.f32 %v2508, %v2521
        %v2530 = vadd.f32 %v2509, %v2521
        %v2531 = vadd.f32 %v2510, %v2521
        %v2532 = vadd.f32 %v2511, %v2521
        %v2533 = vadd.f32 %v2512, %v2521
        %v2534 = vadd.f32 %v2513, %v2521
        %v2535 = vadd.f32 %v2514, %v2521
        %v2536 = vadd.f32 %v2515, %v2521
        %v2537 = vadd.f32 %v2516, %v2521
        %vm2538 = vcmp.gt.f32.partialorder %v2522, 0.0
        %vm2539 = vcmp.gt.f32.partialorder %v2523, 0.0
        %vm2540 = vcmp.gt.f32.partialorder %v2524, 0.0
        %vm2541 = vcmp.gt.f32.partialorder %v2525, 0.0
        %vm2542 = vcmp.gt.f32.partialorder %v2526, 0.0
        %vm2543 = vcmp.gt.f32.partialorder %v2527, 0.0
        %vm2544 = vcmp.gt.f32.partialorder %v2528, 0.0
        %vm2545 = vcmp.gt.f32.partialorder %v2529, 0.0
        %vm2546 = vcmp.gt.f32.partialorder %v2530, 0.0
        %vm2547 = vcmp.gt.f32.partialorder %v2531, 0.0
        %vm2548 = vcmp.gt.f32.partialorder %v2532, 0.0
        %vm2549 = vcmp.gt.f32.partialorder %v2533, 0.0
        %vm2550 = vcmp.gt.f32.partialorder %v2534, 0.0
        %vm2551 = vcmp.gt.f32.partialorder %v2535, 0.0
        %vm2552 = vcmp.gt.f32.partialorder %v2536, 0.0
        %vm2553 = vcmp.gt.f32.partialorder %v2537, 0.0
        %v2554 = vmin.f32 %v2522, 0.0
        %v2555 = vmin.f32 %v2523, 0.0
        %v2556 = vmin.f32 %v2524, 0.0
        %v2557 = vmin.f32 %v2525, 0.0
        %v2558 = vmin.f32 %v2526, 0.0
        %v2559 = vmin.f32 %v2527, 0.0
        %v2560 = vmin.f32 %v2528, 0.0
        %v2561 = vmin.f32 %v2529, 0.0
        %v2562 = vmin.f32 %v2530, 0.0
        %v2563 = vmin.f32 %v2531, 0.0
        %v2564 = vmin.f32 %v2532, 0.0
        %v2565 = vmin.f32 %v2533, 0.0
        %v2566 = vmin.f32 %v2534, 0.0
        %v2567 = vmin.f32 %v2535, 0.0
        %v2568 = vmin.f32 %v2536, 0.0
        %v2569 = vmin.f32 %v2537, 0.0
        %v2570 = vmul.f32 %v2554, 1.442695
        %v2571 = vpow.pop %v2570
        %v2572 = vmul.f32 %v2555, 1.442695
        %v2573 = vpow.pop %v2572
        %v2574 = vmul.f32 %v2556, 1.442695
        %v2575 = vpow.pop %v2574
        %v2576 = vmul.f32 %v2557, 1.442695
        %v2577 = vpow.pop %v2576
        %v2578 = vmul.f32 %v2558, 1.442695
        %v2579 = vpow.pop %v2578
        %v2580 = vmul.f32 %v2559, 1.442695
        %v2581 = vpow.pop %v2580
        %v2582 = vmul.f32 %v2560, 1.442695
        %v2583 = vpow.pop %v2582
        %v2584 = vmul.f32 %v2561, 1.442695
        %v2585 = vpow.pop %v2584
        %v2586 = vmul.f32 %v2562, 1.442695
        %v2587 = vpow.pop %v2586
        %v2588 = vmul.f32 %v2563, 1.442695
        %v2589 = vpow.pop %v2588
        %v2590 = vmul.f32 %v2564, 1.442695
        %v2591 = vpow.pop %v2590
        %v2592 = vmul.f32 %v2565, 1.442695
        %v2593 = vpow.pop %v2592
        %v2594 = vmul.f32 %v2566, 1.442695
        %v2595 = vpow.pop %v2594
        %v2596 = vmul.f32 %v2567, 1.442695
        %v2597 = vpow.pop %v2596
        %v2598 = vmul.f32 %v2568, 1.442695
        %v2599 = vpow.pop %v2598
        %v2600 = vmul.f32 %v2569, 1.442695
        %v2601 = vpow.pop %v2600
        %v2602 = vsub.f32 %v2571, 1.0
        %v2603 = vsub.f32 %v2573, 1.0
        %v2604 = vsub.f32 %v2575, 1.0
        %v2605 = vsub.f32 %v2577, 1.0
        %v2606 = vsub.f32 %v2579, 1.0
        %v2607 = vsub.f32 %v2581, 1.0
        %v2608 = vsub.f32 %v2583, 1.0
        %v2609 = vsub.f32 %v2585, 1.0
        %v2610 = vsub.f32 %v2587, 1.0
        %v2611 = vsub.f32 %v2589, 1.0
        %v2612 = vsub.f32 %v2591, 1.0
        %v2613 = vsub.f32 %v2593, 1.0
        %v2614 = vsub.f32 %v2595, 1.0
        %v2615 = vsub.f32 %v2597, 1.0
        %v2616 = vsub.f32 %v2599, 1.0
        %v2617 = vsub.f32 %v2601, 1.0
        %v2618 = vsel %vm2538, %v2522, %v2602
        %v2619 = vsel %vm2539, %v2523, %v2603
        %v2620 = vsel %vm2540, %v2524, %v2604
        %v2621 = vsel %vm2541, %v2525, %v2605
        %v2622 = vsel %vm2542, %v2526, %v2606
        %v2623 = vsel %vm2543, %v2527, %v2607
        %v2624 = vsel %vm2544, %v2528, %v2608
        %v2625 = vsel %vm2545, %v2529, %v2609
        %v2626 = vsel %vm2546, %v2530, %v2610
        %v2627 = vsel %vm2547, %v2531, %v2611
        %v2628 = vsel %vm2548, %v2532, %v2612
        %v2629 = vsel %vm2549, %v2533, %v2613
        %v2630 = vsel %vm2550, %v2534, %v2614
        %v2631 = vsel %vm2551, %v2535, %v2615
        %v2632 = vsel %vm2552, %v2536, %v2616
        %v2633 = vsel %vm2553, %v2537, %v2617
        %2634 = vst.msk [vmem:[#allocation3 + $0x8] sm:$0xff] %vm458, %v2618
        %2635 = vst.msk [vmem:[#allocation3 + $0x10] sm:$0xff] %vm458, %v2619
        %2636 = vst.msk [vmem:[#allocation3 + $0x18] sm:$0xff] %vm458, %v2620
        %2637 = vst.msk [vmem:[#allocation3 + $0x20] sm:$0xff] %vm458, %v2621
        %2638 = vst.msk [vmem:[#allocation3 + $0x28] sm:$0xff] %vm458, %v2622
        %2639 = vst.msk [vmem:[#allocation3 + $0x30] sm:$0xff] %vm458, %v2623
        %2640 = vst.msk [vmem:[#allocation3 + $0x38] sm:$0xff] %vm458, %v2624
        %2641 = vst.msk [vmem:[#allocation3 + $0x40] sm:$0xff] %vm458, %v2625
        %2642 = vst.msk [vmem:[#allocation3 + $0x48] sm:$0xff] %vm458, %v2626
        %2643 = vst.msk [vmem:[#allocation3 + $0x50] sm:$0xff] %vm458, %v2627
        %2644 = vst.msk [vmem:[#allocation3 + $0x58] sm:$0xff] %vm458, %v2628
        %2645 = vst.msk [vmem:[#allocation3 + $0x60] sm:$0xff] %vm458, %v2629
        %2646 = vst.msk [vmem:[#allocation3 + $0x68] sm:$0xff] %vm458, %v2630
        %2647 = vst.msk [vmem:[#allocation3 + $0x70] sm:$0xff] %vm458, %v2631
        %2648 = vst.msk [vmem:[#allocation3 + $0x78] sm:$0xff] %vm458, %v2632
        %2649 = vst.msk [vmem:[#allocation3 + $0x80] sm:$0xff] %vm458, %v2633
        %s2650 = scalar_lea.vmem [#allocation3], 4
        %v2651 = vld [vmem:[%s2650] ss:$4 sm:$0xff]
        %s2652 = scalar_lea.vmem [#allocation3], 36
        %v2653 = vld [vmem:[%s2652] ss:$4 sm:$0xff]
        %s2654 = scalar_lea.vmem [#allocation3], 68
        %v2655 = vld [vmem:[%s2654] ss:$4 sm:$0xff]
        %s2656 = scalar_lea.vmem [#allocation3], 100
        %v2657 = vld [vmem:[%s2656] ss:$4 sm:$0xff]
        %s2658 = scalar_lea.vmem [#allocation3], 5
        %v2659 = vld [vmem:[%s2658] ss:$4 sm:$0xff]
        %s2660 = scalar_lea.vmem [#allocation3], 37
        %v2661 = vld [vmem:[%s2660] ss:$4 sm:$0xff]
        %s2662 = scalar_lea.vmem [#allocation3], 69
        %v2663 = vld [vmem:[%s2662] ss:$4 sm:$0xff]
        %s2664 = scalar_lea.vmem [#allocation3], 101
        %v2665 = vld [vmem:[%s2664] ss:$4 sm:$0xff]
        %v2666 = vadd.f32 %v2651, %v2659
        %v2667 = vadd.f32 %v2653, %v2661
        %v2668 = vadd.f32 %v2655, %v2663
        %v2669 = vadd.f32 %v2657, %v2665
        %s2670 = scalar_lea.vmem [#allocation3], 6
        %v2671 = vld [vmem:[%s2670] ss:$4 sm:$0xff]
        %s2672 = scalar_lea.vmem [#allocation3], 38
        %v2673 = vld [vmem:[%s2672] ss:$4 sm:$0xff]
        %s2674 = scalar_lea.vmem [#allocation3], 70
        %v2675 = vld [vmem:[%s2674] ss:$4 sm:$0xff]
        %s2676 = scalar_lea.vmem [#allocation3], 102
        %v2677 = vld [vmem:[%s2676] ss:$4 sm:$0xff]
        %v2678 = vadd.f32 %v2666, %v2671
        %v2679 = vadd.f32 %v2667, %v2673
        %v2680 = vadd.f32 %v2668, %v2675
        %v2681 = vadd.f32 %v2669, %v2677
        %s2682 = scalar_lea.vmem [#allocation3], 7
        %v2683 = vld [vmem:[%s2682] ss:$4 sm:$0xff]
        %s2684 = scalar_lea.vmem [#allocation3], 39
        %v2685 = vld [vmem:[%s2684] ss:$4 sm:$0xff]
        %s2686 = scalar_lea.vmem [#allocation3], 71
        %v2687 = vld [vmem:[%s2686] ss:$4 sm:$0xff]
        %s2688 = scalar_lea.vmem [#allocation3], 103
        %v2689 = vld [vmem:[%s2688] ss:$4 sm:$0xff]
        %v2690 = vadd.f32 %v2678, %v2683
        %v2691 = vadd.f32 %v2679, %v2685
        %v2692 = vadd.f32 %v2680, %v2687
        %v2693 = vadd.f32 %v2681, %v2689
        %s2694 = scalar_lea.vmem [#allocation3], 8
        %v2695 = vld [vmem:[%s2694] ss:$4 sm:$0xff]
        %s2696 = scalar_lea.vmem [#allocation3], 40
        %v2697 = vld [vmem:[%s2696] ss:$4 sm:$0xff]
        %s2698 = scalar_lea.vmem [#allocation3], 72
        %v2699 = vld [vmem:[%s2698] ss:$4 sm:$0xff]
        %s2700 = scalar_lea.vmem [#allocation3], 104
        %v2701 = vld [vmem:[%s2700] ss:$4 sm:$0xff]
        %s2702 = scalar_lea.vmem [#allocation3], 9
        %v2703 = vld [vmem:[%s2702] ss:$4 sm:$0xff]
        %s2704 = scalar_lea.vmem [#allocation3], 41
        %v2705 = vld [vmem:[%s2704] ss:$4 sm:$0xff]
        %s2706 = scalar_lea.vmem [#allocation3], 73
        %v2707 = vld [vmem:[%s2706] ss:$4 sm:$0xff]
        %s2708 = scalar_lea.vmem [#allocation3], 105
        %v2709 = vld [vmem:[%s2708] ss:$4 sm:$0xff]
        %v2710 = vadd.f32 %v2695, %v2703
        %v2711 = vadd.f32 %v2697, %v2705
        %v2712 = vadd.f32 %v2699, %v2707
        %v2713 = vadd.f32 %v2701, %v2709
        %s2714 = scalar_lea.vmem [#allocation3], 10
        %v2715 = vld [vmem:[%s2714] ss:$4 sm:$0xff]
        %s2716 = scalar_lea.vmem [#allocation3], 42
        %v2717 = vld [vmem:[%s2716] ss:$4 sm:$0xff]
        %s2718 = scalar_lea.vmem [#allocation3], 74
        %v2719 = vld [vmem:[%s2718] ss:$4 sm:$0xff]
        %s2720 = scalar_lea.vmem [#allocation3], 106
        %v2721 = vld [vmem:[%s2720] ss:$4 sm:$0xff]
        %v2722 = vadd.f32 %v2710, %v2715
        %v2723 = vadd.f32 %v2711, %v2717
        %v2724 = vadd.f32 %v2712, %v2719
        %v2725 = vadd.f32 %v2713, %v2721
        %s2726 = scalar_lea.vmem [#allocation3], 11
        %v2727 = vld [vmem:[%s2726] ss:$4 sm:$0xff]
        %s2728 = scalar_lea.vmem [#allocation3], 43
        %v2729 = vld [vmem:[%s2728] ss:$4 sm:$0xff]
        %s2730 = scalar_lea.vmem [#allocation3], 75
        %v2731 = vld [vmem:[%s2730] ss:$4 sm:$0xff]
        %s2732 = scalar_lea.vmem [#allocation3], 107
        %v2733 = vld [vmem:[%s2732] ss:$4 sm:$0xff]
        %v2734 = vadd.f32 %v2722, %v2727
        %v2735 = vadd.f32 %v2723, %v2729
        %v2736 = vadd.f32 %v2724, %v2731
        %v2737 = vadd.f32 %v2725, %v2733
        %s2738 = scalar_lea.vmem [#allocation3], 12
        %v2739 = vld [vmem:[%s2738] ss:$4 sm:$0xff]
        %s2740 = scalar_lea.vmem [#allocation3], 44
        %v2741 = vld [vmem:[%s2740] ss:$4 sm:$0xff]
        %s2742 = scalar_lea.vmem [#allocation3], 76
        %v2743 = vld [vmem:[%s2742] ss:$4 sm:$0xff]
        %s2744 = scalar_lea.vmem [#allocation3], 108
        %v2745 = vld [vmem:[%s2744] ss:$4 sm:$0xff]
        %s2746 = scalar_lea.vmem [#allocation3], 13
        %v2747 = vld [vmem:[%s2746] ss:$4 sm:$0xff]
        %s2748 = scalar_lea.vmem [#allocation3], 45
        %v2749 = vld [vmem:[%s2748] ss:$4 sm:$0xff]
        %s2750 = scalar_lea.vmem [#allocation3], 77
        %v2751 = vld [vmem:[%s2750] ss:$4 sm:$0xff]
        %s2752 = scalar_lea.vmem [#allocation3], 109
        %v2753 = vld [vmem:[%s2752] ss:$4 sm:$0xff]
        %v2754 = vadd.f32 %v2739, %v2747
        %v2755 = vadd.f32 %v2741, %v2749
        %v2756 = vadd.f32 %v2743, %v2751
        %v2757 = vadd.f32 %v2745, %v2753
        %s2758 = scalar_lea.vmem [#allocation3], 14
        %v2759 = vld [vmem:[%s2758] ss:$4 sm:$0xff]
        %s2760 = scalar_lea.vmem [#allocation3], 46
        %v2761 = vld [vmem:[%s2760] ss:$4 sm:$0xff]
        %s2762 = scalar_lea.vmem [#allocation3], 78
        %v2763 = vld [vmem:[%s2762] ss:$4 sm:$0xff]
        %s2764 = scalar_lea.vmem [#allocation3], 110
        %v2765 = vld [vmem:[%s2764] ss:$4 sm:$0xff]
        %v2766 = vadd.f32 %v2754, %v2759
        %v2767 = vadd.f32 %v2755, %v2761
        %v2768 = vadd.f32 %v2756, %v2763
        %v2769 = vadd.f32 %v2757, %v2765
        %s2770 = scalar_lea.vmem [#allocation3], 15
        %v2771 = vld [vmem:[%s2770] ss:$4 sm:$0xff]
        %s2772 = scalar_lea.vmem [#allocation3], 47
        %v2773 = vld [vmem:[%s2772] ss:$4 sm:$0xff]
        %s2774 = scalar_lea.vmem [#allocation3], 79
        %v2775 = vld [vmem:[%s2774] ss:$4 sm:$0xff]
        %s2776 = scalar_lea.vmem [#allocation3], 111
        %v2777 = vld [vmem:[%s2776] ss:$4 sm:$0xff]
        %v2778 = vadd.f32 %v2766, %v2771
        %v2779 = vadd.f32 %v2767, %v2773
        %v2780 = vadd.f32 %v2768, %v2775
        %v2781 = vadd.f32 %v2769, %v2777
        %s2782 = scalar_lea.vmem [#allocation3], 16
        %v2783 = vld [vmem:[%s2782] ss:$4 sm:$0xff]
        %s2784 = scalar_lea.vmem [#allocation3], 48
        %v2785 = vld [vmem:[%s2784] ss:$4 sm:$0xff]
        %s2786 = scalar_lea.vmem [#allocation3], 80
        %v2787 = vld [vmem:[%s2786] ss:$4 sm:$0xff]
        %s2788 = scalar_lea.vmem [#allocation3], 112
        %v2789 = vld [vmem:[%s2788] ss:$4 sm:$0xff]
        %s2790 = scalar_lea.vmem [#allocation3], 17
        %v2791 = vld [vmem:[%s2790] ss:$4 sm:$0xff]
        %s2792 = scalar_lea.vmem [#allocation3], 49
        %v2793 = vld [vmem:[%s2792] ss:$4 sm:$0xff]
        %s2794 = scalar_lea.vmem [#allocation3], 81
        %v2795 = vld [vmem:[%s2794] ss:$4 sm:$0xff]
        %s2796 = scalar_lea.vmem [#allocation3], 113
        %v2797 = vld [vmem:[%s2796] ss:$4 sm:$0xff]
        %v2798 = vadd.f32 %v2783, %v2791
        %v2799 = vadd.f32 %v2785, %v2793
        %v2800 = vadd.f32 %v2787, %v2795
        %v2801 = vadd.f32 %v2789, %v2797
        %s2802 = scalar_lea.vmem [#allocation3], 18
        %v2803 = vld [vmem:[%s2802] ss:$4 sm:$0xff]
        %s2804 = scalar_lea.vmem [#allocation3], 50
        %v2805 = vld [vmem:[%s2804] ss:$4 sm:$0xff]
        %s2806 = scalar_lea.vmem [#allocation3], 82
        %v2807 = vld [vmem:[%s2806] ss:$4 sm:$0xff]
        %s2808 = scalar_lea.vmem [#allocation3], 114
        %v2809 = vld [vmem:[%s2808] ss:$4 sm:$0xff]
        %v2810 = vadd.f32 %v2798, %v2803
        %v2811 = vadd.f32 %v2799, %v2805
        %v2812 = vadd.f32 %v2800, %v2807
        %v2813 = vadd.f32 %v2801, %v2809
        %s2814 = scalar_lea.vmem [#allocation3], 19
        %v2815 = vld [vmem:[%s2814] ss:$4 sm:$0xff]
        %s2816 = scalar_lea.vmem [#allocation3], 51
        %v2817 = vld [vmem:[%s2816] ss:$4 sm:$0xff]
        %s2818 = scalar_lea.vmem [#allocation3], 83
        %v2819 = vld [vmem:[%s2818] ss:$4 sm:$0xff]
        %s2820 = scalar_lea.vmem [#allocation3], 115
        %v2821 = vld [vmem:[%s2820] ss:$4 sm:$0xff]
        %v2822 = vadd.f32 %v2810, %v2815
        %v2823 = vadd.f32 %v2811, %v2817
        %v2824 = vadd.f32 %v2812, %v2819
        %v2825 = vadd.f32 %v2813, %v2821
        %2830 = vrot.lane.b32.xlu0 %v2734, 48
        %v2831 = vpop.permute.xlu0 %2830
        %2832 = vrot.lane.b32.xlu0 %v2735, 48
        %v2833 = vpop.permute.xlu0 %2832
        %2834 = vrot.lane.b32.xlu0 %v2736, 48
        %v2835 = vpop.permute.xlu0 %2834
        %2836 = vrot.lane.b32.xlu0 %v2737, 48
        %v2837 = vpop.permute.xlu0 %2836
        %2846 = vrot.lane.b32.xlu0 %v2778, 96
        %v2847 = vpop.permute.xlu0 %2846
        %2848 = vrot.lane.b32.xlu0 %v2779, 96
        %v2849 = vpop.permute.xlu0 %2848
        %2850 = vrot.lane.b32.xlu0 %v2780, 96
        %v2851 = vpop.permute.xlu0 %2850
        %2852 = vrot.lane.b32.xlu0 %v2781, 96
        %v2853 = vpop.permute.xlu0 %2852
        %2862 = vrot.lane.b32.xlu0 %v2822, 16
        %v2863 = vpop.permute.xlu0 %2862
        %2864 = vrot.lane.b32.xlu0 %v2823, 16
        %v2865 = vpop.permute.xlu0 %2864
        %2866 = vrot.lane.b32.xlu0 %v2824, 16
        %v2867 = vpop.permute.xlu0 %2866
        %2868 = vrot.lane.b32.xlu0 %v2825, 16
        %v2869 = vpop.permute.xlu0 %2868
        %v2874 = vsel %vm458, %v2690, %v2831
        %v2875 = vsel %vm458, %v2691, %v2833
        %v2876 = vsel %vm458, %v2692, %v2835
        %v2877 = vsel %vm458, %v2693, %v2837
        %v2878 = vsel %vm1697, %v2874, %v2847
        %v2879 = vsel %vm1697, %v2875, %v2849
        %v2880 = vsel %vm1697, %v2876, %v2851
        %v2881 = vsel %vm1697, %v2877, %v2853
        %v2882 = vsel %vm1529, %v2847, %v2863
        %v2883 = vsel %vm1529, %v2849, %v2865
        %v2884 = vsel %vm1529, %v2851, %v2867
        %v2885 = vsel %vm1529, %v2853, %v2869
        %v2886 = vmul.f32 %v2878, 0.25
        %v2887 = vmul.f32 %v2882, 0.25
        %v2888 = vmul.f32 %v2879, 0.25
        %v2889 = vmul.f32 %v2883, 0.25
        %v2890 = vmul.f32 %v2880, 0.25
        %v2891 = vmul.f32 %v2884, 0.25
        %v2892 = vmul.f32 %v2881, 0.25
        %v2893 = vmul.f32 %v2885, 0.25
        %v2894 = vpack.c.bf16 %v2888, %v2886
        %v2895 = vpack.c.bf16 %v2889, %v2887
        %v2896 = vpack.c.bf16 %v2892, %v2890
        %v2897 = vpack.c.bf16 %v2893, %v2891
        %v2898 = vld [vmem:[%s5] sm:$0xf]
        %v2899 = vld [vmem:[%s5 + $0x4] sm:$0xf]
        %v2900 = vld [vmem:[%s5 + $0x8] sm:$0xf]
        %v2901 = vld [vmem:[%s5 + $0xc] sm:$0xf]
        %v2902 = vld [vmem:[%s5 + $0x10] sm:$0xf]
        %v2903 = vld [vmem:[%s5 + $0x14] sm:$0xf]
        %v2904 = vld [vmem:[%s5 + $0x18] sm:$0xf]
        %v2905 = vld [vmem:[%s5 + $0x1c] sm:$0xf]
        %v2906 = vld [vmem:[%s5 + $0x20] sm:$0xf]
        %v2907 = vld [vmem:[%s5 + $0x24] sm:$0xf]
        %v2908 = vld [vmem:[%s5 + $0x28] sm:$0xf]
        %v2909 = vld [vmem:[%s5 + $0x2c] sm:$0xf]
        %v2910 = vld [vmem:[%s5 + $0x30] sm:$0xf]
        %v2911 = vld [vmem:[%s5 + $0x34] sm:$0xf]
        %v2912 = vld [vmem:[%s5 + $0x38] sm:$0xf]
        %v2913 = vld [vmem:[%s5 + $0x3c] sm:$0xf]
        %v2914 = vld [vmem:[%s5 + $0x40] sm:$0xf]
        %v2915 = vld [vmem:[%s5 + $0x44] sm:$0xf]
        %v2916 = vld [vmem:[%s5 + $0x48] sm:$0xf]
        %v2917 = vld [vmem:[%s5 + $0x4c] sm:$0xf]
        %v2918 = vld [vmem:[%s5 + $0x50] sm:$0xf]
        %v2919 = vld [vmem:[%s5 + $0x54] sm:$0xf]
        %v2920 = vld [vmem:[%s5 + $0x58] sm:$0xf]
        %v2921 = vld [vmem:[%s5 + $0x5c] sm:$0xf]
        %v2946 = vunpack.c.l.b16 %v2898
        %v2947 = vunpack.c.l.b16 %v2899
        %v2948 = vunpack.c.l.b16 %v2900
        %v2949 = vunpack.c.l.b16 %v2901
        %v2950 = vunpack.c.l.b16 %v2902
        %v2951 = vunpack.c.l.b16 %v2903
        %v2952 = vunpack.c.l.b16 %v2904
        %v2953 = vunpack.c.l.b16 %v2905
        %v2954 = vunpack.c.l.b16 %v2906
        %v2955 = vunpack.c.l.b16 %v2907
        %v2956 = vunpack.c.l.b16 %v2908
        %v2957 = vunpack.c.l.b16 %v2909
        %v2958 = vunpack.c.l.b16 %v2910
        %v2959 = vunpack.c.l.b16 %v2911
        %v2960 = vunpack.c.l.b16 %v2912
        %v2961 = vunpack.c.l.b16 %v2913
        %v2962 = vunpack.c.l.b16 %v2914
        %v2963 = vunpack.c.l.b16 %v2915
        %v2964 = vunpack.c.l.b16 %v2916
        %v2965 = vunpack.c.l.b16 %v2917
        %v2966 = vunpack.c.l.b16 %v2918
        %v2967 = vunpack.c.l.b16 %v2919
        %v2968 = vunpack.c.l.b16 %v2920
        %v2969 = vunpack.c.l.b16 %v2921
        %v2970 = vpack.c.b16 %v2947, %v2946
        %v2971 = vpack.c.b16 %v2949, %v2948
        %v2972 = vpack.c.b16 %v2951, %v2950
        %v2973 = vpack.c.b16 %v2953, %v2952
        %v2974 = vpack.c.b16 %v2955, %v2954
        %v2975 = vpack.c.b16 %v2957, %v2956
        %v2976 = vpack.c.b16 %v2959, %v2958
        %v2977 = vpack.c.b16 %v2961, %v2960
        %v2978 = vpack.c.b16 %v2963, %v2962
        %v2979 = vpack.c.b16 %v2965, %v2964
        %v2980 = vpack.c.b16 %v2967, %v2966
        %v2981 = vpack.c.b16 %v2969, %v2968
        %v2995 = vsel %vm1629, %v2895, 0
        %v2998 = vsel %vm1629, %v2897, 0
        %3000 = vmatprep.subr.bf16.mxu0 0
        %3001 = vmatpush1.bf16.msra.mxu0 %v2970
        %3002 = vmatprep.subr.bf16.mxu0 0
        %3003 = vmatpush1.bf16.msra.mxu0 %v2971
        %3004 = vmatprep.subr.bf16.mxu0 0
        %3005 = vmatpush1.bf16.msra.mxu0 %v2972
        %3006 = vmatprep.subr.bf16.mxu0 0
        %3007 = vmatpush1.bf16.msra.mxu0 %v2973
        %3008 = vmatprep.subr.bf16.mxu0 0
        %3009 = vmatpush1.bf16.msra.mxu0 %v2974
        %3010 = vmatprep.subr.bf16.mxu0 0
        %3011 = vmatpush1.bf16.msra.mxu0 %v2975
        %3012 = vmatprep.subr.bf16.mxu0 0
        %3013 = vmatpush1.bf16.msra.mxu0 %v2976
        %3014 = vmatprep.subr.bf16.mxu0 0
        %3015 = vmatpush1.bf16.msra.mxu0 %v2977
        %3016 = vmatprep.subr.bf16.mxu0 0
        %3017 = vmatpush1.bf16.msra.mxu0 %v2978
        %3018 = vmatprep.subr.bf16.mxu0 0
        %3019 = vmatpush1.bf16.msra.mxu0 %v2979
        %3020 = vmatprep.subr.bf16.mxu0 0
        %3021 = vmatpush1.bf16.msra.mxu0 %v2980
        %3022 = vmatprep.subr.bf16.mxu0 0
        %3023 = vmatpush1.bf16.msra.mxu0 %v2981
        %3024 = vmatprep.subr.bf16.mxu0 0
        %3025 = vmatpush1.bf16.msra.mxu0 0
        %3026 = vmatprep.subr.bf16.mxu0 0
        %3027 = vmatpush1.bf16.msra.mxu0 0
        %3028 = vmatprep.subr.bf16.mxu0 0
        %3029 = vmatpush1.bf16.msra.mxu0 0
        %3030 = vmatprep.subr.bf16.mxu0 0
        %3031 = vmatpush1.bf16.msra.mxu0 0
        %3032 = vmatprep.mubr.bf16.mxu0 %v2995
        %3033 = vmatmul.mubr.bf16.gmra.mrb[0].mxu0 %v2894
        %v3034 = vpop.f32.mrb[0].mxu0
        %v3035 = vadd.f32 0.0, %v3034
        %v3036 = vpop.f32.mrb[0].mxu0
        %v3037 = vpop.f32.mrb[0].mxu0
        %v3038 = vadd.f32 0.0, %v3037
        %v3039 = vpop.f32.mrb[0].mxu0
        %3040 = vmatprep.mubr.bf16.mxu0 %v2998
        %3041 = vmatmul.mubr.bf16.gmra.mrb[0].mxu0 %v2896
        %v3042 = vpop.f32.mrb[0].mxu0
        %v3043 = vadd.f32 0.0, %v3042
        %v3044 = vpop.f32.mrb[0].mxu0
        %v3045 = vpop.f32.mrb[0].mxu0
        %v3046 = vadd.f32 0.0, %v3045
        %v3047 = vpop.f32.mrb[0].mxu0
        %3048 = vdwg.mxu0
        %v3049 = vld [vmem:[%s6] sm:$0x1]
        %v3050 = vlaneseq
        %v3051 = vshrl.u32 %v3050, 7
        %v3052 = vsub.s32 0, %v3051
        %v3053 = vrot.slane %v3049, %v3052
        %v3054 = vmul.f32 %v3035, %v3053
        %v3055 = vmul.f32 %v3038, %v3053
        %v3056 = vmul.f32 %v3043, %v3053
        %v3057 = vmul.f32 %v3046, %v3053
        %v3058 = vld [vmem:[%s6 + $0x1] sm:$0x1]
        %v3059 = vlaneseq
        %v3060 = vshrl.u32 %v3059, 7
        %v3061 = vsub.s32 0, %v3060
        %v3062 = vrot.slane %v3058, %v3061
        %v3063 = vadd.f32 %v3054, %v3062
        %v3064 = vadd.f32 %v3055, %v3062
        %v3065 = vadd.f32 %v3056, %v3062
        %v3066 = vadd.f32 %v3057, %v3062
        %vm3067 = vcmp.gt.f32.partialorder %v3063, 0.0
        %vm3068 = vcmp.gt.f32.partialorder %v3064, 0.0
        %vm3069 = vcmp.gt.f32.partialorder %v3065, 0.0
        %vm3070 = vcmp.gt.f32.partialorder %v3066, 0.0
        %v3071 = vmin.f32 %v3063, 0.0
        %v3072 = vmin.f32 %v3064, 0.0
        %v3073 = vmin.f32 %v3065, 0.0
        %v3074 = vmin.f32 %v3066, 0.0
        %v3075 = vmul.f32 %v3071, 1.442695
        %v3076 = vpow.pop %v3075
        %v3077 = vmul.f32 %v3072, 1.442695
        %v3078 = vpow.pop %v3077
        %v3079 = vmul.f32 %v3073, 1.442695
        %v3080 = vpow.pop %v3079
        %v3081 = vmul.f32 %v3074, 1.442695
        %v3082 = vpow.pop %v3081
        %v3083 = vsub.f32 %v3076, 1.0
        %v3084 = vsub.f32 %v3078, 1.0
        %v3085 = vsub.f32 %v3080, 1.0
        %v3086 = vsub.f32 %v3082, 1.0
        %v3087 = vsel %vm3067, %v3063, %v3083
        %v3088 = vsel %vm3068, %v3064, %v3084
        %v3089 = vsel %vm3069, %v3065, %v3085
        %v3090 = vsel %vm3070, %v3066, %v3086
        %3091 = vst.msk [vmem:[#allocation4 + $0x8] sm:$0xff] %vm477, %v3087
        %3092 = vst.msk [vmem:[#allocation4 + $0x10] sm:$0xff] %vm477, %v3088
        %3093 = vst.msk [vmem:[#allocation4 + $0x18] sm:$0xff] %vm477, %v3089
        %3094 = vst.msk [vmem:[#allocation4 + $0x20] sm:$0xff] %vm477, %v3090
        %s3095 = scalar_lea.vmem [#allocation4], 2
        %v3096 = vld [vmem:[%s3095] ss:$2 sm:$0xff]
        %s3097 = scalar_lea.vmem [#allocation4], 18
        %v3098 = vld [vmem:[%s3097] ss:$2 sm:$0xff]
        %s3099 = scalar_lea.vmem [#allocation4], 3
        %v3100 = vld [vmem:[%s3099] ss:$2 sm:$0xff]
        %s3101 = scalar_lea.vmem [#allocation4], 19
        %v3102 = vld [vmem:[%s3101] ss:$2 sm:$0xff]
        %v3103 = vadd.f32 %v3096, %v3100
        %v3104 = vadd.f32 %v3098, %v3102
        %s3105 = scalar_lea.vmem [#allocation4], 4
        %v3106 = vld [vmem:[%s3105] ss:$2 sm:$0xff]
        %s3107 = scalar_lea.vmem [#allocation4], 20
        %v3108 = vld [vmem:[%s3107] ss:$2 sm:$0xff]
        %s3109 = scalar_lea.vmem [#allocation4], 5
        %v3110 = vld [vmem:[%s3109] ss:$2 sm:$0xff]
        %s3111 = scalar_lea.vmem [#allocation4], 21
        %v3112 = vld [vmem:[%s3111] ss:$2 sm:$0xff]
        %v3113 = vadd.f32 %v3106, %v3110
        %v3114 = vadd.f32 %v3108, %v3112
        %s3115 = scalar_lea.vmem [#allocation4], 6
        %v3116 = vld [vmem:[%s3115] ss:$2 sm:$0xff]
        %s3117 = scalar_lea.vmem [#allocation4], 22
        %v3118 = vld [vmem:[%s3117] ss:$2 sm:$0xff]
        %s3119 = scalar_lea.vmem [#allocation4], 7
        %v3120 = vld [vmem:[%s3119] ss:$2 sm:$0xff]
        %s3121 = scalar_lea.vmem [#allocation4], 23
        %v3122 = vld [vmem:[%s3121] ss:$2 sm:$0xff]
        %v3123 = vadd.f32 %v3116, %v3120
        %v3124 = vadd.f32 %v3118, %v3122
        %s3125 = scalar_lea.vmem [#allocation4], 8
        %v3126 = vld [vmem:[%s3125] ss:$2 sm:$0xff]
        %s3127 = scalar_lea.vmem [#allocation4], 24
        %v3128 = vld [vmem:[%s3127] ss:$2 sm:$0xff]
        %s3129 = scalar_lea.vmem [#allocation4], 9
        %v3130 = vld [vmem:[%s3129] ss:$2 sm:$0xff]
        %s3131 = scalar_lea.vmem [#allocation4], 25
        %v3132 = vld [vmem:[%s3131] ss:$2 sm:$0xff]
        %v3133 = vadd.f32 %v3126, %v3130
        %v3134 = vadd.f32 %v3128, %v3132
        %s3135 = scalar_lea.vmem [#allocation4], 10
        %v3136 = vld [vmem:[%s3135] ss:$2 sm:$0xff]
        %s3137 = scalar_lea.vmem [#allocation4], 26
        %v3138 = vld [vmem:[%s3137] ss:$2 sm:$0xff]
        %s3139 = scalar_lea.vmem [#allocation4], 11
        %v3140 = vld [vmem:[%s3139] ss:$2 sm:$0xff]
        %s3141 = scalar_lea.vmem [#allocation4], 27
        %v3142 = vld [vmem:[%s3141] ss:$2 sm:$0xff]
        %v3143 = vadd.f32 %v3136, %v3140
        %v3144 = vadd.f32 %v3138, %v3142
        %s3145 = scalar_lea.vmem [#allocation4], 12
        %v3146 = vld [vmem:[%s3145] ss:$2 sm:$0xff]
        %s3147 = scalar_lea.vmem [#allocation4], 28
        %v3148 = vld [vmem:[%s3147] ss:$2 sm:$0xff]
        %s3149 = scalar_lea.vmem [#allocation4], 13
        %v3150 = vld [vmem:[%s3149] ss:$2 sm:$0xff]
        %s3151 = scalar_lea.vmem [#allocation4], 29
        %v3152 = vld [vmem:[%s3151] ss:$2 sm:$0xff]
        %v3153 = vadd.f32 %v3146, %v3150
        %v3154 = vadd.f32 %v3148, %v3152
        %s3155 = scalar_lea.vmem [#allocation4], 14
        %v3156 = vld [vmem:[%s3155] ss:$2 sm:$0xff]
        %s3157 = scalar_lea.vmem [#allocation4], 30
        %v3158 = vld [vmem:[%s3157] ss:$2 sm:$0xff]
        %s3159 = scalar_lea.vmem [#allocation4], 15
        %v3160 = vld [vmem:[%s3159] ss:$2 sm:$0xff]
        %s3161 = scalar_lea.vmem [#allocation4], 31
        %v3162 = vld [vmem:[%s3161] ss:$2 sm:$0xff]
        %v3163 = vadd.f32 %v3156, %v3160
        %v3164 = vadd.f32 %v3158, %v3162
        %s3165 = scalar_lea.vmem [#allocation4], 16
        %v3166 = vld [vmem:[%s3165] ss:$2 sm:$0xff]
        %s3167 = scalar_lea.vmem [#allocation4], 32
        %v3168 = vld [vmem:[%s3167] ss:$2 sm:$0xff]
        %s3169 = scalar_lea.vmem [#allocation4], 17
        %v3170 = vld [vmem:[%s3169] ss:$2 sm:$0xff]
        %s3171 = scalar_lea.vmem [#allocation4], 33
        %v3172 = vld [vmem:[%s3171] ss:$2 sm:$0xff]
        %v3173 = vadd.f32 %v3166, %v3170
        %v3174 = vadd.f32 %v3168, %v3172
        %3177 = vrot.lane.b32.xlu0 %v3113, 24
        %v3178 = vpop.permute.xlu0 %3177
        %3179 = vrot.lane.b32.xlu0 %v3114, 24
        %v3180 = vpop.permute.xlu0 %3179
        %3185 = vrot.lane.b32.xlu0 %v3123, 48
        %v3186 = vpop.permute.xlu0 %3185
        %3187 = vrot.lane.b32.xlu0 %v3124, 48
        %v3188 = vpop.permute.xlu0 %3187
        %3193 = vrot.lane.b32.xlu0 %v3133, 72
        %v3194 = vpop.permute.xlu0 %3193
        %3195 = vrot.lane.b32.xlu0 %v3134, 72
        %v3196 = vpop.permute.xlu0 %3195
        %3201 = vrot.lane.b32.xlu0 %v3143, 96
        %v3202 = vpop.permute.xlu0 %3201
        %3203 = vrot.lane.b32.xlu0 %v3144, 96
        %v3204 = vpop.permute.xlu0 %3203
        %3209 = vrot.lane.b32.xlu0 %v3153, 120
        %v3210 = vpop.permute.xlu0 %3209
        %3211 = vrot.lane.b32.xlu0 %v3154, 120
        %v3212 = vpop.permute.xlu0 %3211
        %3217 = vrot.lane.b32.xlu0 %v3163, 16
        %v3218 = vpop.permute.xlu0 %3217
        %3219 = vrot.lane.b32.xlu0 %v3164, 16
        %v3220 = vpop.permute.xlu0 %3219
        %3225 = vrot.lane.b32.xlu0 %v3173, 40
        %v3226 = vpop.permute.xlu0 %3225
        %3227 = vrot.lane.b32.xlu0 %v3174, 40
        %v3228 = vpop.permute.xlu0 %3227
        %v3231 = vsel %vm477, %v3103, %v3178
        %v3232 = vsel %vm477, %v3104, %v3180
        %v3233 = vsel %vm458, %v3231, %v3186
        %v3234 = vsel %vm458, %v3232, %v3188
        %v3235 = vsel %vm1646, %v3233, %v3194
        %v3236 = vsel %vm1646, %v3234, %v3196
        %v3237 = vsel %vm1697, %v3235, %v3202
        %v3238 = vsel %vm1697, %v3236, %v3204
        %v3239 = vsel %vm1748, %v3237, %v3210
        %v3240 = vsel %vm1748, %v3238, %v3212
        %v3241 = vsel %vm1529, %v3210, %v3218
        %v3242 = vsel %vm1529, %v3212, %v3220
        %v3243 = vsel %vm1579, %v3241, %v3226
        %v3244 = vsel %vm1579, %v3242, %v3228
        %v3245 = vmul.f32 %v3239, 0.5
        %v3246 = vmul.f32 %v3243, 0.5
        %v3247 = vmul.f32 %v3240, 0.5
        %v3248 = vmul.f32 %v3244, 0.5
        %v3249 = vpack.c.bf16 %v3247, %v3245
        %v3250 = vpack.c.bf16 %v3248, %v3246
        %v3251 = vld [vmem:[%s7] sm:$0xf]
        %v3252 = vld [vmem:[%s7 + $0x4] sm:$0xf]
        %v3253 = vld [vmem:[%s7 + $0x8] sm:$0xf]
        %v3254 = vld [vmem:[%s7 + $0xc] sm:$0xf]
        %v3255 = vld [vmem:[%s7 + $0x10] sm:$0xf]
        %v3256 = vld [vmem:[%s7 + $0x14] sm:$0xf]
        %v3257 = vld [vmem:[%s7 + $0x18] sm:$0xf]
        %v3258 = vld [vmem:[%s7 + $0x1c] sm:$0xf]
        %v3259 = vld [vmem:[%s7 + $0x20] sm:$0xf]
        %v3260 = vld [vmem:[%s7 + $0x24] sm:$0xf]
        %v3261 = vld [vmem:[%s7 + $0x28] sm:$0xf]
        %v3262 = vld [vmem:[%s7 + $0x2c] sm:$0xf]
        %v3263 = vld [vmem:[%s7 + $0x30] sm:$0xf]
        %v3264 = vld [vmem:[%s7 + $0x34] sm:$0xf]
        %v3265 = vld [vmem:[%s7 + $0x38] sm:$0xf]
        %v3266 = vld [vmem:[%s7 + $0x3c] sm:$0xf]
        %v3267 = vld [vmem:[%s7 + $0x40] sm:$0xf]
        %v3268 = vld [vmem:[%s7 + $0x44] sm:$0xf]
        %v3269 = vld [vmem:[%s7 + $0x48] sm:$0xf]
        %v3270 = vld [vmem:[%s7 + $0x4c] sm:$0xf]
        %v3271 = vld [vmem:[%s7 + $0x50] sm:$0xf]
        %v3272 = vld [vmem:[%s7 + $0x54] sm:$0xf]
        %v3273 = vld [vmem:[%s7 + $0x58] sm:$0xf]
        %v3274 = vld [vmem:[%s7 + $0x5c] sm:$0xf]
        %v3299 = vunpack.c.l.b16 %v3251
        %v3300 = vunpack.c.l.b16 %v3252
        %v3301 = vunpack.c.l.b16 %v3253
        %v3302 = vunpack.c.l.b16 %v3254
        %v3303 = vunpack.c.l.b16 %v3255
        %v3304 = vunpack.c.l.b16 %v3256
        %v3305 = vunpack.c.l.b16 %v3257
        %v3306 = vunpack.c.l.b16 %v3258
        %v3307 = vunpack.c.l.b16 %v3259
        %v3308 = vunpack.c.l.b16 %v3260
        %v3309 = vunpack.c.l.b16 %v3261
        %v3310 = vunpack.c.l.b16 %v3262
        %v3311 = vunpack.c.l.b16 %v3263
        %v3312 = vunpack.c.l.b16 %v3264
        %v3313 = vunpack.c.l.b16 %v3265
        %v3314 = vunpack.c.l.b16 %v3266
        %v3315 = vunpack.c.l.b16 %v3267
        %v3316 = vunpack.c.l.b16 %v3268
        %v3317 = vunpack.c.l.b16 %v3269
        %v3318 = vunpack.c.l.b16 %v3270
        %v3319 = vunpack.c.l.b16 %v3271
        %v3320 = vunpack.c.l.b16 %v3272
        %v3321 = vunpack.c.l.b16 %v3273
        %v3322 = vunpack.c.l.b16 %v3274
        %v3323 = vpack.c.b16 %v3300, %v3299
        %v3324 = vpack.c.b16 %v3302, %v3301
        %v3325 = vpack.c.b16 %v3304, %v3303
        %v3326 = vpack.c.b16 %v3306, %v3305
        %v3327 = vpack.c.b16 %v3308, %v3307
        %v3328 = vpack.c.b16 %v3310, %v3309
        %v3329 = vpack.c.b16 %v3312, %v3311
        %v3330 = vpack.c.b16 %v3314, %v3313
        %v3331 = vpack.c.b16 %v3316, %v3315
        %v3332 = vpack.c.b16 %v3318, %v3317
        %v3333 = vpack.c.b16 %v3320, %v3319
        %v3334 = vpack.c.b16 %v3322, %v3321
        %v3348 = vsel %vm1629, %v3250, 0
        %3350 = vmatprep.subr.bf16.mxu0 0
        %3351 = vmatpush1.bf16.msra.mxu0 %v3323
        %3352 = vmatprep.subr.bf16.mxu0 0
        %3353 = vmatpush1.bf16.msra.mxu0 %v3324
        %3354 = vmatprep.subr.bf16.mxu0 0
        %3355 = vmatpush1.bf16.msra.mxu0 %v3325
        %3356 = vmatprep.subr.bf16.mxu0 0
        %3357 = vmatpush1.bf16.msra.mxu0 %v3326
        %3358 = vmatprep.subr.bf16.mxu0 0
        %3359 = vmatpush1.bf16.msra.mxu0 %v3327
        %3360 = vmatprep.subr.bf16.mxu0 0
        %3361 = vmatpush1.bf16.msra.mxu0 %v3328
        %3362 = vmatprep.subr.bf16.mxu0 0
        %3363 = vmatpush1.bf16.msra.mxu0 %v3329
        %3364 = vmatprep.subr.bf16.mxu0 0
        %3365 = vmatpush1.bf16.msra.mxu0 %v3330
        %3366 = vmatprep.subr.bf16.mxu0 0
        %3367 = vmatpush1.bf16.msra.mxu0 %v3331
        %3368 = vmatprep.subr.bf16.mxu0 0
        %3369 = vmatpush1.bf16.msra.mxu0 %v3332
        %3370 = vmatprep.subr.bf16.mxu0 0
        %3371 = vmatpush1.bf16.msra.mxu0 %v3333
        %3372 = vmatprep.subr.bf16.mxu0 0
        %3373 = vmatpush1.bf16.msra.mxu0 %v3334
        %3374 = vmatprep.subr.bf16.mxu0 0
        %3375 = vmatpush1.bf16.msra.mxu0 0
        %3376 = vmatprep.subr.bf16.mxu0 0
        %3377 = vmatpush1.bf16.msra.mxu0 0
        %3378 = vmatprep.subr.bf16.mxu0 0
        %3379 = vmatpush1.bf16.msra.mxu0 0
        %3380 = vmatprep.subr.bf16.mxu0 0
        %3381 = vmatpush1.bf16.msra.mxu0 0
        %3382 = vmatprep.mubr.bf16.mxu0 %v3348
        %3383 = vmatmul.mubr.bf16.gmra.mrb[0].mxu0 %v3249
        %v3384 = vpop.f32.mrb[0].mxu0
        %v3385 = vadd.f32 0.0, %v3384
        %v3386 = vpop.f32.mrb[0].mxu0
        %v3387 = vpop.f32.mrb[0].mxu0
        %v3388 = vadd.f32 0.0, %v3387
        %v3389 = vpop.f32.mrb[0].mxu0
        %3390 = vdwg.mxu0
        %v3391 = vld [vmem:[%s8] sm:$0x1]
        %v3392 = vlaneseq
        %v3393 = vshrl.u32 %v3392, 7
        %v3394 = vsub.s32 0, %v3393
        %v3395 = vrot.slane %v3391, %v3394
        %v3396 = vmul.f32 %v3385, %v3395
        %v3397 = vmul.f32 %v3388, %v3395
        %v3398 = vld [vmem:[%s8 + $0x1] sm:$0x1]
        %v3399 = vlaneseq
        %v3400 = vshrl.u32 %v3399, 7
        %v3401 = vsub.s32 0, %v3400
        %v3402 = vrot.slane %v3398, %v3401
        %v3403 = vadd.f32 %v3396, %v3402
        %v3404 = vadd.f32 %v3397, %v3402
        %vm3405 = vcmp.gt.f32.partialorder %v3403, 0.0
        %vm3406 = vcmp.gt.f32.partialorder %v3404, 0.0
        %v3407 = vmin.f32 %v3403, 0.0
        %v3408 = vmin.f32 %v3404, 0.0
        %v3409 = vmul.f32 %v3407, 1.442695
        %v3410 = vpow.pop %v3409
        %v3411 = vmul.f32 %v3408, 1.442695
        %v3412 = vpow.pop %v3411
        %v3413 = vsub.f32 %v3410, 1.0
        %v3414 = vsub.f32 %v3412, 1.0
        %v3415 = vsel %vm3405, %v3403, %v3413
        %v3416 = vsel %vm3406, %v3404, %v3414
        %3417 = vst.msk [vmem:[#allocation5 + $0x8] sm:$0xff] %vm484, %v3415
        %3418 = vst.msk [vmem:[#allocation5 + $0x10] sm:$0xff] %vm484, %v3416
        %s3419 = scalar_lea.vmem [#allocation5], 6
        %v3420 = vld [vmem:[%s3419] ss:$2 sm:$0xff]
        %s3421 = scalar_lea.vmem [#allocation5], 7
        %v3422 = vld [vmem:[%s3421] ss:$2 sm:$0xff]
        %v3423 = vadd.f32 %v3420, %v3422
        %s3424 = scalar_lea.vmem [#allocation5], 8
        %v3425 = vld [vmem:[%s3424] ss:$2 sm:$0xff]
        %s3426 = scalar_lea.vmem [#allocation5], 9
        %v3427 = vld [vmem:[%s3426] ss:$2 sm:$0xff]
        %v3428 = vadd.f32 %v3425, %v3427
        %s3429 = scalar_lea.vmem [#allocation5], 10
        %v3430 = vld [vmem:[%s3429] ss:$2 sm:$0xff]
        %s3431 = scalar_lea.vmem [#allocation5], 11
        %v3432 = vld [vmem:[%s3431] ss:$2 sm:$0xff]
        %v3433 = vadd.f32 %v3430, %v3432
        %s3434 = scalar_lea.vmem [#allocation5], 12
        %v3435 = vld [vmem:[%s3434] ss:$2 sm:$0xff]
        %s3436 = scalar_lea.vmem [#allocation5], 13
        %v3437 = vld [vmem:[%s3436] ss:$2 sm:$0xff]
        %v3438 = vadd.f32 %v3435, %v3437
        %3440 = vrot.lane.b32.xlu0 %v3428, 12
        %v3441 = vpop.permute.xlu0 %3440
        %3444 = vrot.lane.b32.xlu0 %v3433, 24
        %v3445 = vpop.permute.xlu0 %3444
        %3448 = vrot.lane.b32.xlu0 %v3438, 36
        %v3449 = vpop.permute.xlu0 %3448
        %v3451 = vsel %vm484, %v3423, %v3441
        %v3452 = vsel %vm477, %v3451, %v3445
        %vm3453 = vcmask 293888
        %v3454 = vsel %vm3453, %v3452, %v3449
        %v3455 = vmul.f32 %v3454, 0.5
        %v3456 = vpack.c.bf16 %v3455, %v3455
        %v3457 = vld [vmem:[%s9] sm:$0xf]
        %v3458 = vld [vmem:[%s9 + $0x4] sm:$0xf]
        %v3459 = vld [vmem:[%s9 + $0x8] sm:$0xf]
        %v3460 = vld [vmem:[%s9 + $0xc] sm:$0xf]
        %v3461 = vld [vmem:[%s9 + $0x10] sm:$0xf]
        %v3462 = vld [vmem:[%s9 + $0x14] sm:$0xf]
        %v3469 = vunpack.c.l.b16 %v3457
        %v3470 = vunpack.c.l.b16 %v3458
        %v3471 = vunpack.c.l.b16 %v3459
        %v3472 = vunpack.c.l.b16 %v3460
        %v3473 = vunpack.c.l.b16 %v3461
        %v3474 = vunpack.c.l.b16 %v3462
        %v3475 = vpack.c.b16 %v3470, %v3469
        %v3476 = vpack.c.b16 %v3472, %v3471
        %v3477 = vpack.c.b16 %v3474, %v3473
        %v3482 = vsel %vm458, %v3456, 0
        %3484 = vmatprep.subr.bf16.mxu0 0
        %3485 = vmatpush1.bf16.msra.mxu0 %v3475
        %3486 = vmatprep.subr.bf16.mxu0 0
        %3487 = vmatpush1.bf16.msra.mxu0 %v3476
        %3488 = vmatprep.subr.bf16.mxu0 0
        %3489 = vmatpush1.bf16.msra.mxu0 %v3477
        %3490 = vmatprep.subr.bf16.mxu0 0
        %3491 = vmatpush1.bf16.msra.mxu0 0
        %3492 = vmatprep.subr.bf16.mxu0 0
        %3493 = vmatpush1.bf16.msra.mxu0 0
        %3494 = vmatprep.subr.bf16.mxu0 0
        %3495 = vmatpush1.bf16.msra.mxu0 0
        %3496 = vmatprep.subr.bf16.mxu0 0
        %3497 = vmatpush1.bf16.msra.mxu0 0
        %3498 = vmatprep.subr.bf16.mxu0 0
        %3499 = vmatpush1.bf16.msra.mxu0 0
        %3500 = vmatprep.subr.bf16.mxu0 0
        %3501 = vmatpush1.bf16.msra.mxu0 0
        %3502 = vmatprep.subr.bf16.mxu0 0
        %3503 = vmatpush1.bf16.msra.mxu0 0
        %3504 = vmatprep.subr.bf16.mxu0 0
        %3505 = vmatpush1.bf16.msra.mxu0 0
        %3506 = vmatprep.subr.bf16.mxu0 0
        %3507 = vmatpush1.bf16.msra.mxu0 0
        %3508 = vmatprep.subr.bf16.mxu0 0
        %3509 = vmatpush1.bf16.msra.mxu0 0
        %3510 = vmatprep.subr.bf16.mxu0 0
        %3511 = vmatpush1.bf16.msra.mxu0 0
        %3512 = vmatprep.subr.bf16.mxu0 0
        %3513 = vmatpush1.bf16.msra.mxu0 0
        %3514 = vmatprep.subr.bf16.mxu0 0
        %3515 = vmatpush1.bf16.msra.mxu0 0
        %3516 = vmatprep.mubr.bf16.mxu0 0
        %3517 = vmatmul.mubr.bf16.gmra.mrb[0].mxu0 %v3482
        %v3518 = vpop.f32.mrb[0].mxu0
        %v3519 = vadd.f32 0.0, %v3518
        %v3520 = vpop.f32.mrb[0].mxu0
        %v3521 = vpop.f32.mrb[0].mxu0
        %v3522 = vpop.f32.mrb[0].mxu0
        %3523 = vdwg.mxu0
        %v3524 = vld [vmem:[%s10] sm:$0x1]
        %v3525 = vlaneseq
        %v3526 = vshrl.u32 %v3525, 7
        %v3527 = vsub.s32 0, %v3526
        %v3528 = vrot.slane %v3524, %v3527
        %v3529 = vmul.f32 %v3519, %v3528
        %v3530 = vld [vmem:[%s10 + $0x1] sm:$0x1]
        %v3531 = vlaneseq
        %v3532 = vshrl.u32 %v3531, 7
        %v3533 = vsub.s32 0, %v3532
        %v3534 = vrot.slane %v3530, %v3533
        %v3535 = vadd.f32 %v3529, %v3534
        %vm3536 = vcmp.gt.f32.partialorder %v3535, 0.0
        %v3537 = vmin.f32 %v3535, 0.0
        %v3538 = vmul.f32 %v3537, 1.442695
        %v3539 = vpow.pop %v3538
        %v3540 = vsub.f32 %v3539, 1.0
        %v3541 = vsel %vm3536, %v3535, %v3540
        %v3542 = vld [vmem:[%s11] sm:$0xff]
        %v3543 = vmul.f32 %v3541, %v3542
        %vm3544 = vcmask 48128
        %v3545 = vsel %vm3544, %v3543, 0.0
        %3546 = vadd.xlane.f32.xlu0 %v3545
        %v3547 = vpop.xlane.xlu0 %3546
        %s3548 = scalar_lea.vmem %s11, 8
        %v3549 = vld [vmem:[%s3548] sm:$0xff]
        %v3550 = vmul.f32 %v3541, %v3549
        %v3551 = vsel %vm3544, %v3550, 0.0
        %3552 = vadd.xlane.f32.xlu0 %v3551
        %v3553 = vpop.xlane.xlu0 %3552
        %vm3554 = vcmask 7168
        %v3555 = vsel %vm3554, %v3547, %v3553
        %vm3556 = vcmask 15360
        %v3557 = vsel %vm3556, %v3555, 0.0
        %v3558 = vrot.slane %v3557, 4
        %v3559 = vadd.f32 %v3557, %v3558
        %v3560 = vrot.slane %v3559, 2
        %v3561 = vadd.f32 %v3559, %v3560
        %v3562 = vrot.slane %v3561, 1
        %v3563 = vadd.f32 %v3561, %v3562
        %v3564 = vld [vmem:[%s12] sm:$0x1]
        %v3565 = vadd.f32 %v3563, %v3564
        %vm3566 = vcmask 8192
        %3567 = vst.msk [vmem:[%s432] sm:$0x1] %vm3566, %v3565
        %s3568 = sand.u32 %s313, 1
        %s3569 = scalar_lea.sflag [#allocation7], %s3568
        %s3570 = sand.u32 %s313, 1
        %s3571 = scalar_lea.vmem [#allocation6], %s3570
        // Predicated region
        $region73: #{eeg_inception_forward.1} parent=71 // pred_check
          %p3572 = pneg %p323
        $region74: #{eeg_inception_forward.1} parent=71 // pred_check_branch
          %3574 = sbr.rel (%p3572) target = $region76
        $region75: #{eeg_inception_forward.1} parent=71 // pred_region
          %s3576 = ssub.s32 16, 16
          %3577 = vsyncadd %s3569, %s3576
          %s3578 = smul.addr %s27, 16
          %s3579 = scalar_lea.hbm %s13, %s3578
          %s3581 = sshll.u32 %s3571, 4
          %s3582 = int_to_ptr.vmem [resolvable:$true] %s3581
          %3584 = dma.vmem_to_hbm [thread:$0]  %s3582, 16, %s3579, %s3569
        $region76: #{eeg_inception_forward.1} parent=71 // pred_fallthru
          _
      $region72: #{eeg_inception_forward.1} parent=5 // pred_fallthru
        _
      %p3585 = scmp.le.s32.totalorder 2, %s22
      // Predicated region
      $region77: #{eeg_inception_forward.1} parent=5 // pred_check
        %p3586 = pneg %p3585
      $region78: #{eeg_inception_forward.1} parent=5 // pred_check_branch
        %3588 = sbr.rel (%p3586) target = $region80
      $region79: #{eeg_inception_forward.1} parent=5 // pred_region
        %s3589 = ssub.s32 %s22, 2
        // Predicated region
        $region81: #{eeg_inception_forward.1} parent=79 // pred_check
          %p3590 = pneg %p329
        $region82: #{eeg_inception_forward.1} parent=79 // pred_check_branch
          %3592 = sbr.rel (%p3590) target = $region84
        $region83: #{eeg_inception_forward.1} parent=79 // pred_region
          %s3593 = sand.u32 %s314, 1
          %s3594 = scalar_lea.sflag [#allocation7], %s3593
          %s3595 = sand.u32 %s314, 1
          %s3596 = scalar_lea.vmem [#allocation6], %s3595
          %3597 = dma.done %s3594, 16
        $region84: #{eeg_inception_forward.1} parent=79 // pred_fallthru
          _
      $region80: #{eeg_inception_forward.1} parent=5 // pred_fallthru
        _
    $region6: #{eeg_inception_forward.1} parent=1 // loop_footer
      %s26 = sadd.s32 1, %s22
    $region7: #{eeg_inception_forward.1} parent=1 // loop_footer_branch
      %21 = sbr.rel target = $region3
    $region8: #{eeg_inception_forward.1} parent=1 // loop_exit
      _
    %3598 = vsyncpa [#allocation7], 1
    %s3599 = scalar_lea.sflag [#allocation7], 1
    %3600 = vsyncpa %s3599, 1

</llo_original>
